<compile_context>
chip_gen: v6e
topology: v6e:2x2x1
jax: 0.10.0
libtpu: 0.0.40
codegen_flags: <defaults>
</compile_context>

<pallas_src>
import jax
import jax.numpy as jnp
from jax import lax
from jax.experimental import pallas as pl
from jax.experimental.pallas import tpu as pltpu

BN_EPS = 1e-5

LAYER_DIMS = [(4, 16), (64, 32), (128, 64), (256, 128)]   # layer_1 .. layer_4
HEAD_DIMS = [(512, 64), (64, 1)]                          # edge_pred MLP


# ----------------------------------------------------------------------------
# Pallas kernel: the whole graph forward in one invocation.
# ----------------------------------------------------------------------------
def _graph_forward_kernel(
    edges_ref,        # (E, 4)    edge input features
    a_norm_ref,       # (C, E)    count-normalized scatter-mean matrix
    gl_ref,           # (E, C)    one-hot gather of edge_corner[:, 0]
    gr_ref,           # (E, C)    one-hot gather of edge_corner[:, 1]
    w1_ref, b1_ref,   # (4, 16),   (1, 16)    layer_1 (BN folded)
    w2_ref, b2_ref,   # (64, 32),  (1, 32)    layer_2 (BN folded)
    w3_ref, b3_ref,   # (128, 64), (1, 64)    layer_3 (BN folded)
    w4_ref, b4_ref,   # (256, 128),(1, 128)   layer_4 (BN folded)
    w5_ref, b5_ref,   # (512, 64), (1, 64)    edge_pred Linear 1
    w6_ref, b6_ref,   # (64, 1),   (1, 1)     edge_pred Linear 2
    out_ref,          # (E, 1)    sigmoid edge predictions
):
    f32 = jnp.float32

    def mm(a, b):
        return jnp.dot(a, b, preferred_element_type=f32)

    a_norm = a_norm_ref[...]
    gl = gl_ref[...]
    gr = gr_ref[...]

    def aggregate_then_linear_relu(x, w_ref, b_ref):
        # Next-layer input is concat([x, left, right, global], axis=1) of width
        # 4F.  Split the (4F, out) weight into four row blocks and sum partial
        # matmuls instead of materializing the concat.
        e, f = x.shape
        cf = mm(a_norm, x)                                  # (C, F) scatter-mean
        left = mm(gl, cf)                                   # (E, F)
        right = mm(gr, cf)                                  # (E, F)
        ones_over_e = jnp.full((1, e), 1.0 / e, f32)
        gmean = mm(ones_over_e, x)                          # (1, F) global mean
        pre = (mm(x, w_ref[0 * f:1 * f, :])
               + mm(left, w_ref[1 * f:2 * f, :])
               + mm(right, w_ref[2 * f:3 * f, :])
               + mm(gmean, w_ref[3 * f:4 * f, :])           # broadcast over E
               + b_ref[...])
        return jnp.maximum(pre, 0.0)

    # layer_1 (Linear+BN+ReLU, BN folded)
    x1 = jnp.maximum(mm(edges_ref[...], w1_ref[...]) + b1_ref[...], 0.0)  # (E,16)
    # aggregate + layer_2 / layer_3 / layer_4 (BN folded into w/b)
    x2 = aggregate_then_linear_relu(x1, w2_ref, b2_ref)                   # (E,32)
    x3 = aggregate_then_linear_relu(x2, w3_ref, b3_ref)                   # (E,64)
    x4 = aggregate_then_linear_relu(x3, w4_ref, b4_ref)                   # (E,128)
    # final aggregate feeds the edge-prediction head (Linear 512->64 + ReLU)
    h = aggregate_then_linear_relu(x4, w5_ref, b5_ref)                    # (E,64)
    logits = mm(h, w6_ref[...]) + b6_ref[...]                             # (E,1)
    out_ref[...] = 1.0 / (1.0 + jnp.exp(-logits))


# ----------------------------------------------------------------------------
# Wrapper: precompute aggregation matrices, fold BN, launch one pallas_call.
# ----------------------------------------------------------------------------
def graph_model_forward(params, corners, edges, corner_edge_pairs, edge_corner,
                        image=None):
    """Mirrors GraphModelCustom.forward for the graph-only suffix.

    Returns (edge_pred, loop_pred, loop_corners, loop_features) like torch.
    """
    del image  # image branch not used with the default suffix
    f32 = jnp.float32
    E = edges.shape[0]
    C = corners.shape[0]  # num_corners = len(corners)

    # --- index preprocessing (cheap, done once in the wrapper) --------------
    # scatter-mean: corner_features = a_norm @ x   (index_add_ + count clamp)
    A = jnp.zeros((C, E), f32).at[
        corner_edge_pairs[:, 0], corner_edge_pairs[:, 1]].add(1.0)
    count = jnp.clip(jnp.sum(A, axis=1, keepdims=True), 1.0, None)
    a_norm = A / count
    # one-hot gathers for the two end corners of every edge
    cid = jnp.arange(C, dtype=edge_corner.dtype)[None, :]
    gl = (edge_corner[:, 0:1] == cid).astype(f32)
    gr = (edge_corner[:, 1:2] == cid).astype(f32)

    # --- fold eval-mode BatchNorm1d into the Linear weights -----------------
    def fold(li):
        w, b = params[f'w{li}'], params[f'b{li}']
        g, be = params[f'g{li}'], params[f'be{li}']
        m, v = params[f'm{li}'], params[f'v{li}']
        scale = g / jnp.sqrt(v + BN_EPS)
        w_f = (w * scale[:, None]).T.astype(f32)            # (in, out)
        b_f = ((b - m) * scale + be)[None, :].astype(f32)   # (1, out)
        return w_f, b_f

    w1, b1 = fold(1)
    w2, b2 = fold(2)
    w3, b3 = fold(3)
    w4, b4 = fold(4)
    w5, b5 = params['w5'].T.astype(f32), params['b5'][None, :].astype(f32)
    w6, b6 = params['w6'].T.astype(f32), params['b6'][None, :].astype(f32)

    vmem_specs = [pl.BlockSpec(memory_space=pltpu.MemorySpace.VMEM)
                  for _ in range(16)]
    out = pl.pallas_call(
        _graph_forward_kernel,
        out_shape=jax.ShapeDtypeStruct((E, 1), f32),
        in_specs=vmem_specs,
        out_specs=pl.BlockSpec(memory_space=pltpu.MemorySpace.VMEM),
    )(edges.astype(f32), a_norm, gl, gr,
      w1, b1, w2, b2, w3, b3, w4, b4, w5, b5, w6, b6)

    edge_pred = out.reshape(-1)
    loop_pred = None      # 'loop' not in suffix
    loop_corners = []
    loop_features = []
    return edge_pred, loop_pred, loop_corners, loop_features


# ----------------------------------------------------------------------------
# Pure-JAX reference (transliteration of the torch forward) for verification.
# ----------------------------------------------------------------------------
def graph_model_ref(params, corners, edges, corner_edge_pairs, edge_corner):
    hi = lax.Precision.HIGHEST

    def linear(x, w, b):
        return jnp.matmul(x, w.T, precision=hi) + b

    def bn(x, g, be, m, v):
        return (x - m) / jnp.sqrt(v + BN_EPS) * g + be

    C = corners.shape[0]

    def aggregate(x):
        cf = jnp.zeros((C, x.shape[1]), x.dtype).at[
            corner_edge_pairs[:, 0]].add(x[corner_edge_pairs[:, 1]])
        cnt = jnp.zeros((C,), x.dtype).at[corner_edge_pairs[:, 0]].add(1.0)
        cf = cf / jnp.clip(cnt[:, None], 1.0, None)
        left = cf[edge_corner[:, 0]]
        right = cf[edge_corner[:, 1]]
        g = jnp.repeat(jnp.mean(x, axis=0, keepdims=True), x.shape[0], axis=0)
        return jnp.concatenate([x, left, right, g], axis=1)

    p = params
    x = jnp.maximum(bn(linear(edges, p['w1'], p['b1']),
                       p['g1'], p['be1'], p['m1'], p['v1']), 0.0)
    x = aggregate(x)
    x = jnp.maximum(bn(linear(x, p['w2'], p['b2']),
                       p['g2'], p['be2'], p['m2'], p['v2']), 0.0)
    x = aggregate(x)
    x = jnp.maximum(bn(linear(x, p['w3'], p['b3']),
                       p['g3'], p['be3'], p['m3'], p['v3']), 0.0)
    x = aggregate(x)
    x = jnp.maximum(bn(linear(x, p['w4'], p['b4']),
                       p['g4'], p['be4'], p['m4'], p['v4']), 0.0)
    x = aggregate(x)
    h = jnp.maximum(linear(x, p['w5'], p['b5']), 0.0)
    logits = linear(h, p['w6'], p['b6'])
    return jax.nn.sigmoid(logits).reshape(-1)


def init_params(key):
    params = {}
    keys = iter(jax.random.split(key, 32))
    for li, (fin, fout) in enumerate(LAYER_DIMS, start=1):
        params[f'w{li}'] = (jax.random.normal(next(keys), (fout, fin), jnp.float32)
                            / jnp.sqrt(float(fin)))
        params[f'b{li}'] = jax.random.normal(next(keys), (fout,), jnp.float32) * 0.1
        params[f'g{li}'] = jax.random.uniform(next(keys), (fout,), jnp.float32, 0.5, 1.5)
        params[f'be{li}'] = jax.random.normal(next(keys), (fout,), jnp.float32) * 0.1
        params[f'm{li}'] = jax.random.normal(next(keys), (fout,), jnp.float32) * 0.1
        params[f'v{li}'] = jax.random.uniform(next(keys), (fout,), jnp.float32, 0.5, 1.5)
    for hi_, (fin, fout) in enumerate(HEAD_DIMS, start=5):
        params[f'w{hi_}'] = (jax.random.normal(next(keys), (fout, fin), jnp.float32)
                             / jnp.sqrt(float(fin)))
        params[f'b{hi_}'] = jax.random.normal(next(keys), (fout,), jnp.float32) * 0.1
    return params


if __name__ == "__main__":
    key = jax.random.PRNGKey(0)
    C, E = 8, 12
    ks = jax.random.split(key, 4)

    # deterministic small graph
    corners = jax.random.uniform(ks[0], (C, 2), jnp.float32)         # (C, 2)
    a = jax.random.randint(ks[1], (E,), 0, C)
    off = jax.random.randint(ks[2], (E,), 1, C)
    b = (a + off) % C
    edge_corner = jnp.stack([a, b], axis=-1).astype(jnp.int32)        # (E, 2)
    eid = jnp.arange(E, dtype=jnp.int32)
    corner_edge_pairs = jnp.concatenate(
        [jnp.stack([edge_corner[:, 0], eid], axis=-1),
         jnp.stack([edge_corner[:, 1], eid], axis=-1)], axis=0)       # (2E, 2)
    edges = jnp.concatenate(
        [corners[edge_corner[:, 0]], corners[edge_corner[:, 1]]], axis=-1)  # (E, 4)

    params = init_params(ks[3])

    edge_pred, loop_pred, loop_corners, loop_features = graph_model_forward(
        params, corners, edges, corner_edge_pairs, edge_corner)
    edge_pred = jax.block_until_ready(edge_pred)

    ref = graph_model_ref(params, corners, edges, corner_edge_pairs, edge_corner)

    assert edge_pred.shape == (E,) and edge_pred.dtype == jnp.float32
    assert loop_pred is None and loop_corners == [] and loop_features == []
    max_err = float(jnp.max(jnp.abs(edge_pred - ref)))
    assert jnp.allclose(edge_pred, ref, atol=2e-3, rtol=2e-3), \
        f"max abs err {max_err}"

    print("KERNEL_OK")
</pallas_src>

<mosaic_0001>
module attributes {stable_mosaic.version = 11 : i64} {
  func.func @_graph_forward_kernel(%arg0: memref<12x4xf32, #tpu.memory_space<vmem>>, %arg1: memref<8x12xf32, #tpu.memory_space<vmem>>, %arg2: memref<12x8xf32, #tpu.memory_space<vmem>>, %arg3: memref<12x8xf32, #tpu.memory_space<vmem>>, %arg4: memref<4x16xf32, #tpu.memory_space<vmem>>, %arg5: memref<1x16xf32, #tpu.memory_space<vmem>>, %arg6: memref<64x32xf32, #tpu.memory_space<vmem>>, %arg7: memref<1x32xf32, #tpu.memory_space<vmem>>, %arg8: memref<128x64xf32, #tpu.memory_space<vmem>>, %arg9: memref<1x64xf32, #tpu.memory_space<vmem>>, %arg10: memref<256x128xf32, #tpu.memory_space<vmem>>, %arg11: memref<1x128xf32, #tpu.memory_space<vmem>>, %arg12: memref<512x64xf32, #tpu.memory_space<vmem>>, %arg13: memref<1x64xf32, #tpu.memory_space<vmem>>, %arg14: memref<64x1xf32, #tpu.memory_space<vmem>>, %arg15: memref<1x1xf32, #tpu.memory_space<vmem>>, %arg16: memref<12x1xf32, #tpu.memory_space<vmem>>) attributes {dimension_semantics = [], scalar_prefetch = 0 : i64, scratch_operands = 0 : i64, tpu.core_type = #tpu.core_type<tc>} {
    %c0 = arith.constant 0 : index
    %c0_0 = arith.constant 0 : index
    %0 = vector.load %arg1[%c0, %c0_0] : memref<8x12xf32, #tpu.memory_space<vmem>>, vector<8x12xf32>
    %c0_1 = arith.constant 0 : index
    %c0_2 = arith.constant 0 : index
    %1 = vector.load %arg2[%c0_1, %c0_2] : memref<12x8xf32, #tpu.memory_space<vmem>>, vector<12x8xf32>
    %c0_3 = arith.constant 0 : index
    %c0_4 = arith.constant 0 : index
    %2 = vector.load %arg3[%c0_3, %c0_4] : memref<12x8xf32, #tpu.memory_space<vmem>>, vector<12x8xf32>
    %c0_5 = arith.constant 0 : index
    %c0_6 = arith.constant 0 : index
    %3 = vector.load %arg0[%c0_5, %c0_6] : memref<12x4xf32, #tpu.memory_space<vmem>>, vector<12x4xf32>
    %c0_7 = arith.constant 0 : index
    %c0_8 = arith.constant 0 : index
    %4 = vector.load %arg4[%c0_7, %c0_8] : memref<4x16xf32, #tpu.memory_space<vmem>>, vector<4x16xf32>
    %cst = arith.constant dense<0.000000e+00> : vector<12x16xf32>
    %5 = tpu.matmul %3, %4, %cst {dimension_numbers = #tpu.dot_dimension_numbers<[1], [0], [0], [1], [0, 0, 1, 1], [], []>} : vector<12x4xf32>, vector<4x16xf32>, vector<12x16xf32> -> vector<12x16xf32>
    %c0_9 = arith.constant 0 : index
    %c0_10 = arith.constant 0 : index
    %6 = vector.load %arg5[%c0_9, %c0_10] : memref<1x16xf32, #tpu.memory_space<vmem>>, vector<1x16xf32>
    %7 = vector.broadcast %6 : vector<1x16xf32> to vector<12x16xf32>
    %8 = arith.addf %5, %7 : vector<12x16xf32>
    %cst_11 = arith.constant 0.000000e+00 : f32
    %9 = vector.broadcast %cst_11 : f32 to vector<12x16xf32>
    %10 = arith.maximumf %8, %9 : vector<12x16xf32>
    %cst_12 = arith.constant dense<0.000000e+00> : vector<8x16xf32>
    %11 = tpu.matmul %0, %10, %cst_12 {dimension_numbers = #tpu.dot_dimension_numbers<[1], [0], [0], [1], [0, 0, 1, 1], [], []>} : vector<8x12xf32>, vector<12x16xf32>, vector<8x16xf32> -> vector<8x16xf32>
    %cst_13 = arith.constant dense<0.000000e+00> : vector<12x16xf32>
    %12 = tpu.matmul %1, %11, %cst_13 {dimension_numbers = #tpu.dot_dimension_numbers<[1], [0], [0], [1], [0, 0, 1, 1], [], []>} : vector<12x8xf32>, vector<8x16xf32>, vector<12x16xf32> -> vector<12x16xf32>
    %cst_14 = arith.constant dense<0.000000e+00> : vector<12x16xf32>
    %13 = tpu.matmul %2, %11, %cst_14 {dimension_numbers = #tpu.dot_dimension_numbers<[1], [0], [0], [1], [0, 0, 1, 1], [], []>} : vector<12x8xf32>, vector<8x16xf32>, vector<12x16xf32> -> vector<12x16xf32>
    %cst_15 = arith.constant 0.0833333358 : f32
    %14 = vector.broadcast %cst_15 : f32 to vector<1x12xf32>
    %cst_16 = arith.constant dense<0.000000e+00> : vector<1x16xf32>
    %15 = tpu.matmul %14, %10, %cst_16 {dimension_numbers = #tpu.dot_dimension_numbers<[1], [0], [0], [1], [0, 0, 1, 1], [], []>} : vector<1x12xf32>, vector<12x16xf32>, vector<1x16xf32> -> vector<1x16xf32>
    %c0_17 = arith.constant 0 : index
    %c0_18 = arith.constant 0 : index
    %16 = vector.load %arg6[%c0_17, %c0_18] : memref<64x32xf32, #tpu.memory_space<vmem>>, vector<16x32xf32>
    %cst_19 = arith.constant dense<0.000000e+00> : vector<12x32xf32>
    %17 = tpu.matmul %10, %16, %cst_19 {dimension_numbers = #tpu.dot_dimension_numbers<[1], [0], [0], [1], [0, 0, 1, 1], [], []>} : vector<12x16xf32>, vector<16x32xf32>, vector<12x32xf32> -> vector<12x32xf32>
    %c16 = arith.constant 16 : index
    %c0_20 = arith.constant 0 : index
    %18 = vector.load %arg6[%c16, %c0_20] : memref<64x32xf32, #tpu.memory_space<vmem>>, vector<16x32xf32>
    %cst_21 = arith.constant dense<0.000000e+00> : vector<12x32xf32>
    %19 = tpu.matmul %12, %18, %cst_21 {dimension_numbers = #tpu.dot_dimension_numbers<[1], [0], [0], [1], [0, 0, 1, 1], [], []>} : vector<12x16xf32>, vector<16x32xf32>, vector<12x32xf32> -> vector<12x32xf32>
    %20 = arith.addf %17, %19 : vector<12x32xf32>
    %c32 = arith.constant 32 : index
    %c0_22 = arith.constant 0 : index
    %21 = vector.load %arg6[%c32, %c0_22] : memref<64x32xf32, #tpu.memory_space<vmem>>, vector<16x32xf32>
    %cst_23 = arith.constant dense<0.000000e+00> : vector<12x32xf32>
    %22 = tpu.matmul %13, %21, %cst_23 {dimension_numbers = #tpu.dot_dimension_numbers<[1], [0], [0], [1], [0, 0, 1, 1], [], []>} : vector<12x16xf32>, vector<16x32xf32>, vector<12x32xf32> -> vector<12x32xf32>
    %23 = arith.addf %20, %22 : vector<12x32xf32>
    %c48 = arith.constant 48 : index
    %c0_24 = arith.constant 0 : index
    %24 = vector.load %arg6[%c48, %c0_24] : memref<64x32xf32, #tpu.memory_space<vmem>>, vector<16x32xf32>
    %cst_25 = arith.constant dense<0.000000e+00> : vector<1x32xf32>
    %25 = tpu.matmul %15, %24, %cst_25 {dimension_numbers = #tpu.dot_dimension_numbers<[1], [0], [0], [1], [0, 0, 1, 1], [], []>} : vector<1x16xf32>, vector<16x32xf32>, vector<1x32xf32> -> vector<1x32xf32>
    %26 = vector.broadcast %25 : vector<1x32xf32> to vector<12x32xf32>
    %27 = arith.addf %23, %26 : vector<12x32xf32>
    %c0_26 = arith.constant 0 : index
    %c0_27 = arith.constant 0 : index
    %28 = vector.load %arg7[%c0_26, %c0_27] : memref<1x32xf32, #tpu.memory_space<vmem>>, vector<1x32xf32>
    %29 = vector.broadcast %28 : vector<1x32xf32> to vector<12x32xf32>
    %30 = arith.addf %27, %29 : vector<12x32xf32>
    %cst_28 = arith.constant 0.000000e+00 : f32
    %31 = vector.broadcast %cst_28 : f32 to vector<12x32xf32>
    %32 = arith.maximumf %30, %31 : vector<12x32xf32>
    %cst_29 = arith.constant dense<0.000000e+00> : vector<8x32xf32>
    %33 = tpu.matmul %0, %32, %cst_29 {dimension_numbers = #tpu.dot_dimension_numbers<[1], [0], [0], [1], [0, 0, 1, 1], [], []>} : vector<8x12xf32>, vector<12x32xf32>, vector<8x32xf32> -> vector<8x32xf32>
    %cst_30 = arith.constant dense<0.000000e+00> : vector<12x32xf32>
    %34 = tpu.matmul %1, %33, %cst_30 {dimension_numbers = #tpu.dot_dimension_numbers<[1], [0], [0], [1], [0, 0, 1, 1], [], []>} : vector<12x8xf32>, vector<8x32xf32>, vector<12x32xf32> -> vector<12x32xf32>
    %cst_31 = arith.constant dense<0.000000e+00> : vector<12x32xf32>
    %35 = tpu.matmul %2, %33, %cst_31 {dimension_numbers = #tpu.dot_dimension_numbers<[1], [0], [0], [1], [0, 0, 1, 1], [], []>} : vector<12x8xf32>, vector<8x32xf32>, vector<12x32xf32> -> vector<12x32xf32>
    %cst_32 = arith.constant 0.0833333358 : f32
    %36 = vector.broadcast %cst_32 : f32 to vector<1x12xf32>
    %cst_33 = arith.constant dense<0.000000e+00> : vector<1x32xf32>
    %37 = tpu.matmul %36, %32, %cst_33 {dimension_numbers = #tpu.dot_dimension_numbers<[1], [0], [0], [1], [0, 0, 1, 1], [], []>} : vector<1x12xf32>, vector<12x32xf32>, vector<1x32xf32> -> vector<1x32xf32>
    %c0_34 = arith.constant 0 : index
    %c0_35 = arith.constant 0 : index
    %38 = vector.load %arg8[%c0_34, %c0_35] : memref<128x64xf32, #tpu.memory_space<vmem>>, vector<32x64xf32>
    %cst_36 = arith.constant dense<0.000000e+00> : vector<12x64xf32>
    %39 = tpu.matmul %32, %38, %cst_36 {dimension_numbers = #tpu.dot_dimension_numbers<[1], [0], [0], [1], [0, 0, 1, 1], [], []>} : vector<12x32xf32>, vector<32x64xf32>, vector<12x64xf32> -> vector<12x64xf32>
    %c32_37 = arith.constant 32 : index
    %c0_38 = arith.constant 0 : index
    %40 = vector.load %arg8[%c32_37, %c0_38] : memref<128x64xf32, #tpu.memory_space<vmem>>, vector<32x64xf32>
    %cst_39 = arith.constant dense<0.000000e+00> : vector<12x64xf32>
    %41 = tpu.matmul %34, %40, %cst_39 {dimension_numbers = #tpu.dot_dimension_numbers<[1], [0], [0], [1], [0, 0, 1, 1], [], []>} : vector<12x32xf32>, vector<32x64xf32>, vector<12x64xf32> -> vector<12x64xf32>
    %42 = arith.addf %39, %41 : vector<12x64xf32>
    %c64 = arith.constant 64 : index
    %c0_40 = arith.constant 0 : index
    %43 = vector.load %arg8[%c64, %c0_40] : memref<128x64xf32, #tpu.memory_space<vmem>>, vector<32x64xf32>
    %cst_41 = arith.constant dense<0.000000e+00> : vector<12x64xf32>
    %44 = tpu.matmul %35, %43, %cst_41 {dimension_numbers = #tpu.dot_dimension_numbers<[1], [0], [0], [1], [0, 0, 1, 1], [], []>} : vector<12x32xf32>, vector<32x64xf32>, vector<12x64xf32> -> vector<12x64xf32>
    %45 = arith.addf %42, %44 : vector<12x64xf32>
    %c96 = arith.constant 96 : index
    %c0_42 = arith.constant 0 : index
    %46 = vector.load %arg8[%c96, %c0_42] : memref<128x64xf32, #tpu.memory_space<vmem>>, vector<32x64xf32>
    %cst_43 = arith.constant dense<0.000000e+00> : vector<1x64xf32>
    %47 = tpu.matmul %37, %46, %cst_43 {dimension_numbers = #tpu.dot_dimension_numbers<[1], [0], [0], [1], [0, 0, 1, 1], [], []>} : vector<1x32xf32>, vector<32x64xf32>, vector<1x64xf32> -> vector<1x64xf32>
    %48 = vector.broadcast %47 : vector<1x64xf32> to vector<12x64xf32>
    %49 = arith.addf %45, %48 : vector<12x64xf32>
    %c0_44 = arith.constant 0 : index
    %c0_45 = arith.constant 0 : index
    %50 = vector.load %arg9[%c0_44, %c0_45] : memref<1x64xf32, #tpu.memory_space<vmem>>, vector<1x64xf32>
    %51 = vector.broadcast %50 : vector<1x64xf32> to vector<12x64xf32>
    %52 = arith.addf %49, %51 : vector<12x64xf32>
    %cst_46 = arith.constant 0.000000e+00 : f32
    %53 = vector.broadcast %cst_46 : f32 to vector<12x64xf32>
    %54 = arith.maximumf %52, %53 : vector<12x64xf32>
    %cst_47 = arith.constant dense<0.000000e+00> : vector<8x64xf32>
    %55 = tpu.matmul %0, %54, %cst_47 {dimension_numbers = #tpu.dot_dimension_numbers<[1], [0], [0], [1], [0, 0, 1, 1], [], []>} : vector<8x12xf32>, vector<12x64xf32>, vector<8x64xf32> -> vector<8x64xf32>
    %cst_48 = arith.constant dense<0.000000e+00> : vector<12x64xf32>
    %56 = tpu.matmul %1, %55, %cst_48 {dimension_numbers = #tpu.dot_dimension_numbers<[1], [0], [0], [1], [0, 0, 1, 1], [], []>} : vector<12x8xf32>, vector<8x64xf32>, vector<12x64xf32> -> vector<12x64xf32>
    %cst_49 = arith.constant dense<0.000000e+00> : vector<12x64xf32>
    %57 = tpu.matmul %2, %55, %cst_49 {dimension_numbers = #tpu.dot_dimension_numbers<[1], [0], [0], [1], [0, 0, 1, 1], [], []>} : vector<12x8xf32>, vector<8x64xf32>, vector<12x64xf32> -> vector<12x64xf32>
    %cst_50 = arith.constant 0.0833333358 : f32
    %58 = vector.broadcast %cst_50 : f32 to vector<1x12xf32>
    %cst_51 = arith.constant dense<0.000000e+00> : vector<1x64xf32>
    %59 = tpu.matmul %58, %54, %cst_51 {dimension_numbers = #tpu.dot_dimension_numbers<[1], [0], [0], [1], [0, 0, 1, 1], [], []>} : vector<1x12xf32>, vector<12x64xf32>, vector<1x64xf32> -> vector<1x64xf32>
    %c0_52 = arith.constant 0 : index
    %c0_53 = arith.constant 0 : index
    %60 = vector.load %arg10[%c0_52, %c0_53] : memref<256x128xf32, #tpu.memory_space<vmem>>, vector<64x128xf32>
    %cst_54 = arith.constant dense<0.000000e+00> : vector<12x128xf32>
    %61 = tpu.matmul %54, %60, %cst_54 {dimension_numbers = #tpu.dot_dimension_numbers<[1], [0], [0], [1], [0, 0, 1, 1], [], []>} : vector<12x64xf32>, vector<64x128xf32>, vector<12x128xf32> -> vector<12x128xf32>
    %c64_55 = arith.constant 64 : index
    %c0_56 = arith.constant 0 : index
    %62 = vector.load %arg10[%c64_55, %c0_56] : memref<256x128xf32, #tpu.memory_space<vmem>>, vector<64x128xf32>
    %cst_57 = arith.constant dense<0.000000e+00> : vector<12x128xf32>
    %63 = tpu.matmul %56, %62, %cst_57 {dimension_numbers = #tpu.dot_dimension_numbers<[1], [0], [0], [1], [0, 0, 1, 1], [], []>} : vector<12x64xf32>, vector<64x128xf32>, vector<12x128xf32> -> vector<12x128xf32>
    %64 = arith.addf %61, %63 : vector<12x128xf32>
    %c128 = arith.constant 128 : index
    %c0_58 = arith.constant 0 : index
    %65 = vector.load %arg10[%c128, %c0_58] : memref<256x128xf32, #tpu.memory_space<vmem>>, vector<64x128xf32>
    %cst_59 = arith.constant dense<0.000000e+00> : vector<12x128xf32>
    %66 = tpu.matmul %57, %65, %cst_59 {dimension_numbers = #tpu.dot_dimension_numbers<[1], [0], [0], [1], [0, 0, 1, 1], [], []>} : vector<12x64xf32>, vector<64x128xf32>, vector<12x128xf32> -> vector<12x128xf32>
    %67 = arith.addf %64, %66 : vector<12x128xf32>
    %c192 = arith.constant 192 : index
    %c0_60 = arith.constant 0 : index
    %68 = vector.load %arg10[%c192, %c0_60] : memref<256x128xf32, #tpu.memory_space<vmem>>, vector<64x128xf32>
    %cst_61 = arith.constant dense<0.000000e+00> : vector<1x128xf32>
    %69 = tpu.matmul %59, %68, %cst_61 {dimension_numbers = #tpu.dot_dimension_numbers<[1], [0], [0], [1], [0, 0, 1, 1], [], []>} : vector<1x64xf32>, vector<64x128xf32>, vector<1x128xf32> -> vector<1x128xf32>
    %70 = vector.broadcast %69 : vector<1x128xf32> to vector<12x128xf32>
    %71 = arith.addf %67, %70 : vector<12x128xf32>
    %c0_62 = arith.constant 0 : index
    %c0_63 = arith.constant 0 : index
    %72 = vector.load %arg11[%c0_62, %c0_63] : memref<1x128xf32, #tpu.memory_space<vmem>>, vector<1x128xf32>
    %73 = vector.broadcast %72 : vector<1x128xf32> to vector<12x128xf32>
    %74 = arith.addf %71, %73 : vector<12x128xf32>
    %cst_64 = arith.constant 0.000000e+00 : f32
    %75 = vector.broadcast %cst_64 : f32 to vector<12x128xf32>
    %76 = arith.maximumf %74, %75 : vector<12x128xf32>
    %cst_65 = arith.constant dense<0.000000e+00> : vector<8x128xf32>
    %77 = tpu.matmul %0, %76, %cst_65 {dimension_numbers = #tpu.dot_dimension_numbers<[1], [0], [0], [1], [0, 0, 1, 1], [], []>} : vector<8x12xf32>, vector<12x128xf32>, vector<8x128xf32> -> vector<8x128xf32>
    %cst_66 = arith.constant dense<0.000000e+00> : vector<12x128xf32>
    %78 = tpu.matmul %1, %77, %cst_66 {dimension_numbers = #tpu.dot_dimension_numbers<[1], [0], [0], [1], [0, 0, 1, 1], [], []>} : vector<12x8xf32>, vector<8x128xf32>, vector<12x128xf32> -> vector<12x128xf32>
    %cst_67 = arith.constant dense<0.000000e+00> : vector<12x128xf32>
    %79 = tpu.matmul %2, %77, %cst_67 {dimension_numbers = #tpu.dot_dimension_numbers<[1], [0], [0], [1], [0, 0, 1, 1], [], []>} : vector<12x8xf32>, vector<8x128xf32>, vector<12x128xf32> -> vector<12x128xf32>
    %cst_68 = arith.constant 0.0833333358 : f32
    %80 = vector.broadcast %cst_68 : f32 to vector<1x12xf32>
    %cst_69 = arith.constant dense<0.000000e+00> : vector<1x128xf32>
    %81 = tpu.matmul %80, %76, %cst_69 {dimension_numbers = #tpu.dot_dimension_numbers<[1], [0], [0], [1], [0, 0, 1, 1], [], []>} : vector<1x12xf32>, vector<12x128xf32>, vector<1x128xf32> -> vector<1x128xf32>
    %c0_70 = arith.constant 0 : index
    %c0_71 = arith.constant 0 : index
    %82 = vector.load %arg12[%c0_70, %c0_71] : memref<512x64xf32, #tpu.memory_space<vmem>>, vector<128x64xf32>
    %cst_72 = arith.constant dense<0.000000e+00> : vector<12x64xf32>
    %83 = tpu.matmul %76, %82, %cst_72 {dimension_numbers = #tpu.dot_dimension_numbers<[1], [0], [0], [1], [0, 0, 1, 1], [], []>} : vector<12x128xf32>, vector<128x64xf32>, vector<12x64xf32> -> vector<12x64xf32>
    %c128_73 = arith.constant 128 : index
    %c0_74 = arith.constant 0 : index
    %84 = vector.load %arg12[%c128_73, %c0_74] : memref<512x64xf32, #tpu.memory_space<vmem>>, vector<128x64xf32>
    %cst_75 = arith.constant dense<0.000000e+00> : vector<12x64xf32>
    %85 = tpu.matmul %78, %84, %cst_75 {dimension_numbers = #tpu.dot_dimension_numbers<[1], [0], [0], [1], [0, 0, 1, 1], [], []>} : vector<12x128xf32>, vector<128x64xf32>, vector<12x64xf32> -> vector<12x64xf32>
    %86 = arith.addf %83, %85 : vector<12x64xf32>
    %c256 = arith.constant 256 : index
    %c0_76 = arith.constant 0 : index
    %87 = vector.load %arg12[%c256, %c0_76] : memref<512x64xf32, #tpu.memory_space<vmem>>, vector<128x64xf32>
    %cst_77 = arith.constant dense<0.000000e+00> : vector<12x64xf32>
    %88 = tpu.matmul %79, %87, %cst_77 {dimension_numbers = #tpu.dot_dimension_numbers<[1], [0], [0], [1], [0, 0, 1, 1], [], []>} : vector<12x128xf32>, vector<128x64xf32>, vector<12x64xf32> -> vector<12x64xf32>
    %89 = arith.addf %86, %88 : vector<12x64xf32>
    %c384 = arith.constant 384 : index
    %c0_78 = arith.constant 0 : index
    %90 = vector.load %arg12[%c384, %c0_78] : memref<512x64xf32, #tpu.memory_space<vmem>>, vector<128x64xf32>
    %cst_79 = arith.constant dense<0.000000e+00> : vector<1x64xf32>
    %91 = tpu.matmul %81, %90, %cst_79 {dimension_numbers = #tpu.dot_dimension_numbers<[1], [0], [0], [1], [0, 0, 1, 1], [], []>} : vector<1x128xf32>, vector<128x64xf32>, vector<1x64xf32> -> vector<1x64xf32>
    %92 = vector.broadcast %91 : vector<1x64xf32> to vector<12x64xf32>
    %93 = arith.addf %89, %92 : vector<12x64xf32>
    %c0_80 = arith.constant 0 : index
    %c0_81 = arith.constant 0 : index
    %94 = vector.load %arg13[%c0_80, %c0_81] : memref<1x64xf32, #tpu.memory_space<vmem>>, vector<1x64xf32>
    %95 = vector.broadcast %94 : vector<1x64xf32> to vector<12x64xf32>
    %96 = arith.addf %93, %95 : vector<12x64xf32>
    %cst_82 = arith.constant 0.000000e+00 : f32
    %97 = vector.broadcast %cst_82 : f32 to vector<12x64xf32>
    %98 = arith.maximumf %96, %97 : vector<12x64xf32>
    %c0_83 = arith.constant 0 : index
    %c0_84 = arith.constant 0 : index
    %99 = vector.load %arg14[%c0_83, %c0_84] : memref<64x1xf32, #tpu.memory_space<vmem>>, vector<64x1xf32>
    %cst_85 = arith.constant dense<0.000000e+00> : vector<12x1xf32>
    %100 = tpu.matmul %98, %99, %cst_85 {dimension_numbers = #tpu.dot_dimension_numbers<[1], [0], [0], [1], [0, 0, 1, 1], [], []>} : vector<12x64xf32>, vector<64x1xf32>, vector<12x1xf32> -> vector<12x1xf32>
    %c0_86 = arith.constant 0 : index
    %c0_87 = arith.constant 0 : index
    %101 = vector.load %arg15[%c0_86, %c0_87] : memref<1x1xf32, #tpu.memory_space<vmem>>, vector<1x1xf32>
    %102 = vector.broadcast %101 : vector<1x1xf32> to vector<12x1xf32>
    %103 = arith.addf %100, %102 : vector<12x1xf32>
    %cst_88 = arith.constant 0.000000e+00 : f32
    %104 = vector.broadcast %cst_88 : f32 to vector<12x1xf32>
    %105 = arith.subf %104, %103 : vector<12x1xf32>
    %106 = math.exp %105 : vector<12x1xf32>
    %cst_89 = arith.constant 1.000000e+00 : f32
    %107 = vector.broadcast %cst_89 : f32 to vector<12x1xf32>
    %108 = arith.addf %107, %106 : vector<12x1xf32>
    %cst_90 = arith.constant 1.000000e+00 : f32
    %109 = vector.broadcast %cst_90 : f32 to vector<12x1xf32>
    %110 = arith.divf %109, %108 : vector<12x1xf32>
    %c0_91 = arith.constant 0 : index
    %c0_92 = arith.constant 0 : index
    %111 = vector.load %arg16[%c0_91, %c0_92] : memref<12x1xf32, #tpu.memory_space<vmem>>, vector<12x1xf32>
    tpu.vector_store %arg16[%c0_91, %c0_92], %110 {strides = array<i32>} : memref<12x1xf32, #tpu.memory_space<vmem>>, vector<12x1xf32>,
    return
  }
}

</mosaic_0001>

<llo_original>
// kernel: tpu_custom_call.1
$region0: #{tpu_custom_call.1}
  #allocation0 [shape = 'u32[]', space=smem, size = 0x4, offset = 0x4, fixed_abs, tag = 'smem constant byte address 0x4 - core index']
  #allocation1 [shape = 'u32[144,128]{1,0:T(1,128)}', space=vmem, size = 0x12000, scoped, tag = 'internal scratch']
  #allocation2 [shape = 'f32[1,1]{1,0:T(1,128)S(1)}', space=vmem, size = 0x200, scoped, tag = 'scoped memory for tpu_custom_call.1']
  %s0 = inlined_call_operand.vmem [shape: f32[12,4], index: 0, kind: input, shape index: {}]
  %s1 = inlined_call_operand.vmem [shape: f32[8,12], index: 1, kind: input, shape index: {}]
  %s2 = inlined_call_operand.vmem [shape: f32[12,8], index: 2, kind: input, shape index: {}]
  %s3 = inlined_call_operand.vmem [shape: f32[12,8], index: 3, kind: input, shape index: {}]
  %s4 = inlined_call_operand.vmem [shape: f32[4,16], index: 4, kind: input, shape index: {}]
  %s5 = inlined_call_operand.vmem [shape: f32[1,16], index: 5, kind: input, shape index: {}]
  %s6 = inlined_call_operand.vmem [shape: f32[64,32], index: 6, kind: input, shape index: {}]
  %s7 = inlined_call_operand.vmem [shape: f32[1,32], index: 7, kind: input, shape index: {}]
  %s8 = inlined_call_operand.vmem [shape: f32[128,64], index: 8, kind: input, shape index: {}]
  %s9 = inlined_call_operand.vmem [shape: f32[1,64], index: 9, kind: input, shape index: {}]
  %s10 = inlined_call_operand.vmem [shape: f32[256,128], index: 10, kind: input, shape index: {}]
  %s11 = inlined_call_operand.vmem [shape: f32[1,128], index: 11, kind: input, shape index: {}]
  %s12 = inlined_call_operand.vmem [shape: f32[512,64], index: 12, kind: input, shape index: {}]
  %s13 = inlined_call_operand.vmem [shape: f32[1,64], index: 13, kind: input, shape index: {}]
  %s14 = inlined_call_operand.vmem [shape: f32[64,1], index: 14, kind: input, shape index: {}]
  %s15 = inlined_call_operand.<no memory space> [shape: f32[1,1], index: 15, kind: input, shape index: {}]
  %s16 = inlined_call_operand.vmem [shape: f32[12,1], index: 16, kind: output, shape index: {}]
  %s17 = sld [smem:[#allocation0]]
  $region74: #{tpu_custom_call.1} parent=0
    _
  %s19 = ssub.s32 1, %s17
  %s20 = scalar_select 0, %s19, %s17
  %v21 = vstv %s15
  %22 = vst [vmem:[#allocation2] sm:$0x1] %v21
  // Predicated region
  $region2: #{tpu_custom_call.1} parent=0 // pred_check
    _
  $region3: #{tpu_custom_call.1} parent=0 // pred_check_branch
    %24 = sbr.rel (0) target = $region5
  $region4: #{tpu_custom_call.1} parent=0 // pred_region
    _
  $region5: #{tpu_custom_call.1} parent=0 // pred_fallthru
    _
  // Predicated region
  $region6: #{tpu_custom_call.1} parent=0 // pred_check
    _
  $region7: #{tpu_custom_call.1} parent=0 // pred_check_branch
    %26 = sbr.rel (0) target = $region9
  $region8: #{tpu_custom_call.1} parent=0 // pred_region
    _
  $region9: #{tpu_custom_call.1} parent=0 // pred_fallthru
    _
  // Predicated region
  $region10: #{tpu_custom_call.1} parent=0 // pred_check
    _
  $region11: #{tpu_custom_call.1} parent=0 // pred_check_branch
    %28 = sbr.rel (0) target = $region13
  $region12: #{tpu_custom_call.1} parent=0 // pred_region
    _
  $region13: #{tpu_custom_call.1} parent=0 // pred_fallthru
    _
  // Predicated region
  $region14: #{tpu_custom_call.1} parent=0 // pred_check
    _
  $region15: #{tpu_custom_call.1} parent=0 // pred_check_branch
    %30 = sbr.rel (0) target = $region17
  $region16: #{tpu_custom_call.1} parent=0 // pred_region
    _
  $region17: #{tpu_custom_call.1} parent=0 // pred_fallthru
    _
  // Predicated region
  $region18: #{tpu_custom_call.1} parent=0 // pred_check
    _
  $region19: #{tpu_custom_call.1} parent=0 // pred_check_branch
    %32 = sbr.rel (0) target = $region21
  $region20: #{tpu_custom_call.1} parent=0 // pred_region
    _
  $region21: #{tpu_custom_call.1} parent=0 // pred_fallthru
    _
  // Predicated region
  $region22: #{tpu_custom_call.1} parent=0 // pred_check
    _
  $region23: #{tpu_custom_call.1} parent=0 // pred_check_branch
    %34 = sbr.rel (0) target = $region25
  $region24: #{tpu_custom_call.1} parent=0 // pred_region
    _
  $region25: #{tpu_custom_call.1} parent=0 // pred_fallthru
    _
  // Predicated region
  $region26: #{tpu_custom_call.1} parent=0 // pred_check
    _
  $region27: #{tpu_custom_call.1} parent=0 // pred_check_branch
    %36 = sbr.rel (0) target = $region29
  $region28: #{tpu_custom_call.1} parent=0 // pred_region
    _
  $region29: #{tpu_custom_call.1} parent=0 // pred_fallthru
    _
  // Predicated region
  $region30: #{tpu_custom_call.1} parent=0 // pred_check
    _
  $region31: #{tpu_custom_call.1} parent=0 // pred_check_branch
    %38 = sbr.rel (0) target = $region33
  $region32: #{tpu_custom_call.1} parent=0 // pred_region
    _
  $region33: #{tpu_custom_call.1} parent=0 // pred_fallthru
    _
  // Predicated region
  $region34: #{tpu_custom_call.1} parent=0 // pred_check
    _
  $region35: #{tpu_custom_call.1} parent=0 // pred_check_branch
    %40 = sbr.rel (0) target = $region37
  $region36: #{tpu_custom_call.1} parent=0 // pred_region
    _
  $region37: #{tpu_custom_call.1} parent=0 // pred_fallthru
    _
  // Predicated region
  $region38: #{tpu_custom_call.1} parent=0 // pred_check
    _
  $region39: #{tpu_custom_call.1} parent=0 // pred_check_branch
    %42 = sbr.rel (0) target = $region41
  $region40: #{tpu_custom_call.1} parent=0 // pred_region
    _
  $region41: #{tpu_custom_call.1} parent=0 // pred_fallthru
    _
  // Predicated region
  $region42: #{tpu_custom_call.1} parent=0 // pred_check
    _
  $region43: #{tpu_custom_call.1} parent=0 // pred_check_branch
    %44 = sbr.rel (0) target = $region45
  $region44: #{tpu_custom_call.1} parent=0 // pred_region
    _
  $region45: #{tpu_custom_call.1} parent=0 // pred_fallthru
    _
  // Predicated region
  $region46: #{tpu_custom_call.1} parent=0 // pred_check
    _
  $region47: #{tpu_custom_call.1} parent=0 // pred_check_branch
    %46 = sbr.rel (0) target = $region49
  $region48: #{tpu_custom_call.1} parent=0 // pred_region
    _
  $region49: #{tpu_custom_call.1} parent=0 // pred_fallthru
    _
  // Predicated region
  $region50: #{tpu_custom_call.1} parent=0 // pred_check
    _
  $region51: #{tpu_custom_call.1} parent=0 // pred_check_branch
    %48 = sbr.rel (0) target = $region53
  $region52: #{tpu_custom_call.1} parent=0 // pred_region
    _
  $region53: #{tpu_custom_call.1} parent=0 // pred_fallthru
    _
  // Predicated region
  $region54: #{tpu_custom_call.1} parent=0 // pred_check
    _
  $region55: #{tpu_custom_call.1} parent=0 // pred_check_branch
    %50 = sbr.rel (0) target = $region57
  $region56: #{tpu_custom_call.1} parent=0 // pred_region
    _
  $region57: #{tpu_custom_call.1} parent=0 // pred_fallthru
    _
  // Predicated region
  $region58: #{tpu_custom_call.1} parent=0 // pred_check
    _
  $region59: #{tpu_custom_call.1} parent=0 // pred_check_branch
    %52 = sbr.rel (0) target = $region61
  $region60: #{tpu_custom_call.1} parent=0 // pred_region
    _
  $region61: #{tpu_custom_call.1} parent=0 // pred_fallthru
    _
  // Predicated region
  $region62: #{tpu_custom_call.1} parent=0 // pred_check
    _
  $region63: #{tpu_custom_call.1} parent=0 // pred_check_branch
    %54 = sbr.rel (0) target = $region65
  $region64: #{tpu_custom_call.1} parent=0 // pred_region
    _
  $region65: #{tpu_custom_call.1} parent=0 // pred_fallthru
    _
  %v55 = vld [vmem:[%s1] sm:$0xff]
  %v56 = vld [vmem:[%s2] sm:$0xff]
  %v57 = vld [vmem:[%s2 + $0x8] sm:$0xf]
  %v58 = vld [vmem:[%s3] sm:$0xff]
  %v59 = vld [vmem:[%s3 + $0x8] sm:$0xf]
  %v60 = vld [vmem:[%s0] sm:$0xff]
  %v61 = vld [vmem:[%s0 + $0x8] sm:$0xf]
  %v62 = vld [vmem:[%s4] sm:$0xf]
  %v63 = vld [vmem:[%s5] sm:$0x1]
  %v65 = vlaneseq
  %v66 = vshrl.u32 %v65, 7
  %v67 = vsub.s32 0, %v66
  %v68 = vrot.slane %v63, %v67
  %vm70 = vcmask 31744
  %v72 = vsel %vm70, %v60, 0
  %v75 = vsel %vm70, %v61, 0
  %vm77 = vcmask 1043456
  %v79 = vsel %vm77, %v62, 0
  %81 = vmatprep.subr.mxu0 0.0
  %82 = vmatpush1.msra.mxu0 0.0
  %83 = vmatprep.subr.mxu0 0.0
  %84 = vmatpush1.msra.mxu0 0.0
  %85 = vmatprep.subr.mxu0 0.0
  %86 = vmatpush1.msra.mxu0 0.0
  %87 = vmatprep.subr.mxu0 0.0
  %88 = vmatpush1.msra.mxu0 0.0
  %89 = vmatprep.subr.mxu0 0.0
  %90 = vmatpush1.msra.mxu0 0.0
  %91 = vmatprep.subr.mxu0 0.0
  %92 = vmatpush1.msra.mxu0 0.0
  %93 = vmatprep.subr.mxu0 0.0
  %94 = vmatpush1.msra.mxu0 0.0
  %95 = vmatprep.subr.mxu0 0.0
  %96 = vmatpush1.msra.mxu0 0.0
  %97 = vmatprep.subr.mxu0 0.0
  %98 = vmatpush1.msra.mxu0 0.0
  %99 = vmatprep.subr.mxu0 0.0
  %100 = vmatpush1.msra.mxu0 0.0
  %101 = vmatprep.subr.mxu0 0.0
  %102 = vmatpush1.msra.mxu0 0.0
  %103 = vmatprep.subr.mxu0 0.0
  %104 = vmatpush1.msra.mxu0 0.0
  %105 = vmatprep.subr.mxu0 0.0
  %106 = vmatpush1.msra.mxu0 0.0
  %107 = vmatprep.subr.mxu0 0.0
  %108 = vmatpush1.msra.mxu0 0.0
  %109 = vmatprep.subr.mxu0 0.0
  %110 = vmatpush1.msra.mxu0 0.0
  %111 = vmatprep.subr.mxu0 0.0
  %112 = vmatpush1.msra.mxu0 %v79
  %113 = vmatprep.subr.mxu0 0.0
  %114 = vmatpush2.msra.mxu0 0.0
  %115 = vmatprep.subr.mxu0 0.0
  %116 = vmatpush2.msra.mxu0 0.0
  %117 = vmatprep.subr.mxu0 0.0
  %118 = vmatpush2.msra.mxu0 0.0
  %119 = vmatprep.subr.mxu0 0.0
  %120 = vmatpush2.msra.mxu0 0.0
  %121 = vmatprep.subr.mxu0 0.0
  %122 = vmatpush2.msra.mxu0 0.0
  %123 = vmatprep.subr.mxu0 0.0
  %124 = vmatpush2.msra.mxu0 0.0
  %125 = vmatprep.subr.mxu0 0.0
  %126 = vmatpush2.msra.mxu0 0.0
  %127 = vmatprep.subr.mxu0 0.0
  %128 = vmatpush2.msra.mxu0 0.0
  %129 = vmatprep.subr.mxu0 0.0
  %130 = vmatpush2.msra.mxu0 0.0
  %131 = vmatprep.subr.mxu0 0.0
  %132 = vmatpush2.msra.mxu0 0.0
  %133 = vmatprep.subr.mxu0 0.0
  %134 = vmatpush2.msra.mxu0 0.0
  %135 = vmatprep.subr.mxu0 0.0
  %136 = vmatpush2.msra.mxu0 0.0
  %137 = vmatprep.subr.mxu0 0.0
  %138 = vmatpush2.msra.mxu0 0.0
  %139 = vmatprep.subr.mxu0 0.0
  %140 = vmatpush2.msra.mxu0 0.0
  %141 = vmatprep.subr.mxu0 0.0
  %142 = vmatpush2.msra.mxu0 0.0
  %143 = vmatprep.subr.mxu0 0.0
  %144 = vmatpush2.msra.mxu0 0.0
  %145 = vmatprep.mubr.f32.mxu0 0.0
  %146 = vmatmul.mubr.f32.gmra.mxu0 %v72
  %v147 = vpop.f32.mrf.mxu0
  %v148 = vadd.f32 %v68, %v147
  %v149 = vpop.f32.mrf.mxu0
  %150 = vmatprep.mubr.f32.mxu0 0.0
  %151 = vmatmul.mubr.f32.gmra.mxu0 %v75
  %v152 = vpop.f32.mrf.mxu0
  %v153 = vadd.f32 %v68, %v152
  %v154 = vpop.f32.mrf.mxu0
  %155 = vdwg.mxu0
  %v156 = vmax.f32 %v148, 0.0
  %v157 = vmax.f32 %v153, 0.0
  %vm158 = vcmask 97280
  %v160 = vsel %vm158, %v55, 0
  %v163 = vsel %vm77, %v157, 0
  %165 = vmatprep.subr.mxu0 0.0
  %166 = vmatpush1.msra.mxu0 0.0
  %167 = vmatprep.subr.mxu0 0.0
  %168 = vmatpush1.msra.mxu0 0.0
  %169 = vmatprep.subr.mxu0 0.0
  %170 = vmatpush1.msra.mxu0 0.0
  %171 = vmatprep.subr.mxu0 0.0
  %172 = vmatpush1.msra.mxu0 0.0
  %173 = vmatprep.subr.mxu0 0.0
  %174 = vmatpush1.msra.mxu0 0.0
  %175 = vmatprep.subr.mxu0 0.0
  %176 = vmatpush1.msra.mxu0 0.0
  %177 = vmatprep.subr.mxu0 0.0
  %178 = vmatpush1.msra.mxu0 0.0
  %179 = vmatprep.subr.mxu0 0.0
  %180 = vmatpush1.msra.mxu0 0.0
  %181 = vmatprep.subr.mxu0 0.0
  %182 = vmatpush1.msra.mxu0 0.0
  %183 = vmatprep.subr.mxu0 0.0
  %184 = vmatpush1.msra.mxu0 0.0
  %185 = vmatprep.subr.mxu0 0.0
  %186 = vmatpush1.msra.mxu0 0.0
  %187 = vmatprep.subr.mxu0 0.0
  %188 = vmatpush1.msra.mxu0 0.0
  %189 = vmatprep.subr.mxu0 0.0
  %190 = vmatpush1.msra.mxu0 0.0
  %191 = vmatprep.subr.mxu0 0.0
  %192 = vmatpush1.msra.mxu0 0.0
  %193 = vmatprep.subr.mxu0 0.0
  %194 = vmatpush1.msra.mxu0 %v163
  %195 = vmatprep.subr.mxu0 0.0
  %196 = vmatpush1.msra.mxu0 %v156
  %197 = vmatprep.subr.mxu0 0.0
  %198 = vmatpush2.msra.mxu0 0.0
  %199 = vmatprep.subr.mxu0 0.0
  %200 = vmatpush2.msra.mxu0 0.0
  %201 = vmatprep.subr.mxu0 0.0
  %202 = vmatpush2.msra.mxu0 0.0
  %203 = vmatprep.subr.mxu0 0.0
  %204 = vmatpush2.msra.mxu0 0.0
  %205 = vmatprep.subr.mxu0 0.0
  %206 = vmatpush2.msra.mxu0 0.0
  %207 = vmatprep.subr.mxu0 0.0
  %208 = vmatpush2.msra.mxu0 0.0
  %209 = vmatprep.subr.mxu0 0.0
  %210 = vmatpush2.msra.mxu0 0.0
  %211 = vmatprep.subr.mxu0 0.0
  %212 = vmatpush2.msra.mxu0 0.0
  %213 = vmatprep.subr.mxu0 0.0
  %214 = vmatpush2.msra.mxu0 0.0
  %215 = vmatprep.subr.mxu0 0.0
  %216 = vmatpush2.msra.mxu0 0.0
  %217 = vmatprep.subr.mxu0 0.0
  %218 = vmatpush2.msra.mxu0 0.0
  %219 = vmatprep.subr.mxu0 0.0
  %220 = vmatpush2.msra.mxu0 0.0
  %221 = vmatprep.subr.mxu0 0.0
  %222 = vmatpush2.msra.mxu0 0.0
  %223 = vmatprep.subr.mxu0 0.0
  %224 = vmatpush2.msra.mxu0 0.0
  %225 = vmatprep.subr.mxu0 0.0
  %226 = vmatpush2.msra.mxu0 0.0
  %227 = vmatprep.subr.mxu0 0.0
  %228 = vmatpush2.msra.mxu0 0.0
  %229 = vmatprep.mubr.f32.mxu0 0.0
  %230 = vmatmul.mubr.f32.gmra.mxu0 %v160
  %v231 = vpop.f32.mrf.mxu0
  %v232 = vadd.f32 0.0, %v231
  %v233 = vpop.f32.mrf.mxu0
  %234 = vdwg.mxu0
  %vm235 = vcmask 64512
  %v237 = vsel %vm235, %v56, 0
  %v240 = vsel %vm235, %v57, 0
  %242 = vmatprep.subr.mxu0 0.0
  %243 = vmatpush1.msra.mxu0 0.0
  %244 = vmatprep.subr.mxu0 0.0
  %245 = vmatpush1.msra.mxu0 0.0
  %246 = vmatprep.subr.mxu0 0.0
  %247 = vmatpush1.msra.mxu0 0.0
  %248 = vmatprep.subr.mxu0 0.0
  %249 = vmatpush1.msra.mxu0 0.0
  %250 = vmatprep.subr.mxu0 0.0
  %251 = vmatpush1.msra.mxu0 0.0
  %252 = vmatprep.subr.mxu0 0.0
  %253 = vmatpush1.msra.mxu0 0.0
  %254 = vmatprep.subr.mxu0 0.0
  %255 = vmatpush1.msra.mxu0 0.0
  %256 = vmatprep.subr.mxu0 0.0
  %257 = vmatpush1.msra.mxu0 0.0
  %258 = vmatprep.subr.mxu0 0.0
  %259 = vmatpush1.msra.mxu0 0.0
  %260 = vmatprep.subr.mxu0 0.0
  %261 = vmatpush1.msra.mxu0 0.0
  %262 = vmatprep.subr.mxu0 0.0
  %263 = vmatpush1.msra.mxu0 0.0
  %264 = vmatprep.subr.mxu0 0.0
  %265 = vmatpush1.msra.mxu0 0.0
  %266 = vmatprep.subr.mxu0 0.0
  %267 = vmatpush1.msra.mxu0 0.0
  %268 = vmatprep.subr.mxu0 0.0
  %269 = vmatpush1.msra.mxu0 0.0
  %270 = vmatprep.subr.mxu0 0.0
  %271 = vmatpush1.msra.mxu0 0.0
  %272 = vmatprep.subr.mxu0 0.0
  %273 = vmatpush1.msra.mxu0 %v232
  %274 = vmatprep.subr.mxu0 0.0
  %275 = vmatpush2.msra.mxu0 0.0
  %276 = vmatprep.subr.mxu0 0.0
  %277 = vmatpush2.msra.mxu0 0.0
  %278 = vmatprep.subr.mxu0 0.0
  %279 = vmatpush2.msra.mxu0 0.0
  %280 = vmatprep.subr.mxu0 0.0
  %281 = vmatpush2.msra.mxu0 0.0
  %282 = vmatprep.subr.mxu0 0.0
  %283 = vmatpush2.msra.mxu0 0.0
  %284 = vmatprep.subr.mxu0 0.0
  %285 = vmatpush2.msra.mxu0 0.0
  %286 = vmatprep.subr.mxu0 0.0
  %287 = vmatpush2.msra.mxu0 0.0
  %288 = vmatprep.subr.mxu0 0.0
  %289 = vmatpush2.msra.mxu0 0.0
  %290 = vmatprep.subr.mxu0 0.0
  %291 = vmatpush2.msra.mxu0 0.0
  %292 = vmatprep.subr.mxu0 0.0
  %293 = vmatpush2.msra.mxu0 0.0
  %294 = vmatprep.subr.mxu0 0.0
  %295 = vmatpush2.msra.mxu0 0.0
  %296 = vmatprep.subr.mxu0 0.0
  %297 = vmatpush2.msra.mxu0 0.0
  %298 = vmatprep.subr.mxu0 0.0
  %299 = vmatpush2.msra.mxu0 0.0
  %300 = vmatprep.subr.mxu0 0.0
  %301 = vmatpush2.msra.mxu0 0.0
  %302 = vmatprep.subr.mxu0 0.0
  %303 = vmatpush2.msra.mxu0 0.0
  %304 = vmatprep.subr.mxu0 0.0
  %305 = vmatpush2.msra.mxu0 0.0
  %306 = vmatprep.mubr.f32.mxu0 0.0
  %307 = vmatmul.mubr.f32.gmra.mxu0 %v237
  %v308 = vpop.f32.mrf.mxu0
  %v309 = vadd.f32 0.0, %v308
  %v310 = vpop.f32.mrf.mxu0
  %311 = vmatprep.mubr.f32.mxu0 0.0
  %312 = vmatmul.mubr.f32.gmra.mxu0 %v240
  %v313 = vpop.f32.mrf.mxu0
  %v314 = vadd.f32 0.0, %v313
  %v315 = vpop.f32.mrf.mxu0
  %316 = vdwg.mxu0
  %v318 = vsel %vm235, %v58, 0
  %v321 = vsel %vm235, %v59, 0
  %323 = vmatprep.subr.mxu0 0.0
  %324 = vmatpush1.msra.mxu0 0.0
  %325 = vmatprep.subr.mxu0 0.0
  %326 = vmatpush1.msra.mxu0 0.0
  %327 = vmatprep.subr.mxu0 0.0
  %328 = vmatpush1.msra.mxu0 0.0
  %329 = vmatprep.subr.mxu0 0.0
  %330 = vmatpush1.msra.mxu0 0.0
  %331 = vmatprep.subr.mxu0 0.0
  %332 = vmatpush1.msra.mxu0 0.0
  %333 = vmatprep.subr.mxu0 0.0
  %334 = vmatpush1.msra.mxu0 0.0
  %335 = vmatprep.subr.mxu0 0.0
  %336 = vmatpush1.msra.mxu0 0.0
  %337 = vmatprep.subr.mxu0 0.0
  %338 = vmatpush1.msra.mxu0 0.0
  %339 = vmatprep.subr.mxu0 0.0
  %340 = vmatpush1.msra.mxu0 0.0
  %341 = vmatprep.subr.mxu0 0.0
  %342 = vmatpush1.msra.mxu0 0.0
  %343 = vmatprep.subr.mxu0 0.0
  %344 = vmatpush1.msra.mxu0 0.0
  %345 = vmatprep.subr.mxu0 0.0
  %346 = vmatpush1.msra.mxu0 0.0
  %347 = vmatprep.subr.mxu0 0.0
  %348 = vmatpush1.msra.mxu0 0.0
  %349 = vmatprep.subr.mxu0 0.0
  %350 = vmatpush1.msra.mxu0 0.0
  %351 = vmatprep.subr.mxu0 0.0
  %352 = vmatpush1.msra.mxu0 0.0
  %353 = vmatprep.subr.mxu0 0.0
  %354 = vmatpush1.msra.mxu0 %v232
  %355 = vmatprep.subr.mxu0 0.0
  %356 = vmatpush2.msra.mxu0 0.0
  %357 = vmatprep.subr.mxu0 0.0
  %358 = vmatpush2.msra.mxu0 0.0
  %359 = vmatprep.subr.mxu0 0.0
  %360 = vmatpush2.msra.mxu0 0.0
  %361 = vmatprep.subr.mxu0 0.0
  %362 = vmatpush2.msra.mxu0 0.0
  %363 = vmatprep.subr.mxu0 0.0
  %364 = vmatpush2.msra.mxu0 0.0
  %365 = vmatprep.subr.mxu0 0.0
  %366 = vmatpush2.msra.mxu0 0.0
  %367 = vmatprep.subr.mxu0 0.0
  %368 = vmatpush2.msra.mxu0 0.0
  %369 = vmatprep.subr.mxu0 0.0
  %370 = vmatpush2.msra.mxu0 0.0
  %371 = vmatprep.subr.mxu0 0.0
  %372 = vmatpush2.msra.mxu0 0.0
  %373 = vmatprep.subr.mxu0 0.0
  %374 = vmatpush2.msra.mxu0 0.0
  %375 = vmatprep.subr.mxu0 0.0
  %376 = vmatpush2.msra.mxu0 0.0
  %377 = vmatprep.subr.mxu0 0.0
  %378 = vmatpush2.msra.mxu0 0.0
  %379 = vmatprep.subr.mxu0 0.0
  %380 = vmatpush2.msra.mxu0 0.0
  %381 = vmatprep.subr.mxu0 0.0
  %382 = vmatpush2.msra.mxu0 0.0
  %383 = vmatprep.subr.mxu0 0.0
  %384 = vmatpush2.msra.mxu0 0.0
  %385 = vmatprep.subr.mxu0 0.0
  %386 = vmatpush2.msra.mxu0 0.0
  %387 = vmatprep.mubr.f32.mxu0 0.0
  %388 = vmatmul.mubr.f32.gmra.mxu0 %v318
  %v389 = vpop.f32.mrf.mxu0
  %v390 = vadd.f32 0.0, %v389
  %v391 = vpop.f32.mrf.mxu0
  %392 = vmatprep.mubr.f32.mxu0 0.0
  %393 = vmatmul.mubr.f32.gmra.mxu0 %v321
  %v394 = vpop.f32.mrf.mxu0
  %v395 = vadd.f32 0.0, %v394
  %v396 = vpop.f32.mrf.mxu0
  %397 = vdwg.mxu0
  %v399 = vsel %vm158, 0.083333336, 0
  %401 = vmatprep.subr.mxu0 0.0
  %402 = vmatpush1.msra.mxu0 0.0
  %403 = vmatprep.subr.mxu0 0.0
  %404 = vmatpush1.msra.mxu0 0.0
  %405 = vmatprep.subr.mxu0 0.0
  %406 = vmatpush1.msra.mxu0 0.0
  %407 = vmatprep.subr.mxu0 0.0
  %408 = vmatpush1.msra.mxu0 0.0
  %409 = vmatprep.subr.mxu0 0.0
  %410 = vmatpush1.msra.mxu0 0.0
  %411 = vmatprep.subr.mxu0 0.0
  %412 = vmatpush1.msra.mxu0 0.0
  %413 = vmatprep.subr.mxu0 0.0
  %414 = vmatpush1.msra.mxu0 0.0
  %415 = vmatprep.subr.mxu0 0.0
  %416 = vmatpush1.msra.mxu0 0.0
  %417 = vmatprep.subr.mxu0 0.0
  %418 = vmatpush1.msra.mxu0 0.0
  %419 = vmatprep.subr.mxu0 0.0
  %420 = vmatpush1.msra.mxu0 0.0
  %421 = vmatprep.subr.mxu0 0.0
  %422 = vmatpush1.msra.mxu0 0.0
  %423 = vmatprep.subr.mxu0 0.0
  %424 = vmatpush1.msra.mxu0 0.0
  %425 = vmatprep.subr.mxu0 0.0
  %426 = vmatpush1.msra.mxu0 0.0
  %427 = vmatprep.subr.mxu0 0.0
  %428 = vmatpush1.msra.mxu0 0.0
  %429 = vmatprep.subr.mxu0 0.0
  %430 = vmatpush1.msra.mxu0 %v163
  %431 = vmatprep.subr.mxu0 0.0
  %432 = vmatpush1.msra.mxu0 %v156
  %433 = vmatprep.subr.mxu0 0.0
  %434 = vmatpush2.msra.mxu0 0.0
  %435 = vmatprep.subr.mxu0 0.0
  %436 = vmatpush2.msra.mxu0 0.0
  %437 = vmatprep.subr.mxu0 0.0
  %438 = vmatpush2.msra.mxu0 0.0
  %439 = vmatprep.subr.mxu0 0.0
  %440 = vmatpush2.msra.mxu0 0.0
  %441 = vmatprep.subr.mxu0 0.0
  %442 = vmatpush2.msra.mxu0 0.0
  %443 = vmatprep.subr.mxu0 0.0
  %444 = vmatpush2.msra.mxu0 0.0
  %445 = vmatprep.subr.mxu0 0.0
  %446 = vmatpush2.msra.mxu0 0.0
  %447 = vmatprep.subr.mxu0 0.0
  %448 = vmatpush2.msra.mxu0 0.0
  %449 = vmatprep.subr.mxu0 0.0
  %450 = vmatpush2.msra.mxu0 0.0
  %451 = vmatprep.subr.mxu0 0.0
  %452 = vmatpush2.msra.mxu0 0.0
  %453 = vmatprep.subr.mxu0 0.0
  %454 = vmatpush2.msra.mxu0 0.0
  %455 = vmatprep.subr.mxu0 0.0
  %456 = vmatpush2.msra.mxu0 0.0
  %457 = vmatprep.subr.mxu0 0.0
  %458 = vmatpush2.msra.mxu0 0.0
  %459 = vmatprep.subr.mxu0 0.0
  %460 = vmatpush2.msra.mxu0 0.0
  %461 = vmatprep.subr.mxu0 0.0
  %462 = vmatpush2.msra.mxu0 0.0
  %463 = vmatprep.subr.mxu0 0.0
  %464 = vmatpush2.msra.mxu0 0.0
  %465 = vmatprep.mubr.f32.mxu0 0.0
  %466 = vmatmul.mubr.f32.gmra.mxu0 %v399
  %v467 = vpop.f32.mrf.mxu0
  %v468 = vadd.f32 0.0, %v467
  %v469 = vpop.f32.mrf.mxu0
  %470 = vdwg.mxu0
  %v471 = vld [vmem:[%s6] sm:$0xff]
  %v472 = vld [vmem:[%s6 + $0x8] sm:$0xff]
  %v473 = vld [vmem:[%s6 + $0x10] sm:$0xff]
  %v474 = vld [vmem:[%s6 + $0x18] sm:$0xff]
  %vm475 = vcmask 130048
  %v477 = vsel %vm475, %v309, 0
  %v480 = vsel %vm475, %v314, 0
  %482 = vmatprep.subr.mxu0 0.0
  %483 = vmatpush1.msra.mxu0 0.0
  %484 = vmatprep.subr.mxu0 0.0
  %485 = vmatpush1.msra.mxu0 0.0
  %486 = vmatprep.subr.mxu0 0.0
  %487 = vmatpush1.msra.mxu0 0.0
  %488 = vmatprep.subr.mxu0 0.0
  %489 = vmatpush1.msra.mxu0 0.0
  %490 = vmatprep.subr.mxu0 0.0
  %491 = vmatpush1.msra.mxu0 0.0
  %492 = vmatprep.subr.mxu0 0.0
  %493 = vmatpush1.msra.mxu0 0.0
  %494 = vmatprep.subr.mxu0 0.0
  %495 = vmatpush1.msra.mxu0 0.0
  %496 = vmatprep.subr.mxu0 0.0
  %497 = vmatpush1.msra.mxu0 0.0
  %498 = vmatprep.subr.mxu0 0.0
  %499 = vmatpush1.msra.mxu0 0.0
  %500 = vmatprep.subr.mxu0 0.0
  %501 = vmatpush1.msra.mxu0 0.0
  %502 = vmatprep.subr.mxu0 0.0
  %503 = vmatpush1.msra.mxu0 0.0
  %504 = vmatprep.subr.mxu0 0.0
  %505 = vmatpush1.msra.mxu0 0.0
  %506 = vmatprep.subr.mxu0 0.0
  %507 = vmatpush1.msra.mxu0 0.0
  %508 = vmatprep.subr.mxu0 0.0
  %509 = vmatpush1.msra.mxu0 0.0
  %510 = vmatprep.subr.mxu0 0.0
  %511 = vmatpush1.msra.mxu0 %v474
  %512 = vmatprep.subr.mxu0 0.0
  %513 = vmatpush1.msra.mxu0 %v473
  %514 = vmatprep.subr.mxu0 0.0
  %515 = vmatpush2.msra.mxu0 0.0
  %516 = vmatprep.subr.mxu0 0.0
  %517 = vmatpush2.msra.mxu0 0.0
  %518 = vmatprep.subr.mxu0 0.0
  %519 = vmatpush2.msra.mxu0 0.0
  %520 = vmatprep.subr.mxu0 0.0
  %521 = vmatpush2.msra.mxu0 0.0
  %522 = vmatprep.subr.mxu0 0.0
  %523 = vmatpush2.msra.mxu0 0.0
  %524 = vmatprep.subr.mxu0 0.0
  %525 = vmatpush2.msra.mxu0 0.0
  %526 = vmatprep.subr.mxu0 0.0
  %527 = vmatpush2.msra.mxu0 0.0
  %528 = vmatprep.subr.mxu0 0.0
  %529 = vmatpush2.msra.mxu0 0.0
  %530 = vmatprep.subr.mxu0 0.0
  %531 = vmatpush2.msra.mxu0 0.0
  %532 = vmatprep.subr.mxu0 0.0
  %533 = vmatpush2.msra.mxu0 0.0
  %534 = vmatprep.subr.mxu0 0.0
  %535 = vmatpush2.msra.mxu0 0.0
  %536 = vmatprep.subr.mxu0 0.0
  %537 = vmatpush2.msra.mxu0 0.0
  %538 = vmatprep.subr.mxu0 0.0
  %539 = vmatpush2.msra.mxu0 0.0
  %540 = vmatprep.subr.mxu0 0.0
  %541 = vmatpush2.msra.mxu0 0.0
  %542 = vmatprep.subr.mxu0 0.0
  %543 = vmatpush2.msra.mxu0 0.0
  %544 = vmatprep.subr.mxu0 0.0
  %545 = vmatpush2.msra.mxu0 0.0
  %546 = vmatprep.mubr.f32.mxu0 0.0
  %547 = vmatmul.mubr.f32.gmra.mxu0 %v477
  %v548 = vpop.f32.mrf.mxu0
  %v549 = vadd.f32 0.0, %v548
  %v550 = vpop.f32.mrf.mxu0
  %551 = vmatprep.mubr.f32.mxu0 0.0
  %552 = vmatmul.mubr.f32.gmra.mxu0 %v480
  %v553 = vpop.f32.mrf.mxu0
  %v554 = vadd.f32 0.0, %v553
  %v555 = vpop.f32.mrf.mxu0
  %556 = vdwg.mxu0
  %v558 = vsel %vm475, %v156, 0
  %v560 = vsel %vm475, %v157, 0
  %562 = vmatprep.subr.mxu0 0.0
  %563 = vmatpush1.msra.mxu0 0.0
  %564 = vmatprep.subr.mxu0 0.0
  %565 = vmatpush1.msra.mxu0 0.0
  %566 = vmatprep.subr.mxu0 0.0
  %567 = vmatpush1.msra.mxu0 0.0
  %568 = vmatprep.subr.mxu0 0.0
  %569 = vmatpush1.msra.mxu0 0.0
  %570 = vmatprep.subr.mxu0 0.0
  %571 = vmatpush1.msra.mxu0 0.0
  %572 = vmatprep.subr.mxu0 0.0
  %573 = vmatpush1.msra.mxu0 0.0
  %574 = vmatprep.subr.mxu0 0.0
  %575 = vmatpush1.msra.mxu0 0.0
  %576 = vmatprep.subr.mxu0 0.0
  %577 = vmatpush1.msra.mxu0 0.0
  %578 = vmatprep.subr.mxu0 0.0
  %579 = vmatpush1.msra.mxu0 0.0
  %580 = vmatprep.subr.mxu0 0.0
  %581 = vmatpush1.msra.mxu0 0.0
  %582 = vmatprep.subr.mxu0 0.0
  %583 = vmatpush1.msra.mxu0 0.0
  %584 = vmatprep.subr.mxu0 0.0
  %585 = vmatpush1.msra.mxu0 0.0
  %586 = vmatprep.subr.mxu0 0.0
  %587 = vmatpush1.msra.mxu0 0.0
  %588 = vmatprep.subr.mxu0 0.0
  %589 = vmatpush1.msra.mxu0 0.0
  %590 = vmatprep.subr.mxu0 0.0
  %591 = vmatpush1.msra.mxu0 %v472
  %592 = vmatprep.subr.mxu0 0.0
  %593 = vmatpush1.msra.mxu0 %v471
  %594 = vmatprep.subr.mxu0 0.0
  %595 = vmatpush2.msra.mxu0 0.0
  %596 = vmatprep.subr.mxu0 0.0
  %597 = vmatpush2.msra.mxu0 0.0
  %598 = vmatprep.subr.mxu0 0.0
  %599 = vmatpush2.msra.mxu0 0.0
  %600 = vmatprep.subr.mxu0 0.0
  %601 = vmatpush2.msra.mxu0 0.0
  %602 = vmatprep.subr.mxu0 0.0
  %603 = vmatpush2.msra.mxu0 0.0
  %604 = vmatprep.subr.mxu0 0.0
  %605 = vmatpush2.msra.mxu0 0.0
  %606 = vmatprep.subr.mxu0 0.0
  %607 = vmatpush2.msra.mxu0 0.0
  %608 = vmatprep.subr.mxu0 0.0
  %609 = vmatpush2.msra.mxu0 0.0
  %610 = vmatprep.subr.mxu0 0.0
  %611 = vmatpush2.msra.mxu0 0.0
  %612 = vmatprep.subr.mxu0 0.0
  %613 = vmatpush2.msra.mxu0 0.0
  %614 = vmatprep.subr.mxu0 0.0
  %615 = vmatpush2.msra.mxu0 0.0
  %616 = vmatprep.subr.mxu0 0.0
  %617 = vmatpush2.msra.mxu0 0.0
  %618 = vmatprep.subr.mxu0 0.0
  %619 = vmatpush2.msra.mxu0 0.0
  %620 = vmatprep.subr.mxu0 0.0
  %621 = vmatpush2.msra.mxu0 0.0
  %622 = vmatprep.subr.mxu0 0.0
  %623 = vmatpush2.msra.mxu0 0.0
  %624 = vmatprep.subr.mxu0 0.0
  %625 = vmatpush2.msra.mxu0 0.0
  %626 = vmatprep.mubr.f32.mxu0 0.0
  %627 = vmatmul.mubr.f32.gmra.mxu0 %v558
  %v628 = vpop.f32.mrf.mxu0
  %v629 = vadd.f32 %v549, %v628
  %v630 = vpop.f32.mrf.mxu0
  %631 = vmatprep.mubr.f32.mxu0 0.0
  %632 = vmatmul.mubr.f32.gmra.mxu0 %v560
  %v633 = vpop.f32.mrf.mxu0
  %v634 = vadd.f32 %v554, %v633
  %v635 = vpop.f32.mrf.mxu0
  %636 = vdwg.mxu0
  %v637 = vld [vmem:[%s6 + $0x20] sm:$0xff]
  %v638 = vld [vmem:[%s6 + $0x28] sm:$0xff]
  %v640 = vsel %vm475, %v390, 0
  %v643 = vsel %vm475, %v395, 0
  %645 = vmatprep.subr.mxu0 0.0
  %646 = vmatpush1.msra.mxu0 0.0
  %647 = vmatprep.subr.mxu0 0.0
  %648 = vmatpush1.msra.mxu0 0.0
  %649 = vmatprep.subr.mxu0 0.0
  %650 = vmatpush1.msra.mxu0 0.0
  %651 = vmatprep.subr.mxu0 0.0
  %652 = vmatpush1.msra.mxu0 0.0
  %653 = vmatprep.subr.mxu0 0.0
  %654 = vmatpush1.msra.mxu0 0.0
  %655 = vmatprep.subr.mxu0 0.0
  %656 = vmatpush1.msra.mxu0 0.0
  %657 = vmatprep.subr.mxu0 0.0
  %658 = vmatpush1.msra.mxu0 0.0
  %659 = vmatprep.subr.mxu0 0.0
  %660 = vmatpush1.msra.mxu0 0.0
  %661 = vmatprep.subr.mxu0 0.0
  %662 = vmatpush1.msra.mxu0 0.0
  %663 = vmatprep.subr.mxu0 0.0
  %664 = vmatpush1.msra.mxu0 0.0
  %665 = vmatprep.subr.mxu0 0.0
  %666 = vmatpush1.msra.mxu0 0.0
  %667 = vmatprep.subr.mxu0 0.0
  %668 = vmatpush1.msra.mxu0 0.0
  %669 = vmatprep.subr.mxu0 0.0
  %670 = vmatpush1.msra.mxu0 0.0
  %671 = vmatprep.subr.mxu0 0.0
  %672 = vmatpush1.msra.mxu0 0.0
  %673 = vmatprep.subr.mxu0 0.0
  %674 = vmatpush1.msra.mxu0 %v638
  %675 = vmatprep.subr.mxu0 0.0
  %676 = vmatpush1.msra.mxu0 %v637
  %677 = vmatprep.subr.mxu0 0.0
  %678 = vmatpush2.msra.mxu0 0.0
  %679 = vmatprep.subr.mxu0 0.0
  %680 = vmatpush2.msra.mxu0 0.0
  %681 = vmatprep.subr.mxu0 0.0
  %682 = vmatpush2.msra.mxu0 0.0
  %683 = vmatprep.subr.mxu0 0.0
  %684 = vmatpush2.msra.mxu0 0.0
  %685 = vmatprep.subr.mxu0 0.0
  %686 = vmatpush2.msra.mxu0 0.0
  %687 = vmatprep.subr.mxu0 0.0
  %688 = vmatpush2.msra.mxu0 0.0
  %689 = vmatprep.subr.mxu0 0.0
  %690 = vmatpush2.msra.mxu0 0.0
  %691 = vmatprep.subr.mxu0 0.0
  %692 = vmatpush2.msra.mxu0 0.0
  %693 = vmatprep.subr.mxu0 0.0
  %694 = vmatpush2.msra.mxu0 0.0
  %695 = vmatprep.subr.mxu0 0.0
  %696 = vmatpush2.msra.mxu0 0.0
  %697 = vmatprep.subr.mxu0 0.0
  %698 = vmatpush2.msra.mxu0 0.0
  %699 = vmatprep.subr.mxu0 0.0
  %700 = vmatpush2.msra.mxu0 0.0
  %701 = vmatprep.subr.mxu0 0.0
  %702 = vmatpush2.msra.mxu0 0.0
  %703 = vmatprep.subr.mxu0 0.0
  %704 = vmatpush2.msra.mxu0 0.0
  %705 = vmatprep.subr.mxu0 0.0
  %706 = vmatpush2.msra.mxu0 0.0
  %707 = vmatprep.subr.mxu0 0.0
  %708 = vmatpush2.msra.mxu0 0.0
  %709 = vmatprep.mubr.f32.mxu0 0.0
  %710 = vmatmul.mubr.f32.gmra.mxu0 %v640
  %v711 = vpop.f32.mrf.mxu0
  %v712 = vadd.f32 0.0, %v711
  %v713 = vpop.f32.mrf.mxu0
  %714 = vmatprep.mubr.f32.mxu0 0.0
  %715 = vmatmul.mubr.f32.gmra.mxu0 %v643
  %v716 = vpop.f32.mrf.mxu0
  %v717 = vadd.f32 0.0, %v716
  %v718 = vpop.f32.mrf.mxu0
  %719 = vdwg.mxu0
  %v720 = vadd.f32 %v629, %v712
  %v721 = vadd.f32 %v634, %v717
  %v722 = vld [vmem:[%s6 + $0x30] sm:$0xff]
  %v723 = vld [vmem:[%s6 + $0x38] sm:$0xff]
  %v725 = vsel %vm475, %v468, 0
  %727 = vmatprep.subr.mxu0 0.0
  %728 = vmatpush1.msra.mxu0 0.0
  %729 = vmatprep.subr.mxu0 0.0
  %730 = vmatpush1.msra.mxu0 0.0
  %731 = vmatprep.subr.mxu0 0.0
  %732 = vmatpush1.msra.mxu0 0.0
  %733 = vmatprep.subr.mxu0 0.0
  %734 = vmatpush1.msra.mxu0 0.0
  %735 = vmatprep.subr.mxu0 0.0
  %736 = vmatpush1.msra.mxu0 0.0
  %737 = vmatprep.subr.mxu0 0.0
  %738 = vmatpush1.msra.mxu0 0.0
  %739 = vmatprep.subr.mxu0 0.0
  %740 = vmatpush1.msra.mxu0 0.0
  %741 = vmatprep.subr.mxu0 0.0
  %742 = vmatpush1.msra.mxu0 0.0
  %743 = vmatprep.subr.mxu0 0.0
  %744 = vmatpush1.msra.mxu0 0.0
  %745 = vmatprep.subr.mxu0 0.0
  %746 = vmatpush1.msra.mxu0 0.0
  %747 = vmatprep.subr.mxu0 0.0
  %748 = vmatpush1.msra.mxu0 0.0
  %749 = vmatprep.subr.mxu0 0.0
  %750 = vmatpush1.msra.mxu0 0.0
  %751 = vmatprep.subr.mxu0 0.0
  %752 = vmatpush1.msra.mxu0 0.0
  %753 = vmatprep.subr.mxu0 0.0
  %754 = vmatpush1.msra.mxu0 0.0
  %755 = vmatprep.subr.mxu0 0.0
  %756 = vmatpush1.msra.mxu0 %v723
  %757 = vmatprep.subr.mxu0 0.0
  %758 = vmatpush1.msra.mxu0 %v722
  %759 = vmatprep.subr.mxu0 0.0
  %760 = vmatpush2.msra.mxu0 0.0
  %761 = vmatprep.subr.mxu0 0.0
  %762 = vmatpush2.msra.mxu0 0.0
  %763 = vmatprep.subr.mxu0 0.0
  %764 = vmatpush2.msra.mxu0 0.0
  %765 = vmatprep.subr.mxu0 0.0
  %766 = vmatpush2.msra.mxu0 0.0
  %767 = vmatprep.subr.mxu0 0.0
  %768 = vmatpush2.msra.mxu0 0.0
  %769 = vmatprep.subr.mxu0 0.0
  %770 = vmatpush2.msra.mxu0 0.0
  %771 = vmatprep.subr.mxu0 0.0
  %772 = vmatpush2.msra.mxu0 0.0
  %773 = vmatprep.subr.mxu0 0.0
  %774 = vmatpush2.msra.mxu0 0.0
  %775 = vmatprep.subr.mxu0 0.0
  %776 = vmatpush2.msra.mxu0 0.0
  %777 = vmatprep.subr.mxu0 0.0
  %778 = vmatpush2.msra.mxu0 0.0
  %779 = vmatprep.subr.mxu0 0.0
  %780 = vmatpush2.msra.mxu0 0.0
  %781 = vmatprep.subr.mxu0 0.0
  %782 = vmatpush2.msra.mxu0 0.0
  %783 = vmatprep.subr.mxu0 0.0
  %784 = vmatpush2.msra.mxu0 0.0
  %785 = vmatprep.subr.mxu0 0.0
  %786 = vmatpush2.msra.mxu0 0.0
  %787 = vmatprep.subr.mxu0 0.0
  %788 = vmatpush2.msra.mxu0 0.0
  %789 = vmatprep.subr.mxu0 0.0
  %790 = vmatpush2.msra.mxu0 0.0
  %791 = vmatprep.mubr.f32.mxu0 0.0
  %792 = vmatmul.mubr.f32.gmra.mxu0 %v725
  %v793 = vpop.f32.mrf.mxu0
  %v794 = vadd.f32 0.0, %v793
  %v795 = vpop.f32.mrf.mxu0
  %796 = vdwg.mxu0
  %v797 = vlaneseq
  %v798 = vshrl.u32 %v797, 7
  %v799 = vsub.s32 0, %v798
  %v800 = vrot.slane %v794, %v799
  %v801 = vadd.f32 %v720, %v800
  %v802 = vadd.f32 %v721, %v800
  %v803 = vld [vmem:[%s7] sm:$0x1]
  %v805 = vlaneseq
  %v806 = vshrl.u32 %v805, 7
  %v807 = vsub.s32 0, %v806
  %v808 = vrot.slane %v803, %v807
  %v810 = vadd.f32 %v801, %v808
  %v811 = vadd.f32 %v802, %v808
  %v812 = vmax.f32 %v810, 0.0
  %v813 = vmax.f32 %v811, 0.0
  %v815 = vsel %vm77, %v813, 0
  %817 = vmatprep.subr.mxu0 0.0
  %818 = vmatpush1.msra.mxu0 0.0
  %819 = vmatprep.subr.mxu0 0.0
  %820 = vmatpush1.msra.mxu0 0.0
  %821 = vmatprep.subr.mxu0 0.0
  %822 = vmatpush1.msra.mxu0 0.0
  %823 = vmatprep.subr.mxu0 0.0
  %824 = vmatpush1.msra.mxu0 0.0
  %825 = vmatprep.subr.mxu0 0.0
  %826 = vmatpush1.msra.mxu0 0.0
  %827 = vmatprep.subr.mxu0 0.0
  %828 = vmatpush1.msra.mxu0 0.0
  %829 = vmatprep.subr.mxu0 0.0
  %830 = vmatpush1.msra.mxu0 0.0
  %831 = vmatprep.subr.mxu0 0.0
  %832 = vmatpush1.msra.mxu0 0.0
  %833 = vmatprep.subr.mxu0 0.0
  %834 = vmatpush1.msra.mxu0 0.0
  %835 = vmatprep.subr.mxu0 0.0
  %836 = vmatpush1.msra.mxu0 0.0
  %837 = vmatprep.subr.mxu0 0.0
  %838 = vmatpush1.msra.mxu0 0.0
  %839 = vmatprep.subr.mxu0 0.0
  %840 = vmatpush1.msra.mxu0 0.0
  %841 = vmatprep.subr.mxu0 0.0
  %842 = vmatpush1.msra.mxu0 0.0
  %843 = vmatprep.subr.mxu0 0.0
  %844 = vmatpush1.msra.mxu0 0.0
  %845 = vmatprep.subr.mxu0 0.0
  %846 = vmatpush1.msra.mxu0 %v815
  %847 = vmatprep.subr.mxu0 0.0
  %848 = vmatpush1.msra.mxu0 %v812
  %849 = vmatprep.subr.mxu0 0.0
  %850 = vmatpush2.msra.mxu0 0.0
  %851 = vmatprep.subr.mxu0 0.0
  %852 = vmatpush2.msra.mxu0 0.0
  %853 = vmatprep.subr.mxu0 0.0
  %854 = vmatpush2.msra.mxu0 0.0
  %855 = vmatprep.subr.mxu0 0.0
  %856 = vmatpush2.msra.mxu0 0.0
  %857 = vmatprep.subr.mxu0 0.0
  %858 = vmatpush2.msra.mxu0 0.0
  %859 = vmatprep.subr.mxu0 0.0
  %860 = vmatpush2.msra.mxu0 0.0
  %861 = vmatprep.subr.mxu0 0.0
  %862 = vmatpush2.msra.mxu0 0.0
  %863 = vmatprep.subr.mxu0 0.0
  %864 = vmatpush2.msra.mxu0 0.0
  %865 = vmatprep.subr.mxu0 0.0
  %866 = vmatpush2.msra.mxu0 0.0
  %867 = vmatprep.subr.mxu0 0.0
  %868 = vmatpush2.msra.mxu0 0.0
  %869 = vmatprep.subr.mxu0 0.0
  %870 = vmatpush2.msra.mxu0 0.0
  %871 = vmatprep.subr.mxu0 0.0
  %872 = vmatpush2.msra.mxu0 0.0
  %873 = vmatprep.subr.mxu0 0.0
  %874 = vmatpush2.msra.mxu0 0.0
  %875 = vmatprep.subr.mxu0 0.0
  %876 = vmatpush2.msra.mxu0 0.0
  %877 = vmatprep.subr.mxu0 0.0
  %878 = vmatpush2.msra.mxu0 0.0
  %879 = vmatprep.subr.mxu0 0.0
  %880 = vmatpush2.msra.mxu0 0.0
  %881 = vmatprep.mubr.f32.mxu0 0.0
  %882 = vmatmul.mubr.f32.gmra.mxu0 %v160
  %v883 = vpop.f32.mrf.mxu0
  %v884 = vadd.f32 0.0, %v883
  %v885 = vpop.f32.mrf.mxu0
  %886 = vdwg.mxu0
  %887 = vmatprep.subr.mxu0 0.0
  %888 = vmatpush1.msra.mxu0 0.0
  %889 = vmatprep.subr.mxu0 0.0
  %890 = vmatpush1.msra.mxu0 0.0
  %891 = vmatprep.subr.mxu0 0.0
  %892 = vmatpush1.msra.mxu0 0.0
  %893 = vmatprep.subr.mxu0 0.0
  %894 = vmatpush1.msra.mxu0 0.0
  %895 = vmatprep.subr.mxu0 0.0
  %896 = vmatpush1.msra.mxu0 0.0
  %897 = vmatprep.subr.mxu0 0.0
  %898 = vmatpush1.msra.mxu0 0.0
  %899 = vmatprep.subr.mxu0 0.0
  %900 = vmatpush1.msra.mxu0 0.0
  %901 = vmatprep.subr.mxu0 0.0
  %902 = vmatpush1.msra.mxu0 0.0
  %903 = vmatprep.subr.mxu0 0.0
  %904 = vmatpush1.msra.mxu0 0.0
  %905 = vmatprep.subr.mxu0 0.0
  %906 = vmatpush1.msra.mxu0 0.0
  %907 = vmatprep.subr.mxu0 0.0
  %908 = vmatpush1.msra.mxu0 0.0
  %909 = vmatprep.subr.mxu0 0.0
  %910 = vmatpush1.msra.mxu0 0.0
  %911 = vmatprep.subr.mxu0 0.0
  %912 = vmatpush1.msra.mxu0 0.0
  %913 = vmatprep.subr.mxu0 0.0
  %914 = vmatpush1.msra.mxu0 0.0
  %915 = vmatprep.subr.mxu0 0.0
  %916 = vmatpush1.msra.mxu0 0.0
  %917 = vmatprep.subr.mxu0 0.0
  %918 = vmatpush1.msra.mxu0 %v884
  %919 = vmatprep.subr.mxu0 0.0
  %920 = vmatpush2.msra.mxu0 0.0
  %921 = vmatprep.subr.mxu0 0.0
  %922 = vmatpush2.msra.mxu0 0.0
  %923 = vmatprep.subr.mxu0 0.0
  %924 = vmatpush2.msra.mxu0 0.0
  %925 = vmatprep.subr.mxu0 0.0
  %926 = vmatpush2.msra.mxu0 0.0
  %927 = vmatprep.subr.mxu0 0.0
  %928 = vmatpush2.msra.mxu0 0.0
  %929 = vmatprep.subr.mxu0 0.0
  %930 = vmatpush2.msra.mxu0 0.0
  %931 = vmatprep.subr.mxu0 0.0
  %932 = vmatpush2.msra.mxu0 0.0
  %933 = vmatprep.subr.mxu0 0.0
  %934 = vmatpush2.msra.mxu0 0.0
  %935 = vmatprep.subr.mxu0 0.0
  %936 = vmatpush2.msra.mxu0 0.0
  %937 = vmatprep.subr.mxu0 0.0
  %938 = vmatpush2.msra.mxu0 0.0
  %939 = vmatprep.subr.mxu0 0.0
  %940 = vmatpush2.msra.mxu0 0.0
  %941 = vmatprep.subr.mxu0 0.0
  %942 = vmatpush2.msra.mxu0 0.0
  %943 = vmatprep.subr.mxu0 0.0
  %944 = vmatpush2.msra.mxu0 0.0
  %945 = vmatprep.subr.mxu0 0.0
  %946 = vmatpush2.msra.mxu0 0.0
  %947 = vmatprep.subr.mxu0 0.0
  %948 = vmatpush2.msra.mxu0 0.0
  %949 = vmatprep.subr.mxu0 0.0
  %950 = vmatpush2.msra.mxu0 0.0
  %951 = vmatprep.mubr.f32.mxu0 0.0
  %952 = vmatmul.mubr.f32.gmra.mxu0 %v237
  %v953 = vpop.f32.mrf.mxu0
  %v954 = vadd.f32 0.0, %v953
  %v955 = vpop.f32.mrf.mxu0
  %956 = vmatprep.mubr.f32.mxu0 0.0
  %957 = vmatmul.mubr.f32.gmra.mxu0 %v240
  %v958 = vpop.f32.mrf.mxu0
  %v959 = vadd.f32 0.0, %v958
  %v960 = vpop.f32.mrf.mxu0
  %961 = vdwg.mxu0
  %962 = vmatprep.subr.mxu0 0.0
  %963 = vmatpush1.msra.mxu0 0.0
  %964 = vmatprep.subr.mxu0 0.0
  %965 = vmatpush1.msra.mxu0 0.0
  %966 = vmatprep.subr.mxu0 0.0
  %967 = vmatpush1.msra.mxu0 0.0
  %968 = vmatprep.subr.mxu0 0.0
  %969 = vmatpush1.msra.mxu0 0.0
  %970 = vmatprep.subr.mxu0 0.0
  %971 = vmatpush1.msra.mxu0 0.0
  %972 = vmatprep.subr.mxu0 0.0
  %973 = vmatpush1.msra.mxu0 0.0
  %974 = vmatprep.subr.mxu0 0.0
  %975 = vmatpush1.msra.mxu0 0.0
  %976 = vmatprep.subr.mxu0 0.0
  %977 = vmatpush1.msra.mxu0 0.0
  %978 = vmatprep.subr.mxu0 0.0
  %979 = vmatpush1.msra.mxu0 0.0
  %980 = vmatprep.subr.mxu0 0.0
  %981 = vmatpush1.msra.mxu0 0.0
  %982 = vmatprep.subr.mxu0 0.0
  %983 = vmatpush1.msra.mxu0 0.0
  %984 = vmatprep.subr.mxu0 0.0
  %985 = vmatpush1.msra.mxu0 0.0
  %986 = vmatprep.subr.mxu0 0.0
  %987 = vmatpush1.msra.mxu0 0.0
  %988 = vmatprep.subr.mxu0 0.0
  %989 = vmatpush1.msra.mxu0 0.0
  %990 = vmatprep.subr.mxu0 0.0
  %991 = vmatpush1.msra.mxu0 0.0
  %992 = vmatprep.subr.mxu0 0.0
  %993 = vmatpush1.msra.mxu0 %v884
  %994 = vmatprep.subr.mxu0 0.0
  %995 = vmatpush2.msra.mxu0 0.0
  %996 = vmatprep.subr.mxu0 0.0
  %997 = vmatpush2.msra.mxu0 0.0
  %998 = vmatprep.subr.mxu0 0.0
  %999 = vmatpush2.msra.mxu0 0.0
  %1000 = vmatprep.subr.mxu0 0.0
  %1001 = vmatpush2.msra.mxu0 0.0
  %1002 = vmatprep.subr.mxu0 0.0
  %1003 = vmatpush2.msra.mxu0 0.0
  %1004 = vmatprep.subr.mxu0 0.0
  %1005 = vmatpush2.msra.mxu0 0.0
  %1006 = vmatprep.subr.mxu0 0.0
  %1007 = vmatpush2.msra.mxu0 0.0
  %1008 = vmatprep.subr.mxu0 0.0
  %1009 = vmatpush2.msra.mxu0 0.0
  %1010 = vmatprep.subr.mxu0 0.0
  %1011 = vmatpush2.msra.mxu0 0.0
  %1012 = vmatprep.subr.mxu0 0.0
  %1013 = vmatpush2.msra.mxu0 0.0
  %1014 = vmatprep.subr.mxu0 0.0
  %1015 = vmatpush2.msra.mxu0 0.0
  %1016 = vmatprep.subr.mxu0 0.0
  %1017 = vmatpush2.msra.mxu0 0.0
  %1018 = vmatprep.subr.mxu0 0.0
  %1019 = vmatpush2.msra.mxu0 0.0
  %1020 = vmatprep.subr.mxu0 0.0
  %1021 = vmatpush2.msra.mxu0 0.0
  %1022 = vmatprep.subr.mxu0 0.0
  %1023 = vmatpush2.msra.mxu0 0.0
  %1024 = vmatprep.subr.mxu0 0.0
  %1025 = vmatpush2.msra.mxu0 0.0
  %1026 = vmatprep.mubr.f32.mxu0 0.0
  %1027 = vmatmul.mubr.f32.gmra.mxu0 %v318
  %v1028 = vpop.f32.mrf.mxu0
  %v1029 = vadd.f32 0.0, %v1028
  %v1030 = vpop.f32.mrf.mxu0
  %1031 = vmatprep.mubr.f32.mxu0 0.0
  %1032 = vmatmul.mubr.f32.gmra.mxu0 %v321
  %v1033 = vpop.f32.mrf.mxu0
  %v1034 = vadd.f32 0.0, %v1033
  %v1035 = vpop.f32.mrf.mxu0
  %1036 = vdwg.mxu0
  %1037 = vmatprep.subr.mxu0 0.0
  %1038 = vmatpush1.msra.mxu0 0.0
  %1039 = vmatprep.subr.mxu0 0.0
  %1040 = vmatpush1.msra.mxu0 0.0
  %1041 = vmatprep.subr.mxu0 0.0
  %1042 = vmatpush1.msra.mxu0 0.0
  %1043 = vmatprep.subr.mxu0 0.0
  %1044 = vmatpush1.msra.mxu0 0.0
  %1045 = vmatprep.subr.mxu0 0.0
  %1046 = vmatpush1.msra.mxu0 0.0
  %1047 = vmatprep.subr.mxu0 0.0
  %1048 = vmatpush1.msra.mxu0 0.0
  %1049 = vmatprep.subr.mxu0 0.0
  %1050 = vmatpush1.msra.mxu0 0.0
  %1051 = vmatprep.subr.mxu0 0.0
  %1052 = vmatpush1.msra.mxu0 0.0
  %1053 = vmatprep.subr.mxu0 0.0
  %1054 = vmatpush1.msra.mxu0 0.0
  %1055 = vmatprep.subr.mxu0 0.0
  %1056 = vmatpush1.msra.mxu0 0.0
  %1057 = vmatprep.subr.mxu0 0.0
  %1058 = vmatpush1.msra.mxu0 0.0
  %1059 = vmatprep.subr.mxu0 0.0
  %1060 = vmatpush1.msra.mxu0 0.0
  %1061 = vmatprep.subr.mxu0 0.0
  %1062 = vmatpush1.msra.mxu0 0.0
  %1063 = vmatprep.subr.mxu0 0.0
  %1064 = vmatpush1.msra.mxu0 0.0
  %1065 = vmatprep.subr.mxu0 0.0
  %1066 = vmatpush1.msra.mxu0 %v815
  %1067 = vmatprep.subr.mxu0 0.0
  %1068 = vmatpush1.msra.mxu0 %v812
  %1069 = vmatprep.subr.mxu0 0.0
  %1070 = vmatpush2.msra.mxu0 0.0
  %1071 = vmatprep.subr.mxu0 0.0
  %1072 = vmatpush2.msra.mxu0 0.0
  %1073 = vmatprep.subr.mxu0 0.0
  %1074 = vmatpush2.msra.mxu0 0.0
  %1075 = vmatprep.subr.mxu0 0.0
  %1076 = vmatpush2.msra.mxu0 0.0
  %1077 = vmatprep.subr.mxu0 0.0
  %1078 = vmatpush2.msra.mxu0 0.0
  %1079 = vmatprep.subr.mxu0 0.0
  %1080 = vmatpush2.msra.mxu0 0.0
  %1081 = vmatprep.subr.mxu0 0.0
  %1082 = vmatpush2.msra.mxu0 0.0
  %1083 = vmatprep.subr.mxu0 0.0
  %1084 = vmatpush2.msra.mxu0 0.0
  %1085 = vmatprep.subr.mxu0 0.0
  %1086 = vmatpush2.msra.mxu0 0.0
  %1087 = vmatprep.subr.mxu0 0.0
  %1088 = vmatpush2.msra.mxu0 0.0
  %1089 = vmatprep.subr.mxu0 0.0
  %1090 = vmatpush2.msra.mxu0 0.0
  %1091 = vmatprep.subr.mxu0 0.0
  %1092 = vmatpush2.msra.mxu0 0.0
  %1093 = vmatprep.subr.mxu0 0.0
  %1094 = vmatpush2.msra.mxu0 0.0
  %1095 = vmatprep.subr.mxu0 0.0
  %1096 = vmatpush2.msra.mxu0 0.0
  %1097 = vmatprep.subr.mxu0 0.0
  %1098 = vmatpush2.msra.mxu0 0.0
  %1099 = vmatprep.subr.mxu0 0.0
  %1100 = vmatpush2.msra.mxu0 0.0
  %1101 = vmatprep.mubr.f32.mxu0 0.0
  %1102 = vmatmul.mubr.f32.gmra.mxu0 %v399
  %v1103 = vpop.f32.mrf.mxu0
  %v1104 = vadd.f32 0.0, %v1103
  %v1105 = vpop.f32.mrf.mxu0
  %1106 = vdwg.mxu0
  %v1107 = vld [vmem:[%s8] sm:$0xff]
  %v1108 = vld [vmem:[%s8 + $0x8] sm:$0xff]
  %v1109 = vld [vmem:[%s8 + $0x10] sm:$0xff]
  %v1110 = vld [vmem:[%s8 + $0x18] sm:$0xff]
  %v1111 = vld [vmem:[%s8 + $0x20] sm:$0xff]
  %v1112 = vld [vmem:[%s8 + $0x28] sm:$0xff]
  %v1113 = vld [vmem:[%s8 + $0x30] sm:$0xff]
  %v1114 = vld [vmem:[%s8 + $0x38] sm:$0xff]
  %vm1115 = vcmask 261120
  %v1117 = vsel %vm1115, %v954, 0
  %v1120 = vsel %vm1115, %v959, 0
  %1122 = vmatprep.subr.mxu0 0.0
  %1123 = vmatpush1.msra.mxu0 0.0
  %1124 = vmatprep.subr.mxu0 0.0
  %1125 = vmatpush1.msra.mxu0 0.0
  %1126 = vmatprep.subr.mxu0 0.0
  %1127 = vmatpush1.msra.mxu0 0.0
  %1128 = vmatprep.subr.mxu0 0.0
  %1129 = vmatpush1.msra.mxu0 0.0
  %1130 = vmatprep.subr.mxu0 0.0
  %1131 = vmatpush1.msra.mxu0 0.0
  %1132 = vmatprep.subr.mxu0 0.0
  %1133 = vmatpush1.msra.mxu0 0.0
  %1134 = vmatprep.subr.mxu0 0.0
  %1135 = vmatpush1.msra.mxu0 0.0
  %1136 = vmatprep.subr.mxu0 0.0
  %1137 = vmatpush1.msra.mxu0 0.0
  %1138 = vmatprep.subr.mxu0 0.0
  %1139 = vmatpush1.msra.mxu0 0.0
  %1140 = vmatprep.subr.mxu0 0.0
  %1141 = vmatpush1.msra.mxu0 0.0
  %1142 = vmatprep.subr.mxu0 0.0
  %1143 = vmatpush1.msra.mxu0 0.0
  %1144 = vmatprep.subr.mxu0 0.0
  %1145 = vmatpush1.msra.mxu0 0.0
  %1146 = vmatprep.subr.mxu0 0.0
  %1147 = vmatpush1.msra.mxu0 %v1114
  %1148 = vmatprep.subr.mxu0 0.0
  %1149 = vmatpush1.msra.mxu0 %v1113
  %1150 = vmatprep.subr.mxu0 0.0
  %1151 = vmatpush1.msra.mxu0 %v1112
  %1152 = vmatprep.subr.mxu0 0.0
  %1153 = vmatpush1.msra.mxu0 %v1111
  %1154 = vmatprep.subr.mxu0 0.0
  %1155 = vmatpush2.msra.mxu0 0.0
  %1156 = vmatprep.subr.mxu0 0.0
  %1157 = vmatpush2.msra.mxu0 0.0
  %1158 = vmatprep.subr.mxu0 0.0
  %1159 = vmatpush2.msra.mxu0 0.0
  %1160 = vmatprep.subr.mxu0 0.0
  %1161 = vmatpush2.msra.mxu0 0.0
  %1162 = vmatprep.subr.mxu0 0.0
  %1163 = vmatpush2.msra.mxu0 0.0
  %1164 = vmatprep.subr.mxu0 0.0
  %1165 = vmatpush2.msra.mxu0 0.0
  %1166 = vmatprep.subr.mxu0 0.0
  %1167 = vmatpush2.msra.mxu0 0.0
  %1168 = vmatprep.subr.mxu0 0.0
  %1169 = vmatpush2.msra.mxu0 0.0
  %1170 = vmatprep.subr.mxu0 0.0
  %1171 = vmatpush2.msra.mxu0 0.0
  %1172 = vmatprep.subr.mxu0 0.0
  %1173 = vmatpush2.msra.mxu0 0.0
  %1174 = vmatprep.subr.mxu0 0.0
  %1175 = vmatpush2.msra.mxu0 0.0
  %1176 = vmatprep.subr.mxu0 0.0
  %1177 = vmatpush2.msra.mxu0 0.0
  %1178 = vmatprep.subr.mxu0 0.0
  %1179 = vmatpush2.msra.mxu0 0.0
  %1180 = vmatprep.subr.mxu0 0.0
  %1181 = vmatpush2.msra.mxu0 0.0
  %1182 = vmatprep.subr.mxu0 0.0
  %1183 = vmatpush2.msra.mxu0 0.0
  %1184 = vmatprep.subr.mxu0 0.0
  %1185 = vmatpush2.msra.mxu0 0.0
  %1186 = vmatprep.mubr.f32.mxu0 0.0
  %1187 = vmatmul.mubr.f32.gmra.mxu0 %v1117
  %v1188 = vpop.f32.mrf.mxu0
  %v1189 = vadd.f32 0.0, %v1188
  %v1190 = vpop.f32.mrf.mxu0
  %1191 = vmatprep.mubr.f32.mxu0 0.0
  %1192 = vmatmul.mubr.f32.gmra.mxu0 %v1120
  %v1193 = vpop.f32.mrf.mxu0
  %v1194 = vadd.f32 0.0, %v1193
  %v1195 = vpop.f32.mrf.mxu0
  %1196 = vdwg.mxu0
  %v1198 = vsel %vm1115, %v812, 0
  %v1200 = vsel %vm1115, %v813, 0
  %1202 = vmatprep.subr.mxu0 0.0
  %1203 = vmatpush1.msra.mxu0 0.0
  %1204 = vmatprep.subr.mxu0 0.0
  %1205 = vmatpush1.msra.mxu0 0.0
  %1206 = vmatprep.subr.mxu0 0.0
  %1207 = vmatpush1.msra.mxu0 0.0
  %1208 = vmatprep.subr.mxu0 0.0
  %1209 = vmatpush1.msra.mxu0 0.0
  %1210 = vmatprep.subr.mxu0 0.0
  %1211 = vmatpush1.msra.mxu0 0.0
  %1212 = vmatprep.subr.mxu0 0.0
  %1213 = vmatpush1.msra.mxu0 0.0
  %1214 = vmatprep.subr.mxu0 0.0
  %1215 = vmatpush1.msra.mxu0 0.0
  %1216 = vmatprep.subr.mxu0 0.0
  %1217 = vmatpush1.msra.mxu0 0.0
  %1218 = vmatprep.subr.mxu0 0.0
  %1219 = vmatpush1.msra.mxu0 0.0
  %1220 = vmatprep.subr.mxu0 0.0
  %1221 = vmatpush1.msra.mxu0 0.0
  %1222 = vmatprep.subr.mxu0 0.0
  %1223 = vmatpush1.msra.mxu0 0.0
  %1224 = vmatprep.subr.mxu0 0.0
  %1225 = vmatpush1.msra.mxu0 0.0
  %1226 = vmatprep.subr.mxu0 0.0
  %1227 = vmatpush1.msra.mxu0 %v1110
  %1228 = vmatprep.subr.mxu0 0.0
  %1229 = vmatpush1.msra.mxu0 %v1109
  %1230 = vmatprep.subr.mxu0 0.0
  %1231 = vmatpush1.msra.mxu0 %v1108
  %1232 = vmatprep.subr.mxu0 0.0
  %1233 = vmatpush1.msra.mxu0 %v1107
  %1234 = vmatprep.subr.mxu0 0.0
  %1235 = vmatpush2.msra.mxu0 0.0
  %1236 = vmatprep.subr.mxu0 0.0
  %1237 = vmatpush2.msra.mxu0 0.0
  %1238 = vmatprep.subr.mxu0 0.0
  %1239 = vmatpush2.msra.mxu0 0.0
  %1240 = vmatprep.subr.mxu0 0.0
  %1241 = vmatpush2.msra.mxu0 0.0
  %1242 = vmatprep.subr.mxu0 0.0
  %1243 = vmatpush2.msra.mxu0 0.0
  %1244 = vmatprep.subr.mxu0 0.0
  %1245 = vmatpush2.msra.mxu0 0.0
  %1246 = vmatprep.subr.mxu0 0.0
  %1247 = vmatpush2.msra.mxu0 0.0
  %1248 = vmatprep.subr.mxu0 0.0
  %1249 = vmatpush2.msra.mxu0 0.0
  %1250 = vmatprep.subr.mxu0 0.0
  %1251 = vmatpush2.msra.mxu0 0.0
  %1252 = vmatprep.subr.mxu0 0.0
  %1253 = vmatpush2.msra.mxu0 0.0
  %1254 = vmatprep.subr.mxu0 0.0
  %1255 = vmatpush2.msra.mxu0 0.0
  %1256 = vmatprep.subr.mxu0 0.0
  %1257 = vmatpush2.msra.mxu0 0.0
  %1258 = vmatprep.subr.mxu0 0.0
  %1259 = vmatpush2.msra.mxu0 0.0
  %1260 = vmatprep.subr.mxu0 0.0
  %1261 = vmatpush2.msra.mxu0 0.0
  %1262 = vmatprep.subr.mxu0 0.0
  %1263 = vmatpush2.msra.mxu0 0.0
  %1264 = vmatprep.subr.mxu0 0.0
  %1265 = vmatpush2.msra.mxu0 0.0
  %1266 = vmatprep.mubr.f32.mxu0 0.0
  %1267 = vmatmul.mubr.f32.gmra.mxu0 %v1198
  %v1268 = vpop.f32.mrf.mxu0
  %v1269 = vadd.f32 %v1189, %v1268
  %v1270 = vpop.f32.mrf.mxu0
  %1271 = vmatprep.mubr.f32.mxu0 0.0
  %1272 = vmatmul.mubr.f32.gmra.mxu0 %v1200
  %v1273 = vpop.f32.mrf.mxu0
  %v1274 = vadd.f32 %v1194, %v1273
  %v1275 = vpop.f32.mrf.mxu0
  %1276 = vdwg.mxu0
  %v1277 = vld [vmem:[%s8 + $0x40] sm:$0xff]
  %v1278 = vld [vmem:[%s8 + $0x48] sm:$0xff]
  %v1279 = vld [vmem:[%s8 + $0x50] sm:$0xff]
  %v1280 = vld [vmem:[%s8 + $0x58] sm:$0xff]
  %v1282 = vsel %vm1115, %v1029, 0
  %v1285 = vsel %vm1115, %v1034, 0
  %1287 = vmatprep.subr.mxu0 0.0
  %1288 = vmatpush1.msra.mxu0 0.0
  %1289 = vmatprep.subr.mxu0 0.0
  %1290 = vmatpush1.msra.mxu0 0.0
  %1291 = vmatprep.subr.mxu0 0.0
  %1292 = vmatpush1.msra.mxu0 0.0
  %1293 = vmatprep.subr.mxu0 0.0
  %1294 = vmatpush1.msra.mxu0 0.0
  %1295 = vmatprep.subr.mxu0 0.0
  %1296 = vmatpush1.msra.mxu0 0.0
  %1297 = vmatprep.subr.mxu0 0.0
  %1298 = vmatpush1.msra.mxu0 0.0
  %1299 = vmatprep.subr.mxu0 0.0
  %1300 = vmatpush1.msra.mxu0 0.0
  %1301 = vmatprep.subr.mxu0 0.0
  %1302 = vmatpush1.msra.mxu0 0.0
  %1303 = vmatprep.subr.mxu0 0.0
  %1304 = vmatpush1.msra.mxu0 0.0
  %1305 = vmatprep.subr.mxu0 0.0
  %1306 = vmatpush1.msra.mxu0 0.0
  %1307 = vmatprep.subr.mxu0 0.0
  %1308 = vmatpush1.msra.mxu0 0.0
  %1309 = vmatprep.subr.mxu0 0.0
  %1310 = vmatpush1.msra.mxu0 0.0
  %1311 = vmatprep.subr.mxu0 0.0
  %1312 = vmatpush1.msra.mxu0 %v1280
  %1313 = vmatprep.subr.mxu0 0.0
  %1314 = vmatpush1.msra.mxu0 %v1279
  %1315 = vmatprep.subr.mxu0 0.0
  %1316 = vmatpush1.msra.mxu0 %v1278
  %1317 = vmatprep.subr.mxu0 0.0
  %1318 = vmatpush1.msra.mxu0 %v1277
  %1319 = vmatprep.subr.mxu0 0.0
  %1320 = vmatpush2.msra.mxu0 0.0
  %1321 = vmatprep.subr.mxu0 0.0
  %1322 = vmatpush2.msra.mxu0 0.0
  %1323 = vmatprep.subr.mxu0 0.0
  %1324 = vmatpush2.msra.mxu0 0.0
  %1325 = vmatprep.subr.mxu0 0.0
  %1326 = vmatpush2.msra.mxu0 0.0
  %1327 = vmatprep.subr.mxu0 0.0
  %1328 = vmatpush2.msra.mxu0 0.0
  %1329 = vmatprep.subr.mxu0 0.0
  %1330 = vmatpush2.msra.mxu0 0.0
  %1331 = vmatprep.subr.mxu0 0.0
  %1332 = vmatpush2.msra.mxu0 0.0
  %1333 = vmatprep.subr.mxu0 0.0
  %1334 = vmatpush2.msra.mxu0 0.0
  %1335 = vmatprep.subr.mxu0 0.0
  %1336 = vmatpush2.msra.mxu0 0.0
  %1337 = vmatprep.subr.mxu0 0.0
  %1338 = vmatpush2.msra.mxu0 0.0
  %1339 = vmatprep.subr.mxu0 0.0
  %1340 = vmatpush2.msra.mxu0 0.0
  %1341 = vmatprep.subr.mxu0 0.0
  %1342 = vmatpush2.msra.mxu0 0.0
  %1343 = vmatprep.subr.mxu0 0.0
  %1344 = vmatpush2.msra.mxu0 0.0
  %1345 = vmatprep.subr.mxu0 0.0
  %1346 = vmatpush2.msra.mxu0 0.0
  %1347 = vmatprep.subr.mxu0 0.0
  %1348 = vmatpush2.msra.mxu0 0.0
  %1349 = vmatprep.subr.mxu0 0.0
  %1350 = vmatpush2.msra.mxu0 0.0
  %1351 = vmatprep.mubr.f32.mxu0 0.0
  %1352 = vmatmul.mubr.f32.gmra.mxu0 %v1282
  %v1353 = vpop.f32.mrf.mxu0
  %v1354 = vadd.f32 0.0, %v1353
  %v1355 = vpop.f32.mrf.mxu0
  %1356 = vmatprep.mubr.f32.mxu0 0.0
  %1357 = vmatmul.mubr.f32.gmra.mxu0 %v1285
  %v1358 = vpop.f32.mrf.mxu0
  %v1359 = vadd.f32 0.0, %v1358
  %v1360 = vpop.f32.mrf.mxu0
  %1361 = vdwg.mxu0
  %v1362 = vadd.f32 %v1269, %v1354
  %v1363 = vadd.f32 %v1274, %v1359
  %v1364 = vld [vmem:[%s8 + $0x60] sm:$0xff]
  %v1365 = vld [vmem:[%s8 + $0x68] sm:$0xff]
  %v1366 = vld [vmem:[%s8 + $0x70] sm:$0xff]
  %v1367 = vld [vmem:[%s8 + $0x78] sm:$0xff]
  %v1369 = vsel %vm1115, %v1104, 0
  %1371 = vmatprep.subr.mxu0 0.0
  %1372 = vmatpush1.msra.mxu0 0.0
  %1373 = vmatprep.subr.mxu0 0.0
  %1374 = vmatpush1.msra.mxu0 0.0
  %1375 = vmatprep.subr.mxu0 0.0
  %1376 = vmatpush1.msra.mxu0 0.0
  %1377 = vmatprep.subr.mxu0 0.0
  %1378 = vmatpush1.msra.mxu0 0.0
  %1379 = vmatprep.subr.mxu0 0.0
  %1380 = vmatpush1.msra.mxu0 0.0
  %1381 = vmatprep.subr.mxu0 0.0
  %1382 = vmatpush1.msra.mxu0 0.0
  %1383 = vmatprep.subr.mxu0 0.0
  %1384 = vmatpush1.msra.mxu0 0.0
  %1385 = vmatprep.subr.mxu0 0.0
  %1386 = vmatpush1.msra.mxu0 0.0
  %1387 = vmatprep.subr.mxu0 0.0
  %1388 = vmatpush1.msra.mxu0 0.0
  %1389 = vmatprep.subr.mxu0 0.0
  %1390 = vmatpush1.msra.mxu0 0.0
  %1391 = vmatprep.subr.mxu0 0.0
  %1392 = vmatpush1.msra.mxu0 0.0
  %1393 = vmatprep.subr.mxu0 0.0
  %1394 = vmatpush1.msra.mxu0 0.0
  %1395 = vmatprep.subr.mxu0 0.0
  %1396 = vmatpush1.msra.mxu0 %v1367
  %1397 = vmatprep.subr.mxu0 0.0
  %1398 = vmatpush1.msra.mxu0 %v1366
  %1399 = vmatprep.subr.mxu0 0.0
  %1400 = vmatpush1.msra.mxu0 %v1365
  %1401 = vmatprep.subr.mxu0 0.0
  %1402 = vmatpush1.msra.mxu0 %v1364
  %1403 = vmatprep.subr.mxu0 0.0
  %1404 = vmatpush2.msra.mxu0 0.0
  %1405 = vmatprep.subr.mxu0 0.0
  %1406 = vmatpush2.msra.mxu0 0.0
  %1407 = vmatprep.subr.mxu0 0.0
  %1408 = vmatpush2.msra.mxu0 0.0
  %1409 = vmatprep.subr.mxu0 0.0
  %1410 = vmatpush2.msra.mxu0 0.0
  %1411 = vmatprep.subr.mxu0 0.0
  %1412 = vmatpush2.msra.mxu0 0.0
  %1413 = vmatprep.subr.mxu0 0.0
  %1414 = vmatpush2.msra.mxu0 0.0
  %1415 = vmatprep.subr.mxu0 0.0
  %1416 = vmatpush2.msra.mxu0 0.0
  %1417 = vmatprep.subr.mxu0 0.0
  %1418 = vmatpush2.msra.mxu0 0.0
  %1419 = vmatprep.subr.mxu0 0.0
  %1420 = vmatpush2.msra.mxu0 0.0
  %1421 = vmatprep.subr.mxu0 0.0
  %1422 = vmatpush2.msra.mxu0 0.0
  %1423 = vmatprep.subr.mxu0 0.0
  %1424 = vmatpush2.msra.mxu0 0.0
  %1425 = vmatprep.subr.mxu0 0.0
  %1426 = vmatpush2.msra.mxu0 0.0
  %1427 = vmatprep.subr.mxu0 0.0
  %1428 = vmatpush2.msra.mxu0 0.0
  %1429 = vmatprep.subr.mxu0 0.0
  %1430 = vmatpush2.msra.mxu0 0.0
  %1431 = vmatprep.subr.mxu0 0.0
  %1432 = vmatpush2.msra.mxu0 0.0
  %1433 = vmatprep.subr.mxu0 0.0
  %1434 = vmatpush2.msra.mxu0 0.0
  %1435 = vmatprep.mubr.f32.mxu0 0.0
  %1436 = vmatmul.mubr.f32.gmra.mxu0 %v1369
  %v1437 = vpop.f32.mrf.mxu0
  %v1438 = vadd.f32 0.0, %v1437
  %v1439 = vpop.f32.mrf.mxu0
  %1440 = vdwg.mxu0
  %v1441 = vlaneseq
  %v1442 = vshrl.u32 %v1441, 7
  %v1443 = vsub.s32 0, %v1442
  %v1444 = vrot.slane %v1438, %v1443
  %v1445 = vadd.f32 %v1362, %v1444
  %v1446 = vadd.f32 %v1363, %v1444
  %v1447 = vld [vmem:[%s9] sm:$0x1]
  %v1449 = vlaneseq
  %v1450 = vshrl.u32 %v1449, 7
  %v1451 = vsub.s32 0, %v1450
  %v1452 = vrot.slane %v1447, %v1451
  %v1454 = vadd.f32 %v1445, %v1452
  %v1455 = vadd.f32 %v1446, %v1452
  %v1456 = vmax.f32 %v1454, 0.0
  %v1457 = vmax.f32 %v1455, 0.0
  %v1459 = vsel %vm77, %v1457, 0
  %1461 = vmatprep.subr.mxu0 0.0
  %1462 = vmatpush1.msra.mxu0 0.0
  %1463 = vmatprep.subr.mxu0 0.0
  %1464 = vmatpush1.msra.mxu0 0.0
  %1465 = vmatprep.subr.mxu0 0.0
  %1466 = vmatpush1.msra.mxu0 0.0
  %1467 = vmatprep.subr.mxu0 0.0
  %1468 = vmatpush1.msra.mxu0 0.0
  %1469 = vmatprep.subr.mxu0 0.0
  %1470 = vmatpush1.msra.mxu0 0.0
  %1471 = vmatprep.subr.mxu0 0.0
  %1472 = vmatpush1.msra.mxu0 0.0
  %1473 = vmatprep.subr.mxu0 0.0
  %1474 = vmatpush1.msra.mxu0 0.0
  %1475 = vmatprep.subr.mxu0 0.0
  %1476 = vmatpush1.msra.mxu0 0.0
  %1477 = vmatprep.subr.mxu0 0.0
  %1478 = vmatpush1.msra.mxu0 0.0
  %1479 = vmatprep.subr.mxu0 0.0
  %1480 = vmatpush1.msra.mxu0 0.0
  %1481 = vmatprep.subr.mxu0 0.0
  %1482 = vmatpush1.msra.mxu0 0.0
  %1483 = vmatprep.subr.mxu0 0.0
  %1484 = vmatpush1.msra.mxu0 0.0
  %1485 = vmatprep.subr.mxu0 0.0
  %1486 = vmatpush1.msra.mxu0 0.0
  %1487 = vmatprep.subr.mxu0 0.0
  %1488 = vmatpush1.msra.mxu0 0.0
  %1489 = vmatprep.subr.mxu0 0.0
  %1490 = vmatpush1.msra.mxu0 %v1459
  %1491 = vmatprep.subr.mxu0 0.0
  %1492 = vmatpush1.msra.mxu0 %v1456
  %1493 = vmatprep.subr.mxu0 0.0
  %1494 = vmatpush2.msra.mxu0 0.0
  %1495 = vmatprep.subr.mxu0 0.0
  %1496 = vmatpush2.msra.mxu0 0.0
  %1497 = vmatprep.subr.mxu0 0.0
  %1498 = vmatpush2.msra.mxu0 0.0
  %1499 = vmatprep.subr.mxu0 0.0
  %1500 = vmatpush2.msra.mxu0 0.0
  %1501 = vmatprep.subr.mxu0 0.0
  %1502 = vmatpush2.msra.mxu0 0.0
  %1503 = vmatprep.subr.mxu0 0.0
  %1504 = vmatpush2.msra.mxu0 0.0
  %1505 = vmatprep.subr.mxu0 0.0
  %1506 = vmatpush2.msra.mxu0 0.0
  %1507 = vmatprep.subr.mxu0 0.0
  %1508 = vmatpush2.msra.mxu0 0.0
  %1509 = vmatprep.subr.mxu0 0.0
  %1510 = vmatpush2.msra.mxu0 0.0
  %1511 = vmatprep.subr.mxu0 0.0
  %1512 = vmatpush2.msra.mxu0 0.0
  %1513 = vmatprep.subr.mxu0 0.0
  %1514 = vmatpush2.msra.mxu0 0.0
  %1515 = vmatprep.subr.mxu0 0.0
  %1516 = vmatpush2.msra.mxu0 0.0
  %1517 = vmatprep.subr.mxu0 0.0
  %1518 = vmatpush2.msra.mxu0 0.0
  %1519 = vmatprep.subr.mxu0 0.0
  %1520 = vmatpush2.msra.mxu0 0.0
  %1521 = vmatprep.subr.mxu0 0.0
  %1522 = vmatpush2.msra.mxu0 0.0
  %1523 = vmatprep.subr.mxu0 0.0
  %1524 = vmatpush2.msra.mxu0 0.0
  %1525 = vmatprep.mubr.f32.mxu0 0.0
  %1526 = vmatmul.mubr.f32.gmra.mxu0 %v160
  %v1527 = vpop.f32.mrf.mxu0
  %v1528 = vadd.f32 0.0, %v1527
  %v1529 = vpop.f32.mrf.mxu0
  %1530 = vdwg.mxu0
  %1531 = vmatprep.subr.mxu0 0.0
  %1532 = vmatpush1.msra.mxu0 0.0
  %1533 = vmatprep.subr.mxu0 0.0
  %1534 = vmatpush1.msra.mxu0 0.0
  %1535 = vmatprep.subr.mxu0 0.0
  %1536 = vmatpush1.msra.mxu0 0.0
  %1537 = vmatprep.subr.mxu0 0.0
  %1538 = vmatpush1.msra.mxu0 0.0
  %1539 = vmatprep.subr.mxu0 0.0
  %1540 = vmatpush1.msra.mxu0 0.0
  %1541 = vmatprep.subr.mxu0 0.0
  %1542 = vmatpush1.msra.mxu0 0.0
  %1543 = vmatprep.subr.mxu0 0.0
  %1544 = vmatpush1.msra.mxu0 0.0
  %1545 = vmatprep.subr.mxu0 0.0
  %1546 = vmatpush1.msra.mxu0 0.0
  %1547 = vmatprep.subr.mxu0 0.0
  %1548 = vmatpush1.msra.mxu0 0.0
  %1549 = vmatprep.subr.mxu0 0.0
  %1550 = vmatpush1.msra.mxu0 0.0
  %1551 = vmatprep.subr.mxu0 0.0
  %1552 = vmatpush1.msra.mxu0 0.0
  %1553 = vmatprep.subr.mxu0 0.0
  %1554 = vmatpush1.msra.mxu0 0.0
  %1555 = vmatprep.subr.mxu0 0.0
  %1556 = vmatpush1.msra.mxu0 0.0
  %1557 = vmatprep.subr.mxu0 0.0
  %1558 = vmatpush1.msra.mxu0 0.0
  %1559 = vmatprep.subr.mxu0 0.0
  %1560 = vmatpush1.msra.mxu0 0.0
  %1561 = vmatprep.subr.mxu0 0.0
  %1562 = vmatpush1.msra.mxu0 %v1528
  %1563 = vmatprep.subr.mxu0 0.0
  %1564 = vmatpush2.msra.mxu0 0.0
  %1565 = vmatprep.subr.mxu0 0.0
  %1566 = vmatpush2.msra.mxu0 0.0
  %1567 = vmatprep.subr.mxu0 0.0
  %1568 = vmatpush2.msra.mxu0 0.0
  %1569 = vmatprep.subr.mxu0 0.0
  %1570 = vmatpush2.msra.mxu0 0.0
  %1571 = vmatprep.subr.mxu0 0.0
  %1572 = vmatpush2.msra.mxu0 0.0
  %1573 = vmatprep.subr.mxu0 0.0
  %1574 = vmatpush2.msra.mxu0 0.0
  %1575 = vmatprep.subr.mxu0 0.0
  %1576 = vmatpush2.msra.mxu0 0.0
  %1577 = vmatprep.subr.mxu0 0.0
  %1578 = vmatpush2.msra.mxu0 0.0
  %1579 = vmatprep.subr.mxu0 0.0
  %1580 = vmatpush2.msra.mxu0 0.0
  %1581 = vmatprep.subr.mxu0 0.0
  %1582 = vmatpush2.msra.mxu0 0.0
  %1583 = vmatprep.subr.mxu0 0.0
  %1584 = vmatpush2.msra.mxu0 0.0
  %1585 = vmatprep.subr.mxu0 0.0
  %1586 = vmatpush2.msra.mxu0 0.0
  %1587 = vmatprep.subr.mxu0 0.0
  %1588 = vmatpush2.msra.mxu0 0.0
  %1589 = vmatprep.subr.mxu0 0.0
  %1590 = vmatpush2.msra.mxu0 0.0
  %1591 = vmatprep.subr.mxu0 0.0
  %1592 = vmatpush2.msra.mxu0 0.0
  %1593 = vmatprep.subr.mxu0 0.0
  %1594 = vmatpush2.msra.mxu0 0.0
  %1595 = vmatprep.mubr.f32.mxu0 0.0
  %1596 = vmatmul.mubr.f32.gmra.mxu0 %v237
  %v1597 = vpop.f32.mrf.mxu0
  %v1598 = vadd.f32 0.0, %v1597
  %v1599 = vpop.f32.mrf.mxu0
  %1600 = vmatprep.mubr.f32.mxu0 0.0
  %1601 = vmatmul.mubr.f32.gmra.mxu0 %v240
  %v1602 = vpop.f32.mrf.mxu0
  %v1603 = vadd.f32 0.0, %v1602
  %v1604 = vpop.f32.mrf.mxu0
  %1605 = vdwg.mxu0
  %1606 = vmatprep.subr.mxu0 0.0
  %1607 = vmatpush1.msra.mxu0 0.0
  %1608 = vmatprep.subr.mxu0 0.0
  %1609 = vmatpush1.msra.mxu0 0.0
  %1610 = vmatprep.subr.mxu0 0.0
  %1611 = vmatpush1.msra.mxu0 0.0
  %1612 = vmatprep.subr.mxu0 0.0
  %1613 = vmatpush1.msra.mxu0 0.0
  %1614 = vmatprep.subr.mxu0 0.0
  %1615 = vmatpush1.msra.mxu0 0.0
  %1616 = vmatprep.subr.mxu0 0.0
  %1617 = vmatpush1.msra.mxu0 0.0
  %1618 = vmatprep.subr.mxu0 0.0
  %1619 = vmatpush1.msra.mxu0 0.0
  %1620 = vmatprep.subr.mxu0 0.0
  %1621 = vmatpush1.msra.mxu0 0.0
  %1622 = vmatprep.subr.mxu0 0.0
  %1623 = vmatpush1.msra.mxu0 0.0
  %1624 = vmatprep.subr.mxu0 0.0
  %1625 = vmatpush1.msra.mxu0 0.0
  %1626 = vmatprep.subr.mxu0 0.0
  %1627 = vmatpush1.msra.mxu0 0.0
  %1628 = vmatprep.subr.mxu0 0.0
  %1629 = vmatpush1.msra.mxu0 0.0
  %1630 = vmatprep.subr.mxu0 0.0
  %1631 = vmatpush1.msra.mxu0 0.0
  %1632 = vmatprep.subr.mxu0 0.0
  %1633 = vmatpush1.msra.mxu0 0.0
  %1634 = vmatprep.subr.mxu0 0.0
  %1635 = vmatpush1.msra.mxu0 0.0
  %1636 = vmatprep.subr.mxu0 0.0
  %1637 = vmatpush1.msra.mxu0 %v1528
  %1638 = vmatprep.subr.mxu0 0.0
  %1639 = vmatpush2.msra.mxu0 0.0
  %1640 = vmatprep.subr.mxu0 0.0
  %1641 = vmatpush2.msra.mxu0 0.0
  %1642 = vmatprep.subr.mxu0 0.0
  %1643 = vmatpush2.msra.mxu0 0.0
  %1644 = vmatprep.subr.mxu0 0.0
  %1645 = vmatpush2.msra.mxu0 0.0
  %1646 = vmatprep.subr.mxu0 0.0
  %1647 = vmatpush2.msra.mxu0 0.0
  %1648 = vmatprep.subr.mxu0 0.0
  %1649 = vmatpush2.msra.mxu0 0.0
  %1650 = vmatprep.subr.mxu0 0.0
  %1651 = vmatpush2.msra.mxu0 0.0
  %1652 = vmatprep.subr.mxu0 0.0
  %1653 = vmatpush2.msra.mxu0 0.0
  %1654 = vmatprep.subr.mxu0 0.0
  %1655 = vmatpush2.msra.mxu0 0.0
  %1656 = vmatprep.subr.mxu0 0.0
  %1657 = vmatpush2.msra.mxu0 0.0
  %1658 = vmatprep.subr.mxu0 0.0
  %1659 = vmatpush2.msra.mxu0 0.0
  %1660 = vmatprep.subr.mxu0 0.0
  %1661 = vmatpush2.msra.mxu0 0.0
  %1662 = vmatprep.subr.mxu0 0.0
  %1663 = vmatpush2.msra.mxu0 0.0
  %1664 = vmatprep.subr.mxu0 0.0
  %1665 = vmatpush2.msra.mxu0 0.0
  %1666 = vmatprep.subr.mxu0 0.0
  %1667 = vmatpush2.msra.mxu0 0.0
  %1668 = vmatprep.subr.mxu0 0.0
  %1669 = vmatpush2.msra.mxu0 0.0
  %1670 = vmatprep.mubr.f32.mxu0 0.0
  %1671 = vmatmul.mubr.f32.gmra.mxu0 %v318
  %v1672 = vpop.f32.mrf.mxu0
  %v1673 = vadd.f32 0.0, %v1672
  %v1674 = vpop.f32.mrf.mxu0
  %1675 = vmatprep.mubr.f32.mxu0 0.0
  %1676 = vmatmul.mubr.f32.gmra.mxu0 %v321
  %v1677 = vpop.f32.mrf.mxu0
  %v1678 = vadd.f32 0.0, %v1677
  %v1679 = vpop.f32.mrf.mxu0
  %1680 = vdwg.mxu0
  %1681 = vmatprep.subr.mxu0 0.0
  %1682 = vmatpush1.msra.mxu0 0.0
  %1683 = vmatprep.subr.mxu0 0.0
  %1684 = vmatpush1.msra.mxu0 0.0
  %1685 = vmatprep.subr.mxu0 0.0
  %1686 = vmatpush1.msra.mxu0 0.0
  %1687 = vmatprep.subr.mxu0 0.0
  %1688 = vmatpush1.msra.mxu0 0.0
  %1689 = vmatprep.subr.mxu0 0.0
  %1690 = vmatpush1.msra.mxu0 0.0
  %1691 = vmatprep.subr.mxu0 0.0
  %1692 = vmatpush1.msra.mxu0 0.0
  %1693 = vmatprep.subr.mxu0 0.0
  %1694 = vmatpush1.msra.mxu0 0.0
  %1695 = vmatprep.subr.mxu0 0.0
  %1696 = vmatpush1.msra.mxu0 0.0
  %1697 = vmatprep.subr.mxu0 0.0
  %1698 = vmatpush1.msra.mxu0 0.0
  %1699 = vmatprep.subr.mxu0 0.0
  %1700 = vmatpush1.msra.mxu0 0.0
  %1701 = vmatprep.subr.mxu0 0.0
  %1702 = vmatpush1.msra.mxu0 0.0
  %1703 = vmatprep.subr.mxu0 0.0
  %1704 = vmatpush1.msra.mxu0 0.0
  %1705 = vmatprep.subr.mxu0 0.0
  %1706 = vmatpush1.msra.mxu0 0.0
  %1707 = vmatprep.subr.mxu0 0.0
  %1708 = vmatpush1.msra.mxu0 0.0
  %1709 = vmatprep.subr.mxu0 0.0
  %1710 = vmatpush1.msra.mxu0 %v1459
  %1711 = vmatprep.subr.mxu0 0.0
  %1712 = vmatpush1.msra.mxu0 %v1456
  %1713 = vmatprep.subr.mxu0 0.0
  %1714 = vmatpush2.msra.mxu0 0.0
  %1715 = vmatprep.subr.mxu0 0.0
  %1716 = vmatpush2.msra.mxu0 0.0
  %1717 = vmatprep.subr.mxu0 0.0
  %1718 = vmatpush2.msra.mxu0 0.0
  %1719 = vmatprep.subr.mxu0 0.0
  %1720 = vmatpush2.msra.mxu0 0.0
  %1721 = vmatprep.subr.mxu0 0.0
  %1722 = vmatpush2.msra.mxu0 0.0
  %1723 = vmatprep.subr.mxu0 0.0
  %1724 = vmatpush2.msra.mxu0 0.0
  %1725 = vmatprep.subr.mxu0 0.0
  %1726 = vmatpush2.msra.mxu0 0.0
  %1727 = vmatprep.subr.mxu0 0.0
  %1728 = vmatpush2.msra.mxu0 0.0
  %1729 = vmatprep.subr.mxu0 0.0
  %1730 = vmatpush2.msra.mxu0 0.0
  %1731 = vmatprep.subr.mxu0 0.0
  %1732 = vmatpush2.msra.mxu0 0.0
  %1733 = vmatprep.subr.mxu0 0.0
  %1734 = vmatpush2.msra.mxu0 0.0
  %1735 = vmatprep.subr.mxu0 0.0
  %1736 = vmatpush2.msra.mxu0 0.0
  %1737 = vmatprep.subr.mxu0 0.0
  %1738 = vmatpush2.msra.mxu0 0.0
  %1739 = vmatprep.subr.mxu0 0.0
  %1740 = vmatpush2.msra.mxu0 0.0
  %1741 = vmatprep.subr.mxu0 0.0
  %1742 = vmatpush2.msra.mxu0 0.0
  %1743 = vmatprep.subr.mxu0 0.0
  %1744 = vmatpush2.msra.mxu0 0.0
  %1745 = vmatprep.mubr.f32.mxu0 0.0
  %1746 = vmatmul.mubr.f32.gmra.mxu0 %v399
  %v1747 = vpop.f32.mrf.mxu0
  %v1748 = vadd.f32 0.0, %v1747
  %v1749 = vpop.f32.mrf.mxu0
  %1750 = vdwg.mxu0
  %v1751 = vld [vmem:[%s10] sm:$0xff]
  %v1752 = vld [vmem:[%s10 + $0x8] sm:$0xff]
  %v1753 = vld [vmem:[%s10 + $0x10] sm:$0xff]
  %v1754 = vld [vmem:[%s10 + $0x18] sm:$0xff]
  %v1755 = vld [vmem:[%s10 + $0x20] sm:$0xff]
  %v1756 = vld [vmem:[%s10 + $0x28] sm:$0xff]
  %v1757 = vld [vmem:[%s10 + $0x30] sm:$0xff]
  %v1758 = vld [vmem:[%s10 + $0x38] sm:$0xff]
  %v1759 = vld [vmem:[%s10 + $0x40] sm:$0xff]
  %v1760 = vld [vmem:[%s10 + $0x48] sm:$0xff]
  %v1761 = vld [vmem:[%s10 + $0x50] sm:$0xff]
  %v1762 = vld [vmem:[%s10 + $0x58] sm:$0xff]
  %v1763 = vld [vmem:[%s10 + $0x60] sm:$0xff]
  %v1764 = vld [vmem:[%s10 + $0x68] sm:$0xff]
  %v1765 = vld [vmem:[%s10 + $0x70] sm:$0xff]
  %v1766 = vld [vmem:[%s10 + $0x78] sm:$0xff]
  %vm1767 = vcmask 523264
  %v1769 = vsel %vm1767, %v1598, 0
  %v1772 = vsel %vm1767, %v1603, 0
  %1774 = vmatprep.subr.mxu0 0.0
  %1775 = vmatpush1.msra.mxu0 0.0
  %1776 = vmatprep.subr.mxu0 0.0
  %1777 = vmatpush1.msra.mxu0 0.0
  %1778 = vmatprep.subr.mxu0 0.0
  %1779 = vmatpush1.msra.mxu0 0.0
  %1780 = vmatprep.subr.mxu0 0.0
  %1781 = vmatpush1.msra.mxu0 0.0
  %1782 = vmatprep.subr.mxu0 0.0
  %1783 = vmatpush1.msra.mxu0 0.0
  %1784 = vmatprep.subr.mxu0 0.0
  %1785 = vmatpush1.msra.mxu0 0.0
  %1786 = vmatprep.subr.mxu0 0.0
  %1787 = vmatpush1.msra.mxu0 0.0
  %1788 = vmatprep.subr.mxu0 0.0
  %1789 = vmatpush1.msra.mxu0 0.0
  %1790 = vmatprep.subr.mxu0 0.0
  %1791 = vmatpush1.msra.mxu0 %v1766
  %1792 = vmatprep.subr.mxu0 0.0
  %1793 = vmatpush1.msra.mxu0 %v1765
  %1794 = vmatprep.subr.mxu0 0.0
  %1795 = vmatpush1.msra.mxu0 %v1764
  %1796 = vmatprep.subr.mxu0 0.0
  %1797 = vmatpush1.msra.mxu0 %v1763
  %1798 = vmatprep.subr.mxu0 0.0
  %1799 = vmatpush1.msra.mxu0 %v1762
  %1800 = vmatprep.subr.mxu0 0.0
  %1801 = vmatpush1.msra.mxu0 %v1761
  %1802 = vmatprep.subr.mxu0 0.0
  %1803 = vmatpush1.msra.mxu0 %v1760
  %1804 = vmatprep.subr.mxu0 0.0
  %1805 = vmatpush1.msra.mxu0 %v1759
  %1806 = vmatprep.subr.mxu0 0.0
  %1807 = vmatpush2.msra.mxu0 0.0
  %1808 = vmatprep.subr.mxu0 0.0
  %1809 = vmatpush2.msra.mxu0 0.0
  %1810 = vmatprep.subr.mxu0 0.0
  %1811 = vmatpush2.msra.mxu0 0.0
  %1812 = vmatprep.subr.mxu0 0.0
  %1813 = vmatpush2.msra.mxu0 0.0
  %1814 = vmatprep.subr.mxu0 0.0
  %1815 = vmatpush2.msra.mxu0 0.0
  %1816 = vmatprep.subr.mxu0 0.0
  %1817 = vmatpush2.msra.mxu0 0.0
  %1818 = vmatprep.subr.mxu0 0.0
  %1819 = vmatpush2.msra.mxu0 0.0
  %1820 = vmatprep.subr.mxu0 0.0
  %1821 = vmatpush2.msra.mxu0 0.0
  %1822 = vmatprep.subr.mxu0 0.0
  %1823 = vmatpush2.msra.mxu0 0.0
  %1824 = vmatprep.subr.mxu0 0.0
  %1825 = vmatpush2.msra.mxu0 0.0
  %1826 = vmatprep.subr.mxu0 0.0
  %1827 = vmatpush2.msra.mxu0 0.0
  %1828 = vmatprep.subr.mxu0 0.0
  %1829 = vmatpush2.msra.mxu0 0.0
  %1830 = vmatprep.subr.mxu0 0.0
  %1831 = vmatpush2.msra.mxu0 0.0
  %1832 = vmatprep.subr.mxu0 0.0
  %1833 = vmatpush2.msra.mxu0 0.0
  %1834 = vmatprep.subr.mxu0 0.0
  %1835 = vmatpush2.msra.mxu0 0.0
  %1836 = vmatprep.subr.mxu0 0.0
  %1837 = vmatpush2.msra.mxu0 0.0
  %1838 = vmatprep.mubr.f32.mxu0 0.0
  %1839 = vmatmul.mubr.f32.gmra.mxu0 %v1769
  %v1840 = vpop.f32.mrf.mxu0
  %v1841 = vadd.f32 0.0, %v1840
  %v1842 = vpop.f32.mrf.mxu0
  %1843 = vmatprep.mubr.f32.mxu0 0.0
  %1844 = vmatmul.mubr.f32.gmra.mxu0 %v1772
  %v1845 = vpop.f32.mrf.mxu0
  %v1846 = vadd.f32 0.0, %v1845
  %v1847 = vpop.f32.mrf.mxu0
  %1848 = vdwg.mxu0
  %v1850 = vsel %vm1767, %v1456, 0
  %v1852 = vsel %vm1767, %v1457, 0
  %1854 = vmatprep.subr.mxu0 0.0
  %1855 = vmatpush1.msra.mxu0 0.0
  %1856 = vmatprep.subr.mxu0 0.0
  %1857 = vmatpush1.msra.mxu0 0.0
  %1858 = vmatprep.subr.mxu0 0.0
  %1859 = vmatpush1.msra.mxu0 0.0
  %1860 = vmatprep.subr.mxu0 0.0
  %1861 = vmatpush1.msra.mxu0 0.0
  %1862 = vmatprep.subr.mxu0 0.0
  %1863 = vmatpush1.msra.mxu0 0.0
  %1864 = vmatprep.subr.mxu0 0.0
  %1865 = vmatpush1.msra.mxu0 0.0
  %1866 = vmatprep.subr.mxu0 0.0
  %1867 = vmatpush1.msra.mxu0 0.0
  %1868 = vmatprep.subr.mxu0 0.0
  %1869 = vmatpush1.msra.mxu0 0.0
  %1870 = vmatprep.subr.mxu0 0.0
  %1871 = vmatpush1.msra.mxu0 %v1758
  %1872 = vmatprep.subr.mxu0 0.0
  %1873 = vmatpush1.msra.mxu0 %v1757
  %1874 = vmatprep.subr.mxu0 0.0
  %1875 = vmatpush1.msra.mxu0 %v1756
  %1876 = vmatprep.subr.mxu0 0.0
  %1877 = vmatpush1.msra.mxu0 %v1755
  %1878 = vmatprep.subr.mxu0 0.0
  %1879 = vmatpush1.msra.mxu0 %v1754
  %1880 = vmatprep.subr.mxu0 0.0
  %1881 = vmatpush1.msra.mxu0 %v1753
  %1882 = vmatprep.subr.mxu0 0.0
  %1883 = vmatpush1.msra.mxu0 %v1752
  %1884 = vmatprep.subr.mxu0 0.0
  %1885 = vmatpush1.msra.mxu0 %v1751
  %1886 = vmatprep.subr.mxu0 0.0
  %1887 = vmatpush2.msra.mxu0 0.0
  %1888 = vmatprep.subr.mxu0 0.0
  %1889 = vmatpush2.msra.mxu0 0.0
  %1890 = vmatprep.subr.mxu0 0.0
  %1891 = vmatpush2.msra.mxu0 0.0
  %1892 = vmatprep.subr.mxu0 0.0
  %1893 = vmatpush2.msra.mxu0 0.0
  %1894 = vmatprep.subr.mxu0 0.0
  %1895 = vmatpush2.msra.mxu0 0.0
  %1896 = vmatprep.subr.mxu0 0.0
  %1897 = vmatpush2.msra.mxu0 0.0
  %1898 = vmatprep.subr.mxu0 0.0
  %1899 = vmatpush2.msra.mxu0 0.0
  %1900 = vmatprep.subr.mxu0 0.0
  %1901 = vmatpush2.msra.mxu0 0.0
  %1902 = vmatprep.subr.mxu0 0.0
  %1903 = vmatpush2.msra.mxu0 0.0
  %1904 = vmatprep.subr.mxu0 0.0
  %1905 = vmatpush2.msra.mxu0 0.0
  %1906 = vmatprep.subr.mxu0 0.0
  %1907 = vmatpush2.msra.mxu0 0.0
  %1908 = vmatprep.subr.mxu0 0.0
  %1909 = vmatpush2.msra.mxu0 0.0
  %1910 = vmatprep.subr.mxu0 0.0
  %1911 = vmatpush2.msra.mxu0 0.0
  %1912 = vmatprep.subr.mxu0 0.0
  %1913 = vmatpush2.msra.mxu0 0.0
  %1914 = vmatprep.subr.mxu0 0.0
  %1915 = vmatpush2.msra.mxu0 0.0
  %1916 = vmatprep.subr.mxu0 0.0
  %1917 = vmatpush2.msra.mxu0 0.0
  %1918 = vmatprep.mubr.f32.mxu0 0.0
  %1919 = vmatmul.mubr.f32.gmra.mxu0 %v1850
  %v1920 = vpop.f32.mrf.mxu0
  %v1921 = vadd.f32 %v1841, %v1920
  %v1922 = vpop.f32.mrf.mxu0
  %1923 = vmatprep.mubr.f32.mxu0 0.0
  %1924 = vmatmul.mubr.f32.gmra.mxu0 %v1852
  %v1925 = vpop.f32.mrf.mxu0
  %v1926 = vadd.f32 %v1846, %v1925
  %v1927 = vpop.f32.mrf.mxu0
  %1928 = vdwg.mxu0
  %v1929 = vld [vmem:[%s10 + $0x80] sm:$0xff]
  %v1930 = vld [vmem:[%s10 + $0x88] sm:$0xff]
  %v1931 = vld [vmem:[%s10 + $0x90] sm:$0xff]
  %v1932 = vld [vmem:[%s10 + $0x98] sm:$0xff]
  %v1933 = vld [vmem:[%s10 + $0xa0] sm:$0xff]
  %v1934 = vld [vmem:[%s10 + $0xa8] sm:$0xff]
  %v1935 = vld [vmem:[%s10 + $0xb0] sm:$0xff]
  %v1936 = vld [vmem:[%s10 + $0xb8] sm:$0xff]
  %v1938 = vsel %vm1767, %v1673, 0
  %v1941 = vsel %vm1767, %v1678, 0
  %1943 = vmatprep.subr.mxu0 0.0
  %1944 = vmatpush1.msra.mxu0 0.0
  %1945 = vmatprep.subr.mxu0 0.0
  %1946 = vmatpush1.msra.mxu0 0.0
  %1947 = vmatprep.subr.mxu0 0.0
  %1948 = vmatpush1.msra.mxu0 0.0
  %1949 = vmatprep.subr.mxu0 0.0
  %1950 = vmatpush1.msra.mxu0 0.0
  %1951 = vmatprep.subr.mxu0 0.0
  %1952 = vmatpush1.msra.mxu0 0.0
  %1953 = vmatprep.subr.mxu0 0.0
  %1954 = vmatpush1.msra.mxu0 0.0
  %1955 = vmatprep.subr.mxu0 0.0
  %1956 = vmatpush1.msra.mxu0 0.0
  %1957 = vmatprep.subr.mxu0 0.0
  %1958 = vmatpush1.msra.mxu0 0.0
  %1959 = vmatprep.subr.mxu0 0.0
  %1960 = vmatpush1.msra.mxu0 %v1936
  %1961 = vmatprep.subr.mxu0 0.0
  %1962 = vmatpush1.msra.mxu0 %v1935
  %1963 = vmatprep.subr.mxu0 0.0
  %1964 = vmatpush1.msra.mxu0 %v1934
  %1965 = vmatprep.subr.mxu0 0.0
  %1966 = vmatpush1.msra.mxu0 %v1933
  %1967 = vmatprep.subr.mxu0 0.0
  %1968 = vmatpush1.msra.mxu0 %v1932
  %1969 = vmatprep.subr.mxu0 0.0
  %1970 = vmatpush1.msra.mxu0 %v1931
  %1971 = vmatprep.subr.mxu0 0.0
  %1972 = vmatpush1.msra.mxu0 %v1930
  %1973 = vmatprep.subr.mxu0 0.0
  %1974 = vmatpush1.msra.mxu0 %v1929
  %1975 = vmatprep.subr.mxu0 0.0
  %1976 = vmatpush2.msra.mxu0 0.0
  %1977 = vmatprep.subr.mxu0 0.0
  %1978 = vmatpush2.msra.mxu0 0.0
  %1979 = vmatprep.subr.mxu0 0.0
  %1980 = vmatpush2.msra.mxu0 0.0
  %1981 = vmatprep.subr.mxu0 0.0
  %1982 = vmatpush2.msra.mxu0 0.0
  %1983 = vmatprep.subr.mxu0 0.0
  %1984 = vmatpush2.msra.mxu0 0.0
  %1985 = vmatprep.subr.mxu0 0.0
  %1986 = vmatpush2.msra.mxu0 0.0
  %1987 = vmatprep.subr.mxu0 0.0
  %1988 = vmatpush2.msra.mxu0 0.0
  %1989 = vmatprep.subr.mxu0 0.0
  %1990 = vmatpush2.msra.mxu0 0.0
  %1991 = vmatprep.subr.mxu0 0.0
  %1992 = vmatpush2.msra.mxu0 0.0
  %1993 = vmatprep.subr.mxu0 0.0
  %1994 = vmatpush2.msra.mxu0 0.0
  %1995 = vmatprep.subr.mxu0 0.0
  %1996 = vmatpush2.msra.mxu0 0.0
  %1997 = vmatprep.subr.mxu0 0.0
  %1998 = vmatpush2.msra.mxu0 0.0
  %1999 = vmatprep.subr.mxu0 0.0
  %2000 = vmatpush2.msra.mxu0 0.0
  %2001 = vmatprep.subr.mxu0 0.0
  %2002 = vmatpush2.msra.mxu0 0.0
  %2003 = vmatprep.subr.mxu0 0.0
  %2004 = vmatpush2.msra.mxu0 0.0
  %2005 = vmatprep.subr.mxu0 0.0
  %2006 = vmatpush2.msra.mxu0 0.0
  %2007 = vmatprep.mubr.f32.mxu0 0.0
  %2008 = vmatmul.mubr.f32.gmra.mxu0 %v1938
  %v2009 = vpop.f32.mrf.mxu0
  %v2010 = vadd.f32 0.0, %v2009
  %v2011 = vpop.f32.mrf.mxu0
  %2012 = vmatprep.mubr.f32.mxu0 0.0
  %2013 = vmatmul.mubr.f32.gmra.mxu0 %v1941
  %v2014 = vpop.f32.mrf.mxu0
  %v2015 = vadd.f32 0.0, %v2014
  %v2016 = vpop.f32.mrf.mxu0
  %2017 = vdwg.mxu0
  %v2018 = vadd.f32 %v1921, %v2010
  %v2019 = vadd.f32 %v1926, %v2015
  %v2020 = vld [vmem:[%s10 + $0xc0] sm:$0xff]
  %v2021 = vld [vmem:[%s10 + $0xc8] sm:$0xff]
  %v2022 = vld [vmem:[%s10 + $0xd0] sm:$0xff]
  %v2023 = vld [vmem:[%s10 + $0xd8] sm:$0xff]
  %v2024 = vld [vmem:[%s10 + $0xe0] sm:$0xff]
  %v2025 = vld [vmem:[%s10 + $0xe8] sm:$0xff]
  %v2026 = vld [vmem:[%s10 + $0xf0] sm:$0xff]
  %v2027 = vld [vmem:[%s10 + $0xf8] sm:$0xff]
  %v2029 = vsel %vm1767, %v1748, 0
  %2031 = vmatprep.subr.mxu0 0.0
  %2032 = vmatpush1.msra.mxu0 0.0
  %2033 = vmatprep.subr.mxu0 0.0
  %2034 = vmatpush1.msra.mxu0 0.0
  %2035 = vmatprep.subr.mxu0 0.0
  %2036 = vmatpush1.msra.mxu0 0.0
  %2037 = vmatprep.subr.mxu0 0.0
  %2038 = vmatpush1.msra.mxu0 0.0
  %2039 = vmatprep.subr.mxu0 0.0
  %2040 = vmatpush1.msra.mxu0 0.0
  %2041 = vmatprep.subr.mxu0 0.0
  %2042 = vmatpush1.msra.mxu0 0.0
  %2043 = vmatprep.subr.mxu0 0.0
  %2044 = vmatpush1.msra.mxu0 0.0
  %2045 = vmatprep.subr.mxu0 0.0
  %2046 = vmatpush1.msra.mxu0 0.0
  %2047 = vmatprep.subr.mxu0 0.0
  %2048 = vmatpush1.msra.mxu0 %v2027
  %2049 = vmatprep.subr.mxu0 0.0
  %2050 = vmatpush1.msra.mxu0 %v2026
  %2051 = vmatprep.subr.mxu0 0.0
  %2052 = vmatpush1.msra.mxu0 %v2025
  %2053 = vmatprep.subr.mxu0 0.0
  %2054 = vmatpush1.msra.mxu0 %v2024
  %2055 = vmatprep.subr.mxu0 0.0
  %2056 = vmatpush1.msra.mxu0 %v2023
  %2057 = vmatprep.subr.mxu0 0.0
  %2058 = vmatpush1.msra.mxu0 %v2022
  %2059 = vmatprep.subr.mxu0 0.0
  %2060 = vmatpush1.msra.mxu0 %v2021
  %2061 = vmatprep.subr.mxu0 0.0
  %2062 = vmatpush1.msra.mxu0 %v2020
  %2063 = vmatprep.subr.mxu0 0.0
  %2064 = vmatpush2.msra.mxu0 0.0
  %2065 = vmatprep.subr.mxu0 0.0
  %2066 = vmatpush2.msra.mxu0 0.0
  %2067 = vmatprep.subr.mxu0 0.0
  %2068 = vmatpush2.msra.mxu0 0.0
  %2069 = vmatprep.subr.mxu0 0.0
  %2070 = vmatpush2.msra.mxu0 0.0
  %2071 = vmatprep.subr.mxu0 0.0
  %2072 = vmatpush2.msra.mxu0 0.0
  %2073 = vmatprep.subr.mxu0 0.0
  %2074 = vmatpush2.msra.mxu0 0.0
  %2075 = vmatprep.subr.mxu0 0.0
  %2076 = vmatpush2.msra.mxu0 0.0
  %2077 = vmatprep.subr.mxu0 0.0
  %2078 = vmatpush2.msra.mxu0 0.0
  %2079 = vmatprep.subr.mxu0 0.0
  %2080 = vmatpush2.msra.mxu0 0.0
  %2081 = vmatprep.subr.mxu0 0.0
  %2082 = vmatpush2.msra.mxu0 0.0
  %2083 = vmatprep.subr.mxu0 0.0
  %2084 = vmatpush2.msra.mxu0 0.0
  %2085 = vmatprep.subr.mxu0 0.0
  %2086 = vmatpush2.msra.mxu0 0.0
  %2087 = vmatprep.subr.mxu0 0.0
  %2088 = vmatpush2.msra.mxu0 0.0
  %2089 = vmatprep.subr.mxu0 0.0
  %2090 = vmatpush2.msra.mxu0 0.0
  %2091 = vmatprep.subr.mxu0 0.0
  %2092 = vmatpush2.msra.mxu0 0.0
  %2093 = vmatprep.subr.mxu0 0.0
  %2094 = vmatpush2.msra.mxu0 0.0
  %2095 = vmatprep.mubr.f32.mxu0 0.0
  %2096 = vmatmul.mubr.f32.gmra.mxu0 %v2029
  %v2097 = vpop.f32.mrf.mxu0
  %v2098 = vadd.f32 0.0, %v2097
  %v2099 = vpop.f32.mrf.mxu0
  %2100 = vdwg.mxu0
  %v2101 = vlaneseq
  %v2102 = vshrl.u32 %v2101, 7
  %v2103 = vsub.s32 0, %v2102
  %v2104 = vrot.slane %v2098, %v2103
  %v2105 = vadd.f32 %v2018, %v2104
  %v2106 = vadd.f32 %v2019, %v2104
  %v2107 = vld [vmem:[%s11] sm:$0x1]
  %v2109 = vlaneseq
  %v2110 = vshrl.u32 %v2109, 7
  %v2111 = vsub.s32 0, %v2110
  %v2112 = vrot.slane %v2107, %v2111
  %v2114 = vadd.f32 %v2105, %v2112
  %v2115 = vadd.f32 %v2106, %v2112
  %v2116 = vmax.f32 %v2114, 0.0
  %v2117 = vmax.f32 %v2115, 0.0
  %v2119 = vsel %vm77, %v2117, 0
  %2121 = vmatprep.subr.mxu0 0.0
  %2122 = vmatpush1.msra.mxu0 0.0
  %2123 = vmatprep.subr.mxu0 0.0
  %2124 = vmatpush1.msra.mxu0 0.0
  %2125 = vmatprep.subr.mxu0 0.0
  %2126 = vmatpush1.msra.mxu0 0.0
  %2127 = vmatprep.subr.mxu0 0.0
  %2128 = vmatpush1.msra.mxu0 0.0
  %2129 = vmatprep.subr.mxu0 0.0
  %2130 = vmatpush1.msra.mxu0 0.0
  %2131 = vmatprep.subr.mxu0 0.0
  %2132 = vmatpush1.msra.mxu0 0.0
  %2133 = vmatprep.subr.mxu0 0.0
  %2134 = vmatpush1.msra.mxu0 0.0
  %2135 = vmatprep.subr.mxu0 0.0
  %2136 = vmatpush1.msra.mxu0 0.0
  %2137 = vmatprep.subr.mxu0 0.0
  %2138 = vmatpush1.msra.mxu0 0.0
  %2139 = vmatprep.subr.mxu0 0.0
  %2140 = vmatpush1.msra.mxu0 0.0
  %2141 = vmatprep.subr.mxu0 0.0
  %2142 = vmatpush1.msra.mxu0 0.0
  %2143 = vmatprep.subr.mxu0 0.0
  %2144 = vmatpush1.msra.mxu0 0.0
  %2145 = vmatprep.subr.mxu0 0.0
  %2146 = vmatpush1.msra.mxu0 0.0
  %2147 = vmatprep.subr.mxu0 0.0
  %2148 = vmatpush1.msra.mxu0 0.0
  %2149 = vmatprep.subr.mxu0 0.0
  %2150 = vmatpush1.msra.mxu0 %v2119
  %2151 = vmatprep.subr.mxu0 0.0
  %2152 = vmatpush1.msra.mxu0 %v2116
  %2153 = vmatprep.subr.mxu0 0.0
  %2154 = vmatpush2.msra.mxu0 0.0
  %2155 = vmatprep.subr.mxu0 0.0
  %2156 = vmatpush2.msra.mxu0 0.0
  %2157 = vmatprep.subr.mxu0 0.0
  %2158 = vmatpush2.msra.mxu0 0.0
  %2159 = vmatprep.subr.mxu0 0.0
  %2160 = vmatpush2.msra.mxu0 0.0
  %2161 = vmatprep.subr.mxu0 0.0
  %2162 = vmatpush2.msra.mxu0 0.0
  %2163 = vmatprep.subr.mxu0 0.0
  %2164 = vmatpush2.msra.mxu0 0.0
  %2165 = vmatprep.subr.mxu0 0.0
  %2166 = vmatpush2.msra.mxu0 0.0
  %2167 = vmatprep.subr.mxu0 0.0
  %2168 = vmatpush2.msra.mxu0 0.0
  %2169 = vmatprep.subr.mxu0 0.0
  %2170 = vmatpush2.msra.mxu0 0.0
  %2171 = vmatprep.subr.mxu0 0.0
  %2172 = vmatpush2.msra.mxu0 0.0
  %2173 = vmatprep.subr.mxu0 0.0
  %2174 = vmatpush2.msra.mxu0 0.0
  %2175 = vmatprep.subr.mxu0 0.0
  %2176 = vmatpush2.msra.mxu0 0.0
  %2177 = vmatprep.subr.mxu0 0.0
  %2178 = vmatpush2.msra.mxu0 0.0
  %2179 = vmatprep.subr.mxu0 0.0
  %2180 = vmatpush2.msra.mxu0 0.0
  %2181 = vmatprep.subr.mxu0 0.0
  %2182 = vmatpush2.msra.mxu0 0.0
  %2183 = vmatprep.subr.mxu0 0.0
  %2184 = vmatpush2.msra.mxu0 0.0
  %2185 = vmatprep.mubr.f32.mxu0 0.0
  %2186 = vmatmul.mubr.f32.gmra.mxu0 %v160
  %v2187 = vpop.f32.mrf.mxu0
  %v2188 = vadd.f32 0.0, %v2187
  %v2189 = vpop.f32.mrf.mxu0
  %2190 = vdwg.mxu0
  %2191 = vmatprep.subr.mxu0 0.0
  %2192 = vmatpush1.msra.mxu0 0.0
  %2193 = vmatprep.subr.mxu0 0.0
  %2194 = vmatpush1.msra.mxu0 0.0
  %2195 = vmatprep.subr.mxu0 0.0
  %2196 = vmatpush1.msra.mxu0 0.0
  %2197 = vmatprep.subr.mxu0 0.0
  %2198 = vmatpush1.msra.mxu0 0.0
  %2199 = vmatprep.subr.mxu0 0.0
  %2200 = vmatpush1.msra.mxu0 0.0
  %2201 = vmatprep.subr.mxu0 0.0
  %2202 = vmatpush1.msra.mxu0 0.0
  %2203 = vmatprep.subr.mxu0 0.0
  %2204 = vmatpush1.msra.mxu0 0.0
  %2205 = vmatprep.subr.mxu0 0.0
  %2206 = vmatpush1.msra.mxu0 0.0
  %2207 = vmatprep.subr.mxu0 0.0
  %2208 = vmatpush1.msra.mxu0 0.0
  %2209 = vmatprep.subr.mxu0 0.0
  %2210 = vmatpush1.msra.mxu0 0.0
  %2211 = vmatprep.subr.mxu0 0.0
  %2212 = vmatpush1.msra.mxu0 0.0
  %2213 = vmatprep.subr.mxu0 0.0
  %2214 = vmatpush1.msra.mxu0 0.0
  %2215 = vmatprep.subr.mxu0 0.0
  %2216 = vmatpush1.msra.mxu0 0.0
  %2217 = vmatprep.subr.mxu0 0.0
  %2218 = vmatpush1.msra.mxu0 0.0
  %2219 = vmatprep.subr.mxu0 0.0
  %2220 = vmatpush1.msra.mxu0 0.0
  %2221 = vmatprep.subr.mxu0 0.0
  %2222 = vmatpush1.msra.mxu0 %v2188
  %2223 = vmatprep.subr.mxu0 0.0
  %2224 = vmatpush2.msra.mxu0 0.0
  %2225 = vmatprep.subr.mxu0 0.0
  %2226 = vmatpush2.msra.mxu0 0.0
  %2227 = vmatprep.subr.mxu0 0.0
  %2228 = vmatpush2.msra.mxu0 0.0
  %2229 = vmatprep.subr.mxu0 0.0
  %2230 = vmatpush2.msra.mxu0 0.0
  %2231 = vmatprep.subr.mxu0 0.0
  %2232 = vmatpush2.msra.mxu0 0.0
  %2233 = vmatprep.subr.mxu0 0.0
  %2234 = vmatpush2.msra.mxu0 0.0
  %2235 = vmatprep.subr.mxu0 0.0
  %2236 = vmatpush2.msra.mxu0 0.0
  %2237 = vmatprep.subr.mxu0 0.0
  %2238 = vmatpush2.msra.mxu0 0.0
  %2239 = vmatprep.subr.mxu0 0.0
  %2240 = vmatpush2.msra.mxu0 0.0
  %2241 = vmatprep.subr.mxu0 0.0
  %2242 = vmatpush2.msra.mxu0 0.0
  %2243 = vmatprep.subr.mxu0 0.0
  %2244 = vmatpush2.msra.mxu0 0.0
  %2245 = vmatprep.subr.mxu0 0.0
  %2246 = vmatpush2.msra.mxu0 0.0
  %2247 = vmatprep.subr.mxu0 0.0
  %2248 = vmatpush2.msra.mxu0 0.0
  %2249 = vmatprep.subr.mxu0 0.0
  %2250 = vmatpush2.msra.mxu0 0.0
  %2251 = vmatprep.subr.mxu0 0.0
  %2252 = vmatpush2.msra.mxu0 0.0
  %2253 = vmatprep.subr.mxu0 0.0
  %2254 = vmatpush2.msra.mxu0 0.0
  %2255 = vmatprep.mubr.f32.mxu0 0.0
  %2256 = vmatmul.mubr.f32.gmra.mxu0 %v237
  %v2257 = vpop.f32.mrf.mxu0
  %v2258 = vadd.f32 0.0, %v2257
  %v2259 = vpop.f32.mrf.mxu0
  %2260 = vmatprep.mubr.f32.mxu0 0.0
  %2261 = vmatmul.mubr.f32.gmra.mxu0 %v240
  %v2262 = vpop.f32.mrf.mxu0
  %v2263 = vadd.f32 0.0, %v2262
  %v2264 = vpop.f32.mrf.mxu0
  %2265 = vdwg.mxu0
  %2266 = vmatprep.subr.mxu0 0.0
  %2267 = vmatpush1.msra.mxu0 0.0
  %2268 = vmatprep.subr.mxu0 0.0
  %2269 = vmatpush1.msra.mxu0 0.0
  %2270 = vmatprep.subr.mxu0 0.0
  %2271 = vmatpush1.msra.mxu0 0.0
  %2272 = vmatprep.subr.mxu0 0.0
  %2273 = vmatpush1.msra.mxu0 0.0
  %2274 = vmatprep.subr.mxu0 0.0
  %2275 = vmatpush1.msra.mxu0 0.0
  %2276 = vmatprep.subr.mxu0 0.0
  %2277 = vmatpush1.msra.mxu0 0.0
  %2278 = vmatprep.subr.mxu0 0.0
  %2279 = vmatpush1.msra.mxu0 0.0
  %2280 = vmatprep.subr.mxu0 0.0
  %2281 = vmatpush1.msra.mxu0 0.0
  %2282 = vmatprep.subr.mxu0 0.0
  %2283 = vmatpush1.msra.mxu0 0.0
  %2284 = vmatprep.subr.mxu0 0.0
  %2285 = vmatpush1.msra.mxu0 0.0
  %2286 = vmatprep.subr.mxu0 0.0
  %2287 = vmatpush1.msra.mxu0 0.0
  %2288 = vmatprep.subr.mxu0 0.0
  %2289 = vmatpush1.msra.mxu0 0.0
  %2290 = vmatprep.subr.mxu0 0.0
  %2291 = vmatpush1.msra.mxu0 0.0
  %2292 = vmatprep.subr.mxu0 0.0
  %2293 = vmatpush1.msra.mxu0 0.0
  %2294 = vmatprep.subr.mxu0 0.0
  %2295 = vmatpush1.msra.mxu0 0.0
  %2296 = vmatprep.subr.mxu0 0.0
  %2297 = vmatpush1.msra.mxu0 %v2188
  %2298 = vmatprep.subr.mxu0 0.0
  %2299 = vmatpush2.msra.mxu0 0.0
  %2300 = vmatprep.subr.mxu0 0.0
  %2301 = vmatpush2.msra.mxu0 0.0
  %2302 = vmatprep.subr.mxu0 0.0
  %2303 = vmatpush2.msra.mxu0 0.0
  %2304 = vmatprep.subr.mxu0 0.0
  %2305 = vmatpush2.msra.mxu0 0.0
  %2306 = vmatprep.subr.mxu0 0.0
  %2307 = vmatpush2.msra.mxu0 0.0
  %2308 = vmatprep.subr.mxu0 0.0
  %2309 = vmatpush2.msra.mxu0 0.0
  %2310 = vmatprep.subr.mxu0 0.0
  %2311 = vmatpush2.msra.mxu0 0.0
  %2312 = vmatprep.subr.mxu0 0.0
  %2313 = vmatpush2.msra.mxu0 0.0
  %2314 = vmatprep.subr.mxu0 0.0
  %2315 = vmatpush2.msra.mxu0 0.0
  %2316 = vmatprep.subr.mxu0 0.0
  %2317 = vmatpush2.msra.mxu0 0.0
  %2318 = vmatprep.subr.mxu0 0.0
  %2319 = vmatpush2.msra.mxu0 0.0
  %2320 = vmatprep.subr.mxu0 0.0
  %2321 = vmatpush2.msra.mxu0 0.0
  %2322 = vmatprep.subr.mxu0 0.0
  %2323 = vmatpush2.msra.mxu0 0.0
  %2324 = vmatprep.subr.mxu0 0.0
  %2325 = vmatpush2.msra.mxu0 0.0
  %2326 = vmatprep.subr.mxu0 0.0
  %2327 = vmatpush2.msra.mxu0 0.0
  %2328 = vmatprep.subr.mxu0 0.0
  %2329 = vmatpush2.msra.mxu0 0.0
  %2330 = vmatprep.mubr.f32.mxu0 0.0
  %2331 = vmatmul.mubr.f32.gmra.mxu0 %v318
  %v2332 = vpop.f32.mrf.mxu0
  %v2333 = vadd.f32 0.0, %v2332
  %v2334 = vpop.f32.mrf.mxu0
  %2335 = vmatprep.mubr.f32.mxu0 0.0
  %2336 = vmatmul.mubr.f32.gmra.mxu0 %v321
  %v2337 = vpop.f32.mrf.mxu0
  %v2338 = vadd.f32 0.0, %v2337
  %v2339 = vpop.f32.mrf.mxu0
  %2340 = vdwg.mxu0
  %2341 = vmatprep.subr.mxu0 0.0
  %2342 = vmatpush1.msra.mxu0 0.0
  %2343 = vmatprep.subr.mxu0 0.0
  %2344 = vmatpush1.msra.mxu0 0.0
  %2345 = vmatprep.subr.mxu0 0.0
  %2346 = vmatpush1.msra.mxu0 0.0
  %2347 = vmatprep.subr.mxu0 0.0
  %2348 = vmatpush1.msra.mxu0 0.0
  %2349 = vmatprep.subr.mxu0 0.0
  %2350 = vmatpush1.msra.mxu0 0.0
  %2351 = vmatprep.subr.mxu0 0.0
  %2352 = vmatpush1.msra.mxu0 0.0
  %2353 = vmatprep.subr.mxu0 0.0
  %2354 = vmatpush1.msra.mxu0 0.0
  %2355 = vmatprep.subr.mxu0 0.0
  %2356 = vmatpush1.msra.mxu0 0.0
  %2357 = vmatprep.subr.mxu0 0.0
  %2358 = vmatpush1.msra.mxu0 0.0
  %2359 = vmatprep.subr.mxu0 0.0
  %2360 = vmatpush1.msra.mxu0 0.0
  %2361 = vmatprep.subr.mxu0 0.0
  %2362 = vmatpush1.msra.mxu0 0.0
  %2363 = vmatprep.subr.mxu0 0.0
  %2364 = vmatpush1.msra.mxu0 0.0
  %2365 = vmatprep.subr.mxu0 0.0
  %2366 = vmatpush1.msra.mxu0 0.0
  %2367 = vmatprep.subr.mxu0 0.0
  %2368 = vmatpush1.msra.mxu0 0.0
  %2369 = vmatprep.subr.mxu0 0.0
  %2370 = vmatpush1.msra.mxu0 %v2119
  %2371 = vmatprep.subr.mxu0 0.0
  %2372 = vmatpush1.msra.mxu0 %v2116
  %2373 = vmatprep.subr.mxu0 0.0
  %2374 = vmatpush2.msra.mxu0 0.0
  %2375 = vmatprep.subr.mxu0 0.0
  %2376 = vmatpush2.msra.mxu0 0.0
  %2377 = vmatprep.subr.mxu0 0.0
  %2378 = vmatpush2.msra.mxu0 0.0
  %2379 = vmatprep.subr.mxu0 0.0
  %2380 = vmatpush2.msra.mxu0 0.0
  %2381 = vmatprep.subr.mxu0 0.0
  %2382 = vmatpush2.msra.mxu0 0.0
  %2383 = vmatprep.subr.mxu0 0.0
  %2384 = vmatpush2.msra.mxu0 0.0
  %2385 = vmatprep.subr.mxu0 0.0
  %2386 = vmatpush2.msra.mxu0 0.0
  %2387 = vmatprep.subr.mxu0 0.0
  %2388 = vmatpush2.msra.mxu0 0.0
  %2389 = vmatprep.subr.mxu0 0.0
  %2390 = vmatpush2.msra.mxu0 0.0
  %2391 = vmatprep.subr.mxu0 0.0
  %2392 = vmatpush2.msra.mxu0 0.0
  %2393 = vmatprep.subr.mxu0 0.0
  %2394 = vmatpush2.msra.mxu0 0.0
  %2395 = vmatprep.subr.mxu0 0.0
  %2396 = vmatpush2.msra.mxu0 0.0
  %2397 = vmatprep.subr.mxu0 0.0
  %2398 = vmatpush2.msra.mxu0 0.0
  %2399 = vmatprep.subr.mxu0 0.0
  %2400 = vmatpush2.msra.mxu0 0.0
  %2401 = vmatprep.subr.mxu0 0.0
  %2402 = vmatpush2.msra.mxu0 0.0
  %2403 = vmatprep.subr.mxu0 0.0
  %2404 = vmatpush2.msra.mxu0 0.0
  %2405 = vmatprep.mubr.f32.mxu0 0.0
  %2406 = vmatmul.mubr.f32.gmra.mxu0 %v399
  %v2407 = vpop.f32.mrf.mxu0
  %v2408 = vadd.f32 0.0, %v2407
  %v2409 = vpop.f32.mrf.mxu0
  %2410 = vdwg.mxu0
  %v2411 = vld [vmem:[%s12] sm:$0xff]
  %v2412 = vld [vmem:[%s12 + $0x8] sm:$0xff]
  %v2413 = vld [vmem:[%s12 + $0x10] sm:$0xff]
  %v2414 = vld [vmem:[%s12 + $0x18] sm:$0xff]
  %v2415 = vld [vmem:[%s12 + $0x20] sm:$0xff]
  %v2416 = vld [vmem:[%s12 + $0x28] sm:$0xff]
  %v2417 = vld [vmem:[%s12 + $0x30] sm:$0xff]
  %v2418 = vld [vmem:[%s12 + $0x38] sm:$0xff]
  %v2419 = vld [vmem:[%s12 + $0x40] sm:$0xff]
  %v2420 = vld [vmem:[%s12 + $0x48] sm:$0xff]
  %v2421 = vld [vmem:[%s12 + $0x50] sm:$0xff]
  %v2422 = vld [vmem:[%s12 + $0x58] sm:$0xff]
  %v2423 = vld [vmem:[%s12 + $0x60] sm:$0xff]
  %v2424 = vld [vmem:[%s12 + $0x68] sm:$0xff]
  %v2425 = vld [vmem:[%s12 + $0x70] sm:$0xff]
  %v2426 = vld [vmem:[%s12 + $0x78] sm:$0xff]
  %v2427 = vld [vmem:[%s12 + $0x80] sm:$0xff]
  %v2428 = vld [vmem:[%s12 + $0x88] sm:$0xff]
  %v2429 = vld [vmem:[%s12 + $0x90] sm:$0xff]
  %v2430 = vld [vmem:[%s12 + $0x98] sm:$0xff]
  %v2431 = vld [vmem:[%s12 + $0xa0] sm:$0xff]
  %v2432 = vld [vmem:[%s12 + $0xa8] sm:$0xff]
  %v2433 = vld [vmem:[%s12 + $0xb0] sm:$0xff]
  %v2434 = vld [vmem:[%s12 + $0xb8] sm:$0xff]
  %v2435 = vld [vmem:[%s12 + $0xc0] sm:$0xff]
  %v2436 = vld [vmem:[%s12 + $0xc8] sm:$0xff]
  %v2437 = vld [vmem:[%s12 + $0xd0] sm:$0xff]
  %v2438 = vld [vmem:[%s12 + $0xd8] sm:$0xff]
  %v2439 = vld [vmem:[%s12 + $0xe0] sm:$0xff]
  %v2440 = vld [vmem:[%s12 + $0xe8] sm:$0xff]
  %v2441 = vld [vmem:[%s12 + $0xf0] sm:$0xff]
  %v2442 = vld [vmem:[%s12 + $0xf8] sm:$0xff]
  %2443 = vmatprep.subr.mxu0 0.0
  %2444 = vmatpush1.msra.mxu0 %v2442
  %2445 = vmatprep.subr.mxu0 0.0
  %2446 = vmatpush1.msra.mxu0 %v2441
  %2447 = vmatprep.subr.mxu0 0.0
  %2448 = vmatpush1.msra.mxu0 %v2440
  %2449 = vmatprep.subr.mxu0 0.0
  %2450 = vmatpush1.msra.mxu0 %v2439
  %2451 = vmatprep.subr.mxu0 0.0
  %2452 = vmatpush1.msra.mxu0 %v2438
  %2453 = vmatprep.subr.mxu0 0.0
  %2454 = vmatpush1.msra.mxu0 %v2437
  %2455 = vmatprep.subr.mxu0 0.0
  %2456 = vmatpush1.msra.mxu0 %v2436
  %2457 = vmatprep.subr.mxu0 0.0
  %2458 = vmatpush1.msra.mxu0 %v2435
  %2459 = vmatprep.subr.mxu0 0.0
  %2460 = vmatpush1.msra.mxu0 %v2434
  %2461 = vmatprep.subr.mxu0 0.0
  %2462 = vmatpush1.msra.mxu0 %v2433
  %2463 = vmatprep.subr.mxu0 0.0
  %2464 = vmatpush1.msra.mxu0 %v2432
  %2465 = vmatprep.subr.mxu0 0.0
  %2466 = vmatpush1.msra.mxu0 %v2431
  %2467 = vmatprep.subr.mxu0 0.0
  %2468 = vmatpush1.msra.mxu0 %v2430
  %2469 = vmatprep.subr.mxu0 0.0
  %2470 = vmatpush1.msra.mxu0 %v2429
  %2471 = vmatprep.subr.mxu0 0.0
  %2472 = vmatpush1.msra.mxu0 %v2428
  %2473 = vmatprep.subr.mxu0 0.0
  %2474 = vmatpush1.msra.mxu0 %v2427
  %2475 = vmatprep.subr.mxu0 0.0
  %2476 = vmatpush2.msra.mxu0 0.0
  %2477 = vmatprep.subr.mxu0 0.0
  %2478 = vmatpush2.msra.mxu0 0.0
  %2479 = vmatprep.subr.mxu0 0.0
  %2480 = vmatpush2.msra.mxu0 0.0
  %2481 = vmatprep.subr.mxu0 0.0
  %2482 = vmatpush2.msra.mxu0 0.0
  %2483 = vmatprep.subr.mxu0 0.0
  %2484 = vmatpush2.msra.mxu0 0.0
  %2485 = vmatprep.subr.mxu0 0.0
  %2486 = vmatpush2.msra.mxu0 0.0
  %2487 = vmatprep.subr.mxu0 0.0
  %2488 = vmatpush2.msra.mxu0 0.0
  %2489 = vmatprep.subr.mxu0 0.0
  %2490 = vmatpush2.msra.mxu0 0.0
  %2491 = vmatprep.subr.mxu0 0.0
  %2492 = vmatpush2.msra.mxu0 0.0
  %2493 = vmatprep.subr.mxu0 0.0
  %2494 = vmatpush2.msra.mxu0 0.0
  %2495 = vmatprep.subr.mxu0 0.0
  %2496 = vmatpush2.msra.mxu0 0.0
  %2497 = vmatprep.subr.mxu0 0.0
  %2498 = vmatpush2.msra.mxu0 0.0
  %2499 = vmatprep.subr.mxu0 0.0
  %2500 = vmatpush2.msra.mxu0 0.0
  %2501 = vmatprep.subr.mxu0 0.0
  %2502 = vmatpush2.msra.mxu0 0.0
  %2503 = vmatprep.subr.mxu0 0.0
  %2504 = vmatpush2.msra.mxu0 0.0
  %2505 = vmatprep.subr.mxu0 0.0
  %2506 = vmatpush2.msra.mxu0 0.0
  %2507 = vmatprep.mubr.f32.mxu0 0.0
  %2508 = vmatmul.mubr.f32.gmra.mxu0 %v2258
  %v2509 = vpop.f32.mrf.mxu0
  %v2510 = vadd.f32 0.0, %v2509
  %v2511 = vpop.f32.mrf.mxu0
  %2512 = vmatprep.mubr.f32.mxu0 0.0
  %2513 = vmatmul.mubr.f32.gmra.mxu0 %v2263
  %v2514 = vpop.f32.mrf.mxu0
  %v2515 = vadd.f32 0.0, %v2514
  %v2516 = vpop.f32.mrf.mxu0
  %2517 = vdwg.mxu0
  %2518 = vmatprep.subr.mxu0 0.0
  %2519 = vmatpush1.msra.mxu0 %v2426
  %2520 = vmatprep.subr.mxu0 0.0
  %2521 = vmatpush1.msra.mxu0 %v2425
  %2522 = vmatprep.subr.mxu0 0.0
  %2523 = vmatpush1.msra.mxu0 %v2424
  %2524 = vmatprep.subr.mxu0 0.0
  %2525 = vmatpush1.msra.mxu0 %v2423
  %2526 = vmatprep.subr.mxu0 0.0
  %2527 = vmatpush1.msra.mxu0 %v2422
  %2528 = vmatprep.subr.mxu0 0.0
  %2529 = vmatpush1.msra.mxu0 %v2421
  %2530 = vmatprep.subr.mxu0 0.0
  %2531 = vmatpush1.msra.mxu0 %v2420
  %2532 = vmatprep.subr.mxu0 0.0
  %2533 = vmatpush1.msra.mxu0 %v2419
  %2534 = vmatprep.subr.mxu0 0.0
  %2535 = vmatpush1.msra.mxu0 %v2418
  %2536 = vmatprep.subr.mxu0 0.0
  %2537 = vmatpush1.msra.mxu0 %v2417
  %2538 = vmatprep.subr.mxu0 0.0
  %2539 = vmatpush1.msra.mxu0 %v2416
  %2540 = vmatprep.subr.mxu0 0.0
  %2541 = vmatpush1.msra.mxu0 %v2415
  %2542 = vmatprep.subr.mxu0 0.0
  %2543 = vmatpush1.msra.mxu0 %v2414
  %2544 = vmatprep.subr.mxu0 0.0
  %2545 = vmatpush1.msra.mxu0 %v2413
  %2546 = vmatprep.subr.mxu0 0.0
  %2547 = vmatpush1.msra.mxu0 %v2412
  %2548 = vmatprep.subr.mxu0 0.0
  %2549 = vmatpush1.msra.mxu0 %v2411
  %2550 = vmatprep.subr.mxu0 0.0
  %2551 = vmatpush2.msra.mxu0 0.0
  %2552 = vmatprep.subr.mxu0 0.0
  %2553 = vmatpush2.msra.mxu0 0.0
  %2554 = vmatprep.subr.mxu0 0.0
  %2555 = vmatpush2.msra.mxu0 0.0
  %2556 = vmatprep.subr.mxu0 0.0
  %2557 = vmatpush2.msra.mxu0 0.0
  %2558 = vmatprep.subr.mxu0 0.0
  %2559 = vmatpush2.msra.mxu0 0.0
  %2560 = vmatprep.subr.mxu0 0.0
  %2561 = vmatpush2.msra.mxu0 0.0
  %2562 = vmatprep.subr.mxu0 0.0
  %2563 = vmatpush2.msra.mxu0 0.0
  %2564 = vmatprep.subr.mxu0 0.0
  %2565 = vmatpush2.msra.mxu0 0.0
  %2566 = vmatprep.subr.mxu0 0.0
  %2567 = vmatpush2.msra.mxu0 0.0
  %2568 = vmatprep.subr.mxu0 0.0
  %2569 = vmatpush2.msra.mxu0 0.0
  %2570 = vmatprep.subr.mxu0 0.0
  %2571 = vmatpush2.msra.mxu0 0.0
  %2572 = vmatprep.subr.mxu0 0.0
  %2573 = vmatpush2.msra.mxu0 0.0
  %2574 = vmatprep.subr.mxu0 0.0
  %2575 = vmatpush2.msra.mxu0 0.0
  %2576 = vmatprep.subr.mxu0 0.0
  %2577 = vmatpush2.msra.mxu0 0.0
  %2578 = vmatprep.subr.mxu0 0.0
  %2579 = vmatpush2.msra.mxu0 0.0
  %2580 = vmatprep.subr.mxu0 0.0
  %2581 = vmatpush2.msra.mxu0 0.0
  %2582 = vmatprep.mubr.f32.mxu0 0.0
  %2583 = vmatmul.mubr.f32.gmra.mxu0 %v2116
  %v2584 = vpop.f32.mrf.mxu0
  %v2585 = vadd.f32 %v2510, %v2584
  %v2586 = vpop.f32.mrf.mxu0
  %2587 = vmatprep.mubr.f32.mxu0 0.0
  %2588 = vmatmul.mubr.f32.gmra.mxu0 %v2117
  %v2589 = vpop.f32.mrf.mxu0
  %v2590 = vadd.f32 %v2515, %v2589
  %v2591 = vpop.f32.mrf.mxu0
  %2592 = vdwg.mxu0
  %v2593 = vld [vmem:[%s12 + $0x100] sm:$0xff]
  %v2594 = vld [vmem:[%s12 + $0x108] sm:$0xff]
  %v2595 = vld [vmem:[%s12 + $0x110] sm:$0xff]
  %v2596 = vld [vmem:[%s12 + $0x118] sm:$0xff]
  %v2597 = vld [vmem:[%s12 + $0x120] sm:$0xff]
  %v2598 = vld [vmem:[%s12 + $0x128] sm:$0xff]
  %v2599 = vld [vmem:[%s12 + $0x130] sm:$0xff]
  %v2600 = vld [vmem:[%s12 + $0x138] sm:$0xff]
  %v2601 = vld [vmem:[%s12 + $0x140] sm:$0xff]
  %v2602 = vld [vmem:[%s12 + $0x148] sm:$0xff]
  %v2603 = vld [vmem:[%s12 + $0x150] sm:$0xff]
  %v2604 = vld [vmem:[%s12 + $0x158] sm:$0xff]
  %v2605 = vld [vmem:[%s12 + $0x160] sm:$0xff]
  %v2606 = vld [vmem:[%s12 + $0x168] sm:$0xff]
  %v2607 = vld [vmem:[%s12 + $0x170] sm:$0xff]
  %v2608 = vld [vmem:[%s12 + $0x178] sm:$0xff]
  %2609 = vmatprep.subr.mxu0 0.0
  %2610 = vmatpush1.msra.mxu0 %v2608
  %2611 = vmatprep.subr.mxu0 0.0
  %2612 = vmatpush1.msra.mxu0 %v2607
  %2613 = vmatprep.subr.mxu0 0.0
  %2614 = vmatpush1.msra.mxu0 %v2606
  %2615 = vmatprep.subr.mxu0 0.0
  %2616 = vmatpush1.msra.mxu0 %v2605
  %2617 = vmatprep.subr.mxu0 0.0
  %2618 = vmatpush1.msra.mxu0 %v2604
  %2619 = vmatprep.subr.mxu0 0.0
  %2620 = vmatpush1.msra.mxu0 %v2603
  %2621 = vmatprep.subr.mxu0 0.0
  %2622 = vmatpush1.msra.mxu0 %v2602
  %2623 = vmatprep.subr.mxu0 0.0
  %2624 = vmatpush1.msra.mxu0 %v2601
  %2625 = vmatprep.subr.mxu0 0.0
  %2626 = vmatpush1.msra.mxu0 %v2600
  %2627 = vmatprep.subr.mxu0 0.0
  %2628 = vmatpush1.msra.mxu0 %v2599
  %2629 = vmatprep.subr.mxu0 0.0
  %2630 = vmatpush1.msra.mxu0 %v2598
  %2631 = vmatprep.subr.mxu0 0.0
  %2632 = vmatpush1.msra.mxu0 %v2597
  %2633 = vmatprep.subr.mxu0 0.0
  %2634 = vmatpush1.msra.mxu0 %v2596
  %2635 = vmatprep.subr.mxu0 0.0
  %2636 = vmatpush1.msra.mxu0 %v2595
  %2637 = vmatprep.subr.mxu0 0.0
  %2638 = vmatpush1.msra.mxu0 %v2594
  %2639 = vmatprep.subr.mxu0 0.0
  %2640 = vmatpush1.msra.mxu0 %v2593
  %2641 = vmatprep.subr.mxu0 0.0
  %2642 = vmatpush2.msra.mxu0 0.0
  %2643 = vmatprep.subr.mxu0 0.0
  %2644 = vmatpush2.msra.mxu0 0.0
  %2645 = vmatprep.subr.mxu0 0.0
  %2646 = vmatpush2.msra.mxu0 0.0
  %2647 = vmatprep.subr.mxu0 0.0
  %2648 = vmatpush2.msra.mxu0 0.0
  %2649 = vmatprep.subr.mxu0 0.0
  %2650 = vmatpush2.msra.mxu0 0.0
  %2651 = vmatprep.subr.mxu0 0.0
  %2652 = vmatpush2.msra.mxu0 0.0
  %2653 = vmatprep.subr.mxu0 0.0
  %2654 = vmatpush2.msra.mxu0 0.0
  %2655 = vmatprep.subr.mxu0 0.0
  %2656 = vmatpush2.msra.mxu0 0.0
  %2657 = vmatprep.subr.mxu0 0.0
  %2658 = vmatpush2.msra.mxu0 0.0
  %2659 = vmatprep.subr.mxu0 0.0
  %2660 = vmatpush2.msra.mxu0 0.0
  %2661 = vmatprep.subr.mxu0 0.0
  %2662 = vmatpush2.msra.mxu0 0.0
  %2663 = vmatprep.subr.mxu0 0.0
  %2664 = vmatpush2.msra.mxu0 0.0
  %2665 = vmatprep.subr.mxu0 0.0
  %2666 = vmatpush2.msra.mxu0 0.0
  %2667 = vmatprep.subr.mxu0 0.0
  %2668 = vmatpush2.msra.mxu0 0.0
  %2669 = vmatprep.subr.mxu0 0.0
  %2670 = vmatpush2.msra.mxu0 0.0
  %2671 = vmatprep.subr.mxu0 0.0
  %2672 = vmatpush2.msra.mxu0 0.0
  %2673 = vmatprep.mubr.f32.mxu0 0.0
  %2674 = vmatmul.mubr.f32.gmra.mxu0 %v2333
  %v2675 = vpop.f32.mrf.mxu0
  %v2676 = vadd.f32 0.0, %v2675
  %v2677 = vpop.f32.mrf.mxu0
  %2678 = vmatprep.mubr.f32.mxu0 0.0
  %2679 = vmatmul.mubr.f32.gmra.mxu0 %v2338
  %v2680 = vpop.f32.mrf.mxu0
  %v2681 = vadd.f32 0.0, %v2680
  %v2682 = vpop.f32.mrf.mxu0
  %2683 = vdwg.mxu0
  %v2684 = vadd.f32 %v2585, %v2676
  %v2685 = vadd.f32 %v2590, %v2681
  %v2686 = vld [vmem:[%s12 + $0x180] sm:$0xff]
  %v2687 = vld [vmem:[%s12 + $0x188] sm:$0xff]
  %v2688 = vld [vmem:[%s12 + $0x190] sm:$0xff]
  %v2689 = vld [vmem:[%s12 + $0x198] sm:$0xff]
  %v2690 = vld [vmem:[%s12 + $0x1a0] sm:$0xff]
  %v2691 = vld [vmem:[%s12 + $0x1a8] sm:$0xff]
  %v2692 = vld [vmem:[%s12 + $0x1b0] sm:$0xff]
  %v2693 = vld [vmem:[%s12 + $0x1b8] sm:$0xff]
  %v2694 = vld [vmem:[%s12 + $0x1c0] sm:$0xff]
  %v2695 = vld [vmem:[%s12 + $0x1c8] sm:$0xff]
  %v2696 = vld [vmem:[%s12 + $0x1d0] sm:$0xff]
  %v2697 = vld [vmem:[%s12 + $0x1d8] sm:$0xff]
  %v2698 = vld [vmem:[%s12 + $0x1e0] sm:$0xff]
  %v2699 = vld [vmem:[%s12 + $0x1e8] sm:$0xff]
  %v2700 = vld [vmem:[%s12 + $0x1f0] sm:$0xff]
  %v2701 = vld [vmem:[%s12 + $0x1f8] sm:$0xff]
  %2702 = vmatprep.subr.mxu0 0.0
  %2703 = vmatpush1.msra.mxu0 %v2701
  %2704 = vmatprep.subr.mxu0 0.0
  %2705 = vmatpush1.msra.mxu0 %v2700
  %2706 = vmatprep.subr.mxu0 0.0
  %2707 = vmatpush1.msra.mxu0 %v2699
  %2708 = vmatprep.subr.mxu0 0.0
  %2709 = vmatpush1.msra.mxu0 %v2698
  %2710 = vmatprep.subr.mxu0 0.0
  %2711 = vmatpush1.msra.mxu0 %v2697
  %2712 = vmatprep.subr.mxu0 0.0
  %2713 = vmatpush1.msra.mxu0 %v2696
  %2714 = vmatprep.subr.mxu0 0.0
  %2715 = vmatpush1.msra.mxu0 %v2695
  %2716 = vmatprep.subr.mxu0 0.0
  %2717 = vmatpush1.msra.mxu0 %v2694
  %2718 = vmatprep.subr.mxu0 0.0
  %2719 = vmatpush1.msra.mxu0 %v2693
  %2720 = vmatprep.subr.mxu0 0.0
  %2721 = vmatpush1.msra.mxu0 %v2692
  %2722 = vmatprep.subr.mxu0 0.0
  %2723 = vmatpush1.msra.mxu0 %v2691
  %2724 = vmatprep.subr.mxu0 0.0
  %2725 = vmatpush1.msra.mxu0 %v2690
  %2726 = vmatprep.subr.mxu0 0.0
  %2727 = vmatpush1.msra.mxu0 %v2689
  %2728 = vmatprep.subr.mxu0 0.0
  %2729 = vmatpush1.msra.mxu0 %v2688
  %2730 = vmatprep.subr.mxu0 0.0
  %2731 = vmatpush1.msra.mxu0 %v2687
  %2732 = vmatprep.subr.mxu0 0.0
  %2733 = vmatpush1.msra.mxu0 %v2686
  %2734 = vmatprep.subr.mxu0 0.0
  %2735 = vmatpush2.msra.mxu0 0.0
  %2736 = vmatprep.subr.mxu0 0.0
  %2737 = vmatpush2.msra.mxu0 0.0
  %2738 = vmatprep.subr.mxu0 0.0
  %2739 = vmatpush2.msra.mxu0 0.0
  %2740 = vmatprep.subr.mxu0 0.0
  %2741 = vmatpush2.msra.mxu0 0.0
  %2742 = vmatprep.subr.mxu0 0.0
  %2743 = vmatpush2.msra.mxu0 0.0
  %2744 = vmatprep.subr.mxu0 0.0
  %2745 = vmatpush2.msra.mxu0 0.0
  %2746 = vmatprep.subr.mxu0 0.0
  %2747 = vmatpush2.msra.mxu0 0.0
  %2748 = vmatprep.subr.mxu0 0.0
  %2749 = vmatpush2.msra.mxu0 0.0
  %2750 = vmatprep.subr.mxu0 0.0
  %2751 = vmatpush2.msra.mxu0 0.0
  %2752 = vmatprep.subr.mxu0 0.0
  %2753 = vmatpush2.msra.mxu0 0.0
  %2754 = vmatprep.subr.mxu0 0.0
  %2755 = vmatpush2.msra.mxu0 0.0
  %2756 = vmatprep.subr.mxu0 0.0
  %2757 = vmatpush2.msra.mxu0 0.0
  %2758 = vmatprep.subr.mxu0 0.0
  %2759 = vmatpush2.msra.mxu0 0.0
  %2760 = vmatprep.subr.mxu0 0.0
  %2761 = vmatpush2.msra.mxu0 0.0
  %2762 = vmatprep.subr.mxu0 0.0
  %2763 = vmatpush2.msra.mxu0 0.0
  %2764 = vmatprep.subr.mxu0 0.0
  %2765 = vmatpush2.msra.mxu0 0.0
  %2766 = vmatprep.mubr.f32.mxu0 0.0
  %2767 = vmatmul.mubr.f32.gmra.mxu0 %v2408
  %v2768 = vpop.f32.mrf.mxu0
  %v2769 = vadd.f32 0.0, %v2768
  %v2770 = vpop.f32.mrf.mxu0
  %2771 = vdwg.mxu0
  %v2772 = vlaneseq
  %v2773 = vshrl.u32 %v2772, 7
  %v2774 = vsub.s32 0, %v2773
  %v2775 = vrot.slane %v2769, %v2774
  %v2776 = vadd.f32 %v2684, %v2775
  %v2777 = vadd.f32 %v2685, %v2775
  %v2778 = vld [vmem:[%s13] sm:$0x1]
  %v2780 = vlaneseq
  %v2781 = vshrl.u32 %v2780, 7
  %v2782 = vsub.s32 0, %v2781
  %v2783 = vrot.slane %v2778, %v2782
  %v2785 = vadd.f32 %v2776, %v2783
  %v2786 = vadd.f32 %v2777, %v2783
  %v2787 = vmax.f32 %v2785, 0.0
  %v2788 = vmax.f32 %v2786, 0.0
  %v2789 = vld [vmem:[%s14] sm:$0xff]
  %v2790 = vld [vmem:[%s14 + $0x8] sm:$0xff]
  %v2791 = vld [vmem:[%s14 + $0x10] sm:$0xff]
  %v2792 = vld [vmem:[%s14 + $0x18] sm:$0xff]
  %v2793 = vld [vmem:[%s14 + $0x20] sm:$0xff]
  %v2794 = vld [vmem:[%s14 + $0x28] sm:$0xff]
  %v2795 = vld [vmem:[%s14 + $0x30] sm:$0xff]
  %v2796 = vld [vmem:[%s14 + $0x38] sm:$0xff]
  %v2797 = vld [vmem:[#allocation2] sm:$0x1]
  %v2799 = vlaneseq
  %v2800 = vshrl.u32 %v2799, 7
  %v2801 = vsub.s32 0, %v2800
  %v2802 = vrot.slane %v2797, %v2801
  %v2805 = vsel %vm1767, %v2787, 0
  %v2808 = vsel %vm1767, %v2788, 0
  %2810 = vmatprep.subr.mxu0 0.0
  %2811 = vmatpush1.msra.mxu0 0.0
  %2812 = vmatprep.subr.mxu0 0.0
  %2813 = vmatpush1.msra.mxu0 0.0
  %2814 = vmatprep.subr.mxu0 0.0
  %2815 = vmatpush1.msra.mxu0 0.0
  %2816 = vmatprep.subr.mxu0 0.0
  %2817 = vmatpush1.msra.mxu0 0.0
  %2818 = vmatprep.subr.mxu0 0.0
  %2819 = vmatpush1.msra.mxu0 0.0
  %2820 = vmatprep.subr.mxu0 0.0
  %2821 = vmatpush1.msra.mxu0 0.0
  %2822 = vmatprep.subr.mxu0 0.0
  %2823 = vmatpush1.msra.mxu0 0.0
  %2824 = vmatprep.subr.mxu0 0.0
  %2825 = vmatpush1.msra.mxu0 0.0
  %2826 = vmatprep.subr.mxu0 0.0
  %2827 = vmatpush1.msra.mxu0 %v2796
  %2828 = vmatprep.subr.mxu0 0.0
  %2829 = vmatpush1.msra.mxu0 %v2795
  %2830 = vmatprep.subr.mxu0 0.0
  %2831 = vmatpush1.msra.mxu0 %v2794
  %2832 = vmatprep.subr.mxu0 0.0
  %2833 = vmatpush1.msra.mxu0 %v2793
  %2834 = vmatprep.subr.mxu0 0.0
  %2835 = vmatpush1.msra.mxu0 %v2792
  %2836 = vmatprep.subr.mxu0 0.0
  %2837 = vmatpush1.msra.mxu0 %v2791
  %2838 = vmatprep.subr.mxu0 0.0
  %2839 = vmatpush1.msra.mxu0 %v2790
  %2840 = vmatprep.subr.mxu0 0.0
  %2841 = vmatpush1.msra.mxu0 %v2789
  %2842 = vmatprep.subr.mxu0 0.0
  %2843 = vmatpush2.msra.mxu0 0.0
  %2844 = vmatprep.subr.mxu0 0.0
  %2845 = vmatpush2.msra.mxu0 0.0
  %2846 = vmatprep.subr.mxu0 0.0
  %2847 = vmatpush2.msra.mxu0 0.0
  %2848 = vmatprep.subr.mxu0 0.0
  %2849 = vmatpush2.msra.mxu0 0.0
  %2850 = vmatprep.subr.mxu0 0.0
  %2851 = vmatpush2.msra.mxu0 0.0
  %2852 = vmatprep.subr.mxu0 0.0
  %2853 = vmatpush2.msra.mxu0 0.0
  %2854 = vmatprep.subr.mxu0 0.0
  %2855 = vmatpush2.msra.mxu0 0.0
  %2856 = vmatprep.subr.mxu0 0.0
  %2857 = vmatpush2.msra.mxu0 0.0
  %2858 = vmatprep.subr.mxu0 0.0
  %2859 = vmatpush2.msra.mxu0 0.0
  %2860 = vmatprep.subr.mxu0 0.0
  %2861 = vmatpush2.msra.mxu0 0.0
  %2862 = vmatprep.subr.mxu0 0.0
  %2863 = vmatpush2.msra.mxu0 0.0
  %2864 = vmatprep.subr.mxu0 0.0
  %2865 = vmatpush2.msra.mxu0 0.0
  %2866 = vmatprep.subr.mxu0 0.0
  %2867 = vmatpush2.msra.mxu0 0.0
  %2868 = vmatprep.subr.mxu0 0.0
  %2869 = vmatpush2.msra.mxu0 0.0
  %2870 = vmatprep.subr.mxu0 0.0
  %2871 = vmatpush2.msra.mxu0 0.0
  %2872 = vmatprep.subr.mxu0 0.0
  %2873 = vmatpush2.msra.mxu0 0.0
  %2874 = vmatprep.mubr.f32.mxu0 0.0
  %2875 = vmatmul.mubr.f32.gmra.mxu0 %v2805
  %v2876 = vpop.f32.mrf.mxu0
  %v2877 = vadd.f32 %v2802, %v2876
  %v2878 = vpop.f32.mrf.mxu0
  %2879 = vmatprep.mubr.f32.mxu0 0.0
  %2880 = vmatmul.mubr.f32.gmra.mxu0 %v2808
  %v2881 = vpop.f32.mrf.mxu0
  %v2882 = vadd.f32 %v2802, %v2881
  %v2883 = vpop.f32.mrf.mxu0
  %2884 = vdwg.mxu0
  %v2885 = vsub.f32 0.0, %v2877
  %v2886 = vsub.f32 0.0, %v2882
  %v2887 = vmul.f32 %v2885, 1.442695
  %v2888 = vpow.pop %v2887
  %v2889 = vmul.f32 %v2886, 1.442695
  %v2890 = vpow.pop %v2889
  %v2891 = vadd.f32 %v2888, 1.0
  %v2892 = vadd.f32 %v2890, 1.0
  %v2893 = vrcp.pop %v2891
  %v2894 = vmul.f32 1.0, %v2893
  %v2895 = vrcp.pop %v2892
  %v2896 = vmul.f32 1.0, %v2895
  %vm2897 = vcmask 7168
  %2898 = vst.msk [vmem:[%s16] sm:$0xff] %vm2897, %v2894
  %vm2899 = vcmask 3072
  %2900 = vst.msk [vmem:[%s16 + $0x8] sm:$0xf] %vm2899, %v2896
  // Predicated region
  $region66: #{tpu_custom_call.1} parent=0 // pred_check
    _
  $region67: #{tpu_custom_call.1} parent=0 // pred_check_branch
    %2902 = sbr.rel (0) target = $region69
  $region68: #{tpu_custom_call.1} parent=0 // pred_region
    _
  $region69: #{tpu_custom_call.1} parent=0 // pred_fallthru
    _
  // Predicated region
  $region70: #{tpu_custom_call.1} parent=0 // pred_check
    _
  $region71: #{tpu_custom_call.1} parent=0 // pred_check_branch
    %2904 = sbr.rel (0) target = $region73
  $region72: #{tpu_custom_call.1} parent=0 // pred_region
    _
  $region73: #{tpu_custom_call.1} parent=0 // pred_fallthru
    _

</llo_original>
